<compile_context>
chip_gen: v5e
topology: v5e:2x2
jax: 0.10.0
libtpu: 0.0.40
codegen_flags: <defaults>
</compile_context>

<pallas_src>
import functools

import jax
import jax.numpy as jnp
from jax.experimental import pallas as pl
from jax.experimental.pallas import tpu as pltpu

_LN_EPS = 1e-5                       # PyTorch nn.LayerNorm default
_LAYER_DIMS = (512, 1024, 512, 256, 64)   # output widths of layers 1..5
_SLAB_COLS = 1024                    # slab row width (max layer width)
_B6_ROW = 4 * len(_LAYER_DIMS)       # slab row holding the final-layer bias
_OUT_PAD = 128                       # lane-dense padded output width (k <= 128)


def rot_red_global_kernel(x_ref, w1_ref, w2_ref, w3_ref, w4_ref, w5_ref,
                          w6_ref, slab_ref, o_ref):
    """Fused 6-layer MLP with per-layer (bias, LayerNorm, ReLU).

    wL_ref (L=1..5): int8 (in, out) weights, per-column scale in the slab.
    w6_ref: bf16 (64, 128) zero-padded weights.
    slab_ref: fp32 (24, 1024); rows 4*li+[0..3] = bias, gamma, beta, scale of layer li+1,
              row 20 = final-layer bias (padded to 128 lanes).
    """
    h = x_ref[...]
    for li, w_ref in enumerate((w1_ref, w2_ref, w3_ref, w4_ref, w5_ref)):
        n = _LAYER_DIMS[li]
        r = 4 * li
        # int8 -> bf16 (exact for |q| <= 127); MXU accumulates in fp32.
        w_bf16 = w_ref[...].astype(jnp.float32).astype(jnp.bfloat16)
        y = jnp.dot(h.astype(jnp.bfloat16), w_bf16,
                    preferred_element_type=jnp.float32)
        # Dequantize (per-output-column scale) + bias, all in fp32.
        y = y * slab_ref[r + 3:r + 4, 0:n] + slab_ref[r + 0:r + 1, 0:n]
        # LayerNorm (var = E[x^2] - mu^2) + affine + ReLU.
        mu = jnp.mean(y, axis=-1, keepdims=True)
        var = jnp.maximum(jnp.mean(y * y, axis=-1, keepdims=True) - mu * mu, 0.0)
        y = (y - mu) * jax.lax.rsqrt(var + _LN_EPS)
        y = y * slab_ref[r + 1:r + 2, 0:n] + slab_ref[r + 2:r + 3, 0:n]
        h = jnp.maximum(y, 0.0)
    # Final linear layer (lane-dense, padded to 128 output columns).
    out = jnp.dot(h.astype(jnp.bfloat16), w6_ref[...],
                  preferred_element_type=jnp.float32)
    out = out + slab_ref[_B6_ROW:_B6_ROW + 1, 0:_OUT_PAD]
    o_ref[...] = out.astype(o_ref.dtype)


def _round_up(n, m):
    return ((n + m - 1) // m) * m


def _pick_batch_block(B):
    # Cap tiles at 256 so medium/large batches produce >= 2 grid steps, letting
    # dimension_semantics=("parallel",) engage both v7x TensorCores; small batches
    # become a single tile padded to the 8-sublane granule.
    if B <= 256:
        return _round_up(B, 8)
    return 256


@functools.partial(jax.jit, static_argnums=(2,))
def rot_red_global_forward(x, params, k):
    """params = (w1q, w2q, w3q, w4q, w5q, w6_bf16_padded, slab_fp32)."""
    w1, w2, w3, w4, w5, w6, slab = params
    B, f = x.shape
    k_pad = w6.shape[1]  # 128 (lane-dense padded output width)

    tb = _pick_batch_block(B)
    B_pad = _round_up(B, tb)
    if B_pad != B:
        x = jnp.pad(x, ((0, B_pad - B), (0, 0)))
    grid = (B_pad // tb,)

    # Weights / slab: full-array blocks with a constant index_map -> VMEM-resident
    # across batch tiles (no re-DMA per grid step).
    resident = lambda p: pl.BlockSpec(p.shape, lambda i: (0, 0))
    in_specs = [pl.BlockSpec((tb, f), lambda i: (i, 0))]
    in_specs += [resident(p) for p in (w1, w2, w3, w4, w5, w6, slab)]
    out_specs = pl.BlockSpec((tb, k_pad), lambda i: (i, 0))

    out = pl.pallas_call(
        rot_red_global_kernel,
        out_shape=jax.ShapeDtypeStruct((B_pad, k_pad), jnp.float32),
        grid=grid,
        in_specs=in_specs,
        out_specs=out_specs,
        compiler_params=pltpu.CompilerParams(
            dimension_semantics=("parallel",),
            vmem_limit_bytes=32 << 20,
        ),
    )(x, w1, w2, w3, w4, w5, w6, slab)
    return out[:B, :k]


def init_params(key, input_c, k):
    """Deterministic synthetic init matching the PyTorch module's shapes.

    Layers 1..5: int8 (in, out) weights + per-column fp32 scale; bias / LN gamma /
    LN beta / scale packed as 4 consecutive rows of one (24, 1024) fp32 slab.
    Layer 6: bf16 (64, 128) zero-padded weights; its bias lives in slab row 20.
    """
    dims = [input_c] + list(_LAYER_DIMS) + [k]
    keys = jax.random.split(key, 12)
    ki = 0
    wqs = []
    slab_rows = []
    for li in range(5):
        fan_in, fan_out = dims[li], dims[li + 1]
        bound = 1.0 / (fan_in ** 0.5)
        w = jax.random.uniform(keys[ki], (fan_in, fan_out), jnp.float32, -bound, bound)
        ki += 1
        b = jax.random.uniform(keys[ki], (1, fan_out), jnp.float32, -bound, bound)
        ki += 1
        amax = jnp.max(jnp.abs(w), axis=0, keepdims=True)            # (1, fan_out)
        scale = jnp.maximum(amax, 1e-12) / 127.0
        wq = jnp.clip(jnp.round(w / scale), -127.0, 127.0).astype(jnp.int8)
        wqs.append(wq)
        gamma = jnp.ones((1, fan_out), jnp.float32)
        beta = jnp.zeros((1, fan_out), jnp.float32)
        pad_w = _SLAB_COLS - fan_out
        for row in (b, gamma, beta, scale):
            slab_rows.append(jnp.pad(row, ((0, 0), (0, pad_w))))
    # Final layer (kept bf16, zero-padded to 128 output lanes for lane-dense stores).
    fan_in, fan_out = dims[5], dims[6]
    bound = 1.0 / (fan_in ** 0.5)
    w6 = jax.random.uniform(keys[ki], (fan_in, fan_out), jnp.float32, -bound, bound)
    ki += 1
    b6 = jax.random.uniform(keys[ki], (1, fan_out), jnp.float32, -bound, bound)
    ki += 1
    w6p = jnp.pad(w6, ((0, 0), (0, _OUT_PAD - fan_out))).astype(jnp.bfloat16)
    slab_rows.append(jnp.pad(b6, ((0, 0), (0, _SLAB_COLS - fan_out))))
    slab_rows += [jnp.zeros((1, _SLAB_COLS), jnp.float32)] * 3  # pad slab to 24 rows
    slab = jnp.concatenate(slab_rows, axis=0)                   # (24, 1024) fp32
    return (wqs[0], wqs[1], wqs[2], wqs[3], wqs[4], w6p, slab)


def reference_forward(x, params, k):
    """Pure-JAX reference with identical quantized / mixed-precision numerics."""
    w1, w2, w3, w4, w5, w6, slab = params
    h = x.astype(jnp.float32)
    for li, wq in enumerate((w1, w2, w3, w4, w5)):
        n = _LAYER_DIMS[li]
        r = 4 * li
        w_bf16 = wq.astype(jnp.float32).astype(jnp.bfloat16)
        y = jnp.dot(h.astype(jnp.bfloat16), w_bf16,
                    preferred_element_type=jnp.float32)
        y = y * slab[r + 3:r + 4, :n] + slab[r + 0:r + 1, :n]
        mu = jnp.mean(y, axis=-1, keepdims=True)
        var = jnp.maximum(jnp.mean(y * y, axis=-1, keepdims=True) - mu * mu, 0.0)
        y = (y - mu) * jax.lax.rsqrt(var + _LN_EPS)
        y = y * slab[r + 1:r + 2, :n] + slab[r + 2:r + 3, :n]
        h = jnp.maximum(y, 0.0)
    out = jnp.dot(h.astype(jnp.bfloat16), w6,
                  preferred_element_type=jnp.float32) + slab[_B6_ROW:_B6_ROW + 1, :_OUT_PAD]
    return out[:, :k]


if __name__ == "__main__":
    key = jax.random.PRNGKey(0)
    kx, kp = jax.random.split(key)

    B = 2          # batch
    input_c = 32   # global feature dim (module's input_c)
    R_c = 4        # FLAGS.R_c (rotation output channels)

    x = jax.random.normal(kx, (B, input_c), dtype=jnp.float32)
    params = init_params(kp, input_c, R_c)

    out = rot_red_global_forward(x, params, R_c)
    out = jax.block_until_ready(out)

    ref = reference_forward(x, params, R_c)
    assert out.shape == (B, R_c), out.shape
    assert jnp.allclose(out, ref, atol=5e-3, rtol=5e-3), (
        float(jnp.max(jnp.abs(out - ref)))
    )

    print("KERNEL_OK")
</pallas_src>

<mosaic_0001>
module attributes {stable_mosaic.version = 11 : i64} {
  func.func @rot_red_global_kernel(%arg0: i32, %arg1: memref<8x32xf32, #tpu.memory_space<vmem>>, %arg2: memref<32x512xi8, #tpu.memory_space<vmem>>, %arg3: memref<512x1024xi8, #tpu.memory_space<vmem>>, %arg4: memref<1024x512xi8, #tpu.memory_space<vmem>>, %arg5: memref<512x256xi8, #tpu.memory_space<vmem>>, %arg6: memref<256x64xi8, #tpu.memory_space<vmem>>, %arg7: memref<64x128xbf16, #tpu.memory_space<vmem>>, %arg8: memref<24x1024xf32, #tpu.memory_space<vmem>>, %arg9: memref<8x128xf32, #tpu.memory_space<vmem>>) attributes {dimension_semantics = [#tpu.dimension_semantics<parallel>], iteration_bounds = array<i64: 1>, scalar_prefetch = 0 : i64, scratch_operands = 0 : i64, tpu.core_type = #tpu.core_type<tc>, window_params = [{transform_indices = @transform_0, window_bounds = array<i64: 8, 32>}, {pipeline_mode = #tpu.pipeline_mode<synchronous>, transform_indices = @transform_1, window_bounds = array<i64: 32, 512>}, {pipeline_mode = #tpu.pipeline_mode<synchronous>, transform_indices = @transform_2, window_bounds = array<i64: 512, 1024>}, {pipeline_mode = #tpu.pipeline_mode<synchronous>, transform_indices = @transform_3, window_bounds = array<i64: 1024, 512>}, {pipeline_mode = #tpu.pipeline_mode<synchronous>, transform_indices = @transform_4, window_bounds = array<i64: 512, 256>}, {pipeline_mode = #tpu.pipeline_mode<synchronous>, transform_indices = @transform_5, window_bounds = array<i64: 256, 64>}, {pipeline_mode = #tpu.pipeline_mode<synchronous>, transform_indices = @transform_6, window_bounds = array<i64: 64, 128>}, {pipeline_mode = #tpu.pipeline_mode<synchronous>, transform_indices = @transform_7, window_bounds = array<i64: 24, 1024>}, {transform_indices = @transform_8, window_bounds = array<i64: 8, 128>}]} {
    %c0 = arith.constant 0 : index
    %c0_0 = arith.constant 0 : index
    %0 = vector.load %arg1[%c0, %c0_0] : memref<8x32xf32, #tpu.memory_space<vmem>>, vector<8x32xf32>
    %c0_1 = arith.constant 0 : index
    %c0_2 = arith.constant 0 : index
    %1 = vector.load %arg2[%c0_1, %c0_2] : memref<32x512xi8, #tpu.memory_space<vmem>>, vector<32x512xi8>
    %2 = arith.sitofp %1 : vector<32x512xi8> to vector<32x512xf32>
    %3 = arith.truncf %2 : vector<32x512xf32> to vector<32x512xbf16>
    %4 = arith.truncf %0 : vector<8x32xf32> to vector<8x32xbf16>
    %cst = arith.constant dense<0.000000e+00> : vector<8x512xf32>
    %5 = tpu.matmul %4, %3, %cst {dimension_numbers = #tpu.dot_dimension_numbers<[1], [0], [0], [1], [0, 0, 1, 1], [], []>} : vector<8x32xbf16>, vector<32x512xbf16>, vector<8x512xf32> -> vector<8x512xf32>
    %c3 = arith.constant 3 : index
    %c0_3 = arith.constant 0 : index
    %6 = vector.load %arg8[%c3, %c0_3] : memref<24x1024xf32, #tpu.memory_space<vmem>>, vector<1x512xf32>
    %7 = vector.broadcast %6 : vector<1x512xf32> to vector<8x512xf32>
    %8 = arith.mulf %5, %7 : vector<8x512xf32>
    %c0_4 = arith.constant 0 : index
    %c0_5 = arith.constant 0 : index
    %9 = vector.load %arg8[%c0_4, %c0_5] : memref<24x1024xf32, #tpu.memory_space<vmem>>, vector<1x512xf32>
    %10 = vector.broadcast %9 : vector<1x512xf32> to vector<8x512xf32>
    %11 = arith.addf %8, %10 : vector<8x512xf32>
    %cst_6 = arith.constant dense<0.000000e+00> : vector<8xf32>
    %12 = vector.multi_reduction <add>, %11, %cst_6 [1] : vector<8x512xf32> to vector<8xf32>
    %13 = vector.shape_cast %12 : vector<8xf32> to vector<8x1xf32>
    %cst_7 = arith.constant 5.120000e+02 : f32
    %14 = vector.broadcast %cst_7 : f32 to vector<8x1xf32>
    %15 = arith.divf %13, %14 : vector<8x1xf32>
    %16 = arith.mulf %11, %11 : vector<8x512xf32>
    %cst_8 = arith.constant dense<0.000000e+00> : vector<8xf32>
    %17 = vector.multi_reduction <add>, %16, %cst_8 [1] : vector<8x512xf32> to vector<8xf32>
    %18 = vector.shape_cast %17 : vector<8xf32> to vector<8x1xf32>
    %cst_9 = arith.constant 5.120000e+02 : f32
    %19 = vector.broadcast %cst_9 : f32 to vector<8x1xf32>
    %20 = arith.divf %18, %19 : vector<8x1xf32>
    %21 = arith.mulf %15, %15 : vector<8x1xf32>
    %22 = arith.subf %20, %21 : vector<8x1xf32>
    %cst_10 = arith.constant 0.000000e+00 : f32
    %23 = vector.broadcast %cst_10 : f32 to vector<8x1xf32>
    %24 = arith.maximumf %22, %23 : vector<8x1xf32>
    %25 = vector.broadcast %15 : vector<8x1xf32> to vector<8x512xf32>
    %26 = arith.subf %11, %25 : vector<8x512xf32>
    %cst_11 = arith.constant 9.99999974E-6 : f32
    %27 = vector.broadcast %cst_11 : f32 to vector<8x1xf32>
    %28 = arith.addf %24, %27 : vector<8x1xf32>
    %29 = math.rsqrt %28 : vector<8x1xf32>
    %30 = vector.broadcast %29 : vector<8x1xf32> to vector<8x512xf32>
    %31 = arith.mulf %26, %30 : vector<8x512xf32>
    %c1 = arith.constant 1 : index
    %c0_12 = arith.constant 0 : index
    %32 = vector.load %arg8[%c1, %c0_12] : memref<24x1024xf32, #tpu.memory_space<vmem>>, vector<1x512xf32>
    %33 = vector.broadcast %32 : vector<1x512xf32> to vector<8x512xf32>
    %34 = arith.mulf %31, %33 : vector<8x512xf32>
    %c2 = arith.constant 2 : index
    %c0_13 = arith.constant 0 : index
    %35 = vector.load %arg8[%c2, %c0_13] : memref<24x1024xf32, #tpu.memory_space<vmem>>, vector<1x512xf32>
    %36 = vector.broadcast %35 : vector<1x512xf32> to vector<8x512xf32>
    %37 = arith.addf %34, %36 : vector<8x512xf32>
    %cst_14 = arith.constant 0.000000e+00 : f32
    %38 = vector.broadcast %cst_14 : f32 to vector<8x512xf32>
    %39 = arith.maximumf %37, %38 : vector<8x512xf32>
    %c0_15 = arith.constant 0 : index
    %c0_16 = arith.constant 0 : index
    %40 = vector.load %arg3[%c0_15, %c0_16] : memref<512x1024xi8, #tpu.memory_space<vmem>>, vector<512x1024xi8>
    %41 = arith.sitofp %40 : vector<512x1024xi8> to vector<512x1024xf32>
    %42 = arith.truncf %41 : vector<512x1024xf32> to vector<512x1024xbf16>
    %43 = arith.truncf %39 : vector<8x512xf32> to vector<8x512xbf16>
    %cst_17 = arith.constant dense<0.000000e+00> : vector<8x1024xf32>
    %44 = tpu.matmul %43, %42, %cst_17 {dimension_numbers = #tpu.dot_dimension_numbers<[1], [0], [0], [1], [0, 0, 1, 1], [], []>} : vector<8x512xbf16>, vector<512x1024xbf16>, vector<8x1024xf32> -> vector<8x1024xf32>
    %c7 = arith.constant 7 : index
    %c0_18 = arith.constant 0 : index
    %45 = vector.load %arg8[%c7, %c0_18] : memref<24x1024xf32, #tpu.memory_space<vmem>>, vector<1x1024xf32>
    %46 = vector.broadcast %45 : vector<1x1024xf32> to vector<8x1024xf32>
    %47 = arith.mulf %44, %46 : vector<8x1024xf32>
    %c4 = arith.constant 4 : index
    %c0_19 = arith.constant 0 : index
    %48 = vector.load %arg8[%c4, %c0_19] : memref<24x1024xf32, #tpu.memory_space<vmem>>, vector<1x1024xf32>
    %49 = vector.broadcast %48 : vector<1x1024xf32> to vector<8x1024xf32>
    %50 = arith.addf %47, %49 : vector<8x1024xf32>
    %cst_20 = arith.constant dense<0.000000e+00> : vector<8xf32>
    %51 = vector.multi_reduction <add>, %50, %cst_20 [1] : vector<8x1024xf32> to vector<8xf32>
    %52 = vector.shape_cast %51 : vector<8xf32> to vector<8x1xf32>
    %cst_21 = arith.constant 1.024000e+03 : f32
    %53 = vector.broadcast %cst_21 : f32 to vector<8x1xf32>
    %54 = arith.divf %52, %53 : vector<8x1xf32>
    %55 = arith.mulf %50, %50 : vector<8x1024xf32>
    %cst_22 = arith.constant dense<0.000000e+00> : vector<8xf32>
    %56 = vector.multi_reduction <add>, %55, %cst_22 [1] : vector<8x1024xf32> to vector<8xf32>
    %57 = vector.shape_cast %56 : vector<8xf32> to vector<8x1xf32>
    %cst_23 = arith.constant 1.024000e+03 : f32
    %58 = vector.broadcast %cst_23 : f32 to vector<8x1xf32>
    %59 = arith.divf %57, %58 : vector<8x1xf32>
    %60 = arith.mulf %54, %54 : vector<8x1xf32>
    %61 = arith.subf %59, %60 : vector<8x1xf32>
    %cst_24 = arith.constant 0.000000e+00 : f32
    %62 = vector.broadcast %cst_24 : f32 to vector<8x1xf32>
    %63 = arith.maximumf %61, %62 : vector<8x1xf32>
    %64 = vector.broadcast %54 : vector<8x1xf32> to vector<8x1024xf32>
    %65 = arith.subf %50, %64 : vector<8x1024xf32>
    %cst_25 = arith.constant 9.99999974E-6 : f32
    %66 = vector.broadcast %cst_25 : f32 to vector<8x1xf32>
    %67 = arith.addf %63, %66 : vector<8x1xf32>
    %68 = math.rsqrt %67 : vector<8x1xf32>
    %69 = vector.broadcast %68 : vector<8x1xf32> to vector<8x1024xf32>
    %70 = arith.mulf %65, %69 : vector<8x1024xf32>
    %c5 = arith.constant 5 : index
    %c0_26 = arith.constant 0 : index
    %71 = vector.load %arg8[%c5, %c0_26] : memref<24x1024xf32, #tpu.memory_space<vmem>>, vector<1x1024xf32>
    %72 = vector.broadcast %71 : vector<1x1024xf32> to vector<8x1024xf32>
    %73 = arith.mulf %70, %72 : vector<8x1024xf32>
    %c6 = arith.constant 6 : index
    %c0_27 = arith.constant 0 : index
    %74 = vector.load %arg8[%c6, %c0_27] : memref<24x1024xf32, #tpu.memory_space<vmem>>, vector<1x1024xf32>
    %75 = vector.broadcast %74 : vector<1x1024xf32> to vector<8x1024xf32>
    %76 = arith.addf %73, %75 : vector<8x1024xf32>
    %cst_28 = arith.constant 0.000000e+00 : f32
    %77 = vector.broadcast %cst_28 : f32 to vector<8x1024xf32>
    %78 = arith.maximumf %76, %77 : vector<8x1024xf32>
    %c0_29 = arith.constant 0 : index
    %c0_30 = arith.constant 0 : index
    %79 = vector.load %arg4[%c0_29, %c0_30] : memref<1024x512xi8, #tpu.memory_space<vmem>>, vector<1024x512xi8>
    %80 = arith.sitofp %79 : vector<1024x512xi8> to vector<1024x512xf32>
    %81 = arith.truncf %80 : vector<1024x512xf32> to vector<1024x512xbf16>
    %82 = arith.truncf %78 : vector<8x1024xf32> to vector<8x1024xbf16>
    %cst_31 = arith.constant dense<0.000000e+00> : vector<8x512xf32>
    %83 = tpu.matmul %82, %81, %cst_31 {dimension_numbers = #tpu.dot_dimension_numbers<[1], [0], [0], [1], [0, 0, 1, 1], [], []>} : vector<8x1024xbf16>, vector<1024x512xbf16>, vector<8x512xf32> -> vector<8x512xf32>
    %c11 = arith.constant 11 : index
    %c0_32 = arith.constant 0 : index
    %84 = vector.load %arg8[%c11, %c0_32] : memref<24x1024xf32, #tpu.memory_space<vmem>>, vector<1x512xf32>
    %85 = vector.broadcast %84 : vector<1x512xf32> to vector<8x512xf32>
    %86 = arith.mulf %83, %85 : vector<8x512xf32>
    %c8 = arith.constant 8 : index
    %c0_33 = arith.constant 0 : index
    %87 = vector.load %arg8[%c8, %c0_33] : memref<24x1024xf32, #tpu.memory_space<vmem>>, vector<1x512xf32>
    %88 = vector.broadcast %87 : vector<1x512xf32> to vector<8x512xf32>
    %89 = arith.addf %86, %88 : vector<8x512xf32>
    %cst_34 = arith.constant dense<0.000000e+00> : vector<8xf32>
    %90 = vector.multi_reduction <add>, %89, %cst_34 [1] : vector<8x512xf32> to vector<8xf32>
    %91 = vector.shape_cast %90 : vector<8xf32> to vector<8x1xf32>
    %cst_35 = arith.constant 5.120000e+02 : f32
    %92 = vector.broadcast %cst_35 : f32 to vector<8x1xf32>
    %93 = arith.divf %91, %92 : vector<8x1xf32>
    %94 = arith.mulf %89, %89 : vector<8x512xf32>
    %cst_36 = arith.constant dense<0.000000e+00> : vector<8xf32>
    %95 = vector.multi_reduction <add>, %94, %cst_36 [1] : vector<8x512xf32> to vector<8xf32>
    %96 = vector.shape_cast %95 : vector<8xf32> to vector<8x1xf32>
    %cst_37 = arith.constant 5.120000e+02 : f32
    %97 = vector.broadcast %cst_37 : f32 to vector<8x1xf32>
    %98 = arith.divf %96, %97 : vector<8x1xf32>
    %99 = arith.mulf %93, %93 : vector<8x1xf32>
    %100 = arith.subf %98, %99 : vector<8x1xf32>
    %cst_38 = arith.constant 0.000000e+00 : f32
    %101 = vector.broadcast %cst_38 : f32 to vector<8x1xf32>
    %102 = arith.maximumf %100, %101 : vector<8x1xf32>
    %103 = vector.broadcast %93 : vector<8x1xf32> to vector<8x512xf32>
    %104 = arith.subf %89, %103 : vector<8x512xf32>
    %cst_39 = arith.constant 9.99999974E-6 : f32
    %105 = vector.broadcast %cst_39 : f32 to vector<8x1xf32>
    %106 = arith.addf %102, %105 : vector<8x1xf32>
    %107 = math.rsqrt %106 : vector<8x1xf32>
    %108 = vector.broadcast %107 : vector<8x1xf32> to vector<8x512xf32>
    %109 = arith.mulf %104, %108 : vector<8x512xf32>
    %c9 = arith.constant 9 : index
    %c0_40 = arith.constant 0 : index
    %110 = vector.load %arg8[%c9, %c0_40] : memref<24x1024xf32, #tpu.memory_space<vmem>>, vector<1x512xf32>
    %111 = vector.broadcast %110 : vector<1x512xf32> to vector<8x512xf32>
    %112 = arith.mulf %109, %111 : vector<8x512xf32>
    %c10 = arith.constant 10 : index
    %c0_41 = arith.constant 0 : index
    %113 = vector.load %arg8[%c10, %c0_41] : memref<24x1024xf32, #tpu.memory_space<vmem>>, vector<1x512xf32>
    %114 = vector.broadcast %113 : vector<1x512xf32> to vector<8x512xf32>
    %115 = arith.addf %112, %114 : vector<8x512xf32>
    %cst_42 = arith.constant 0.000000e+00 : f32
    %116 = vector.broadcast %cst_42 : f32 to vector<8x512xf32>
    %117 = arith.maximumf %115, %116 : vector<8x512xf32>
    %c0_43 = arith.constant 0 : index
    %c0_44 = arith.constant 0 : index
    %118 = vector.load %arg5[%c0_43, %c0_44] : memref<512x256xi8, #tpu.memory_space<vmem>>, vector<512x256xi8>
    %119 = arith.sitofp %118 : vector<512x256xi8> to vector<512x256xf32>
    %120 = arith.truncf %119 : vector<512x256xf32> to vector<512x256xbf16>
    %121 = arith.truncf %117 : vector<8x512xf32> to vector<8x512xbf16>
    %cst_45 = arith.constant dense<0.000000e+00> : vector<8x256xf32>
    %122 = tpu.matmul %121, %120, %cst_45 {dimension_numbers = #tpu.dot_dimension_numbers<[1], [0], [0], [1], [0, 0, 1, 1], [], []>} : vector<8x512xbf16>, vector<512x256xbf16>, vector<8x256xf32> -> vector<8x256xf32>
    %c15 = arith.constant 15 : index
    %c0_46 = arith.constant 0 : index
    %123 = vector.load %arg8[%c15, %c0_46] : memref<24x1024xf32, #tpu.memory_space<vmem>>, vector<1x256xf32>
    %124 = vector.broadcast %123 : vector<1x256xf32> to vector<8x256xf32>
    %125 = arith.mulf %122, %124 : vector<8x256xf32>
    %c12 = arith.constant 12 : index
    %c0_47 = arith.constant 0 : index
    %126 = vector.load %arg8[%c12, %c0_47] : memref<24x1024xf32, #tpu.memory_space<vmem>>, vector<1x256xf32>
    %127 = vector.broadcast %126 : vector<1x256xf32> to vector<8x256xf32>
    %128 = arith.addf %125, %127 : vector<8x256xf32>
    %cst_48 = arith.constant dense<0.000000e+00> : vector<8xf32>
    %129 = vector.multi_reduction <add>, %128, %cst_48 [1] : vector<8x256xf32> to vector<8xf32>
    %130 = vector.shape_cast %129 : vector<8xf32> to vector<8x1xf32>
    %cst_49 = arith.constant 2.560000e+02 : f32
    %131 = vector.broadcast %cst_49 : f32 to vector<8x1xf32>
    %132 = arith.divf %130, %131 : vector<8x1xf32>
    %133 = arith.mulf %128, %128 : vector<8x256xf32>
    %cst_50 = arith.constant dense<0.000000e+00> : vector<8xf32>
    %134 = vector.multi_reduction <add>, %133, %cst_50 [1] : vector<8x256xf32> to vector<8xf32>
    %135 = vector.shape_cast %134 : vector<8xf32> to vector<8x1xf32>
    %cst_51 = arith.constant 2.560000e+02 : f32
    %136 = vector.broadcast %cst_51 : f32 to vector<8x1xf32>
    %137 = arith.divf %135, %136 : vector<8x1xf32>
    %138 = arith.mulf %132, %132 : vector<8x1xf32>
    %139 = arith.subf %137, %138 : vector<8x1xf32>
    %cst_52 = arith.constant 0.000000e+00 : f32
    %140 = vector.broadcast %cst_52 : f32 to vector<8x1xf32>
    %141 = arith.maximumf %139, %140 : vector<8x1xf32>
    %142 = vector.broadcast %132 : vector<8x1xf32> to vector<8x256xf32>
    %143 = arith.subf %128, %142 : vector<8x256xf32>
    %cst_53 = arith.constant 9.99999974E-6 : f32
    %144 = vector.broadcast %cst_53 : f32 to vector<8x1xf32>
    %145 = arith.addf %141, %144 : vector<8x1xf32>
    %146 = math.rsqrt %145 : vector<8x1xf32>
    %147 = vector.broadcast %146 : vector<8x1xf32> to vector<8x256xf32>
    %148 = arith.mulf %143, %147 : vector<8x256xf32>
    %c13 = arith.constant 13 : index
    %c0_54 = arith.constant 0 : index
    %149 = vector.load %arg8[%c13, %c0_54] : memref<24x1024xf32, #tpu.memory_space<vmem>>, vector<1x256xf32>
    %150 = vector.broadcast %149 : vector<1x256xf32> to vector<8x256xf32>
    %151 = arith.mulf %148, %150 : vector<8x256xf32>
    %c14 = arith.constant 14 : index
    %c0_55 = arith.constant 0 : index
    %152 = vector.load %arg8[%c14, %c0_55] : memref<24x1024xf32, #tpu.memory_space<vmem>>, vector<1x256xf32>
    %153 = vector.broadcast %152 : vector<1x256xf32> to vector<8x256xf32>
    %154 = arith.addf %151, %153 : vector<8x256xf32>
    %cst_56 = arith.constant 0.000000e+00 : f32
    %155 = vector.broadcast %cst_56 : f32 to vector<8x256xf32>
    %156 = arith.maximumf %154, %155 : vector<8x256xf32>
    %c0_57 = arith.constant 0 : index
    %c0_58 = arith.constant 0 : index
    %157 = vector.load %arg6[%c0_57, %c0_58] : memref<256x64xi8, #tpu.memory_space<vmem>>, vector<256x64xi8>
    %158 = arith.sitofp %157 : vector<256x64xi8> to vector<256x64xf32>
    %159 = arith.truncf %158 : vector<256x64xf32> to vector<256x64xbf16>
    %160 = arith.truncf %156 : vector<8x256xf32> to vector<8x256xbf16>
    %cst_59 = arith.constant dense<0.000000e+00> : vector<8x64xf32>
    %161 = tpu.matmul %160, %159, %cst_59 {dimension_numbers = #tpu.dot_dimension_numbers<[1], [0], [0], [1], [0, 0, 1, 1], [], []>} : vector<8x256xbf16>, vector<256x64xbf16>, vector<8x64xf32> -> vector<8x64xf32>
    %c19 = arith.constant 19 : index
    %c0_60 = arith.constant 0 : index
    %162 = vector.load %arg8[%c19, %c0_60] : memref<24x1024xf32, #tpu.memory_space<vmem>>, vector<1x64xf32>
    %163 = vector.broadcast %162 : vector<1x64xf32> to vector<8x64xf32>
    %164 = arith.mulf %161, %163 : vector<8x64xf32>
    %c16 = arith.constant 16 : index
    %c0_61 = arith.constant 0 : index
    %165 = vector.load %arg8[%c16, %c0_61] : memref<24x1024xf32, #tpu.memory_space<vmem>>, vector<1x64xf32>
    %166 = vector.broadcast %165 : vector<1x64xf32> to vector<8x64xf32>
    %167 = arith.addf %164, %166 : vector<8x64xf32>
    %cst_62 = arith.constant dense<0.000000e+00> : vector<8xf32>
    %168 = vector.multi_reduction <add>, %167, %cst_62 [1] : vector<8x64xf32> to vector<8xf32>
    %169 = vector.shape_cast %168 : vector<8xf32> to vector<8x1xf32>
    %cst_63 = arith.constant 6.400000e+01 : f32
    %170 = vector.broadcast %cst_63 : f32 to vector<8x1xf32>
    %171 = arith.divf %169, %170 : vector<8x1xf32>
    %172 = arith.mulf %167, %167 : vector<8x64xf32>
    %cst_64 = arith.constant dense<0.000000e+00> : vector<8xf32>
    %173 = vector.multi_reduction <add>, %172, %cst_64 [1] : vector<8x64xf32> to vector<8xf32>
    %174 = vector.shape_cast %173 : vector<8xf32> to vector<8x1xf32>
    %cst_65 = arith.constant 6.400000e+01 : f32
    %175 = vector.broadcast %cst_65 : f32 to vector<8x1xf32>
    %176 = arith.divf %174, %175 : vector<8x1xf32>
    %177 = arith.mulf %171, %171 : vector<8x1xf32>
    %178 = arith.subf %176, %177 : vector<8x1xf32>
    %cst_66 = arith.constant 0.000000e+00 : f32
    %179 = vector.broadcast %cst_66 : f32 to vector<8x1xf32>
    %180 = arith.maximumf %178, %179 : vector<8x1xf32>
    %181 = vector.broadcast %171 : vector<8x1xf32> to vector<8x64xf32>
    %182 = arith.subf %167, %181 : vector<8x64xf32>
    %cst_67 = arith.constant 9.99999974E-6 : f32
    %183 = vector.broadcast %cst_67 : f32 to vector<8x1xf32>
    %184 = arith.addf %180, %183 : vector<8x1xf32>
    %185 = math.rsqrt %184 : vector<8x1xf32>
    %186 = vector.broadcast %185 : vector<8x1xf32> to vector<8x64xf32>
    %187 = arith.mulf %182, %186 : vector<8x64xf32>
    %c17 = arith.constant 17 : index
    %c0_68 = arith.constant 0 : index
    %188 = vector.load %arg8[%c17, %c0_68] : memref<24x1024xf32, #tpu.memory_space<vmem>>, vector<1x64xf32>
    %189 = vector.broadcast %188 : vector<1x64xf32> to vector<8x64xf32>
    %190 = arith.mulf %187, %189 : vector<8x64xf32>
    %c18 = arith.constant 18 : index
    %c0_69 = arith.constant 0 : index
    %191 = vector.load %arg8[%c18, %c0_69] : memref<24x1024xf32, #tpu.memory_space<vmem>>, vector<1x64xf32>
    %192 = vector.broadcast %191 : vector<1x64xf32> to vector<8x64xf32>
    %193 = arith.addf %190, %192 : vector<8x64xf32>
    %cst_70 = arith.constant 0.000000e+00 : f32
    %194 = vector.broadcast %cst_70 : f32 to vector<8x64xf32>
    %195 = arith.maximumf %193, %194 : vector<8x64xf32>
    %196 = arith.truncf %195 : vector<8x64xf32> to vector<8x64xbf16>
    %c0_71 = arith.constant 0 : index
    %c0_72 = arith.constant 0 : index
    %197 = vector.load %arg7[%c0_71, %c0_72] : memref<64x128xbf16, #tpu.memory_space<vmem>>, vector<64x128xbf16>
    %cst_73 = arith.constant dense<0.000000e+00> : vector<8x128xf32>
    %198 = tpu.matmul %196, %197, %cst_73 {dimension_numbers = #tpu.dot_dimension_numbers<[1], [0], [0], [1], [0, 0, 1, 1], [], []>} : vector<8x64xbf16>, vector<64x128xbf16>, vector<8x128xf32> -> vector<8x128xf32>
    %c20 = arith.constant 20 : index
    %c0_74 = arith.constant 0 : index
    %199 = vector.load %arg8[%c20, %c0_74] : memref<24x1024xf32, #tpu.memory_space<vmem>>, vector<1x128xf32>
    %200 = vector.broadcast %199 : vector<1x128xf32> to vector<8x128xf32>
    %201 = arith.addf %198, %200 : vector<8x128xf32>
    %c0_75 = arith.constant 0 : index
    %c0_76 = arith.constant 0 : index
    %202 = vector.load %arg9[%c0_75, %c0_76] : memref<8x128xf32, #tpu.memory_space<vmem>>, vector<8x128xf32>
    tpu.vector_store %arg9[%c0_75, %c0_76], %201 {strides = array<i32>} : memref<8x128xf32, #tpu.memory_space<vmem>>, vector<8x128xf32>,
    return
  }
  func.func @transform_0(%arg0: i32) -> (i32, i32) {
    %c0_i32 = arith.constant 0 : i32
    %c0_i32_0 = arith.constant 0 : i32
    return %arg0, %c0_i32 : i32, i32
  }
  func.func @transform_1(%arg0: i32) -> (i32, i32) {
    %c0_i32 = arith.constant 0 : i32
    %c0_i32_0 = arith.constant 0 : i32
    %c0_i32_1 = arith.constant 0 : i32
    return %c0_i32, %c0_i32_0 : i32, i32
  }
  func.func @transform_2(%arg0: i32) -> (i32, i32) {
    %c0_i32 = arith.constant 0 : i32
    %c0_i32_0 = arith.constant 0 : i32
    %c0_i32_1 = arith.constant 0 : i32
    return %c0_i32, %c0_i32_0 : i32, i32
  }
  func.func @transform_3(%arg0: i32) -> (i32, i32) {
    %c0_i32 = arith.constant 0 : i32
    %c0_i32_0 = arith.constant 0 : i32
    %c0_i32_1 = arith.constant 0 : i32
    return %c0_i32, %c0_i32_0 : i32, i32
  }
  func.func @transform_4(%arg0: i32) -> (i32, i32) {
    %c0_i32 = arith.constant 0 : i32
    %c0_i32_0 = arith.constant 0 : i32
    %c0_i32_1 = arith.constant 0 : i32
    return %c0_i32, %c0_i32_0 : i32, i32
  }
  func.func @transform_5(%arg0: i32) -> (i32, i32) {
    %c0_i32 = arith.constant 0 : i32
    %c0_i32_0 = arith.constant 0 : i32
    %c0_i32_1 = arith.constant 0 : i32
    return %c0_i32, %c0_i32_0 : i32, i32
  }
  func.func @transform_6(%arg0: i32) -> (i32, i32) {
    %c0_i32 = arith.constant 0 : i32
    %c0_i32_0 = arith.constant 0 : i32
    %c0_i32_1 = arith.constant 0 : i32
    return %c0_i32, %c0_i32_0 : i32, i32
  }
  func.func @transform_7(%arg0: i32) -> (i32, i32) {
    %c0_i32 = arith.constant 0 : i32
    %c0_i32_0 = arith.constant 0 : i32
    %c0_i32_1 = arith.constant 0 : i32
    return %c0_i32, %c0_i32_0 : i32, i32
  }
  func.func @transform_8(%arg0: i32) -> (i32, i32) {
    %c0_i32 = arith.constant 0 : i32
    %c0_i32_0 = arith.constant 0 : i32
    return %arg0, %c0_i32 : i32, i32
  }
}

</mosaic_0001>

<llo_original>
// kernel: rot_red_global_forward.1
$region0: #{rot_red_global_forward.1}
  #allocation0 [shape = 'u32[]', space=smem, size = 0x4, offset = 0x4, fixed_abs, tag = 'smem constant byte address 0x4 - core index']
  #allocation1 [shape = 'u32[72,128]{1,0:T(1,128)}', space=vmem, size = 0x9000, scoped, tag = 'internal scratch']
  %s0 = inlined_call_operand.vmem [shape: f32[8,32], index: 0, kind: input, shape index: {}]
  %s1 = inlined_call_operand.vmem [shape: s8[32,512], index: 1, kind: input, shape index: {}]
  %s2 = inlined_call_operand.hbm [shape: s8[512,1024], index: 2, kind: input, shape index: {}]
  %s3 = inlined_call_operand.hbm [shape: s8[1024,512], index: 3, kind: input, shape index: {}]
  %s4 = inlined_call_operand.hbm [shape: s8[512,256], index: 4, kind: input, shape index: {}]
  %s5 = inlined_call_operand.vmem [shape: s8[256,64], index: 5, kind: input, shape index: {}]
  %s6 = inlined_call_operand.vmem [shape: bf16[64,128], index: 6, kind: input, shape index: {}]
  %s7 = inlined_call_operand.hbm [shape: f32[24,1024], index: 7, kind: input, shape index: {}]
  %s8 = inlined_call_operand.vmem [shape: f32[8,128], index: 8, kind: output, shape index: {}]
  %s9 = sld [smem:[#allocation0]]
  $region58: #{rot_red_global_forward.1} parent=0
    _
  %s11 = ssub.s32 1, %s9
  %s12 = scalar_select 0, %s11, %s9
  $region1: #{rot_red_global_forward.1} parent=0
    #allocation2 [shape = 'u8[524288]{0}', space=vmem, size = 0x80000, scoped, tag = 'input window, operand 2, single buffered']
    #allocation3 [shape = 's32[1]{0}', space=sflag, size = 0x4, scoped, tag = 'scoped memory for rot_red_global_forward.1']
    #allocation4 [shape = 'u8[524288]{0}', space=vmem, size = 0x80000, scoped, tag = 'input window, operand 3, single buffered']
    #allocation5 [shape = 's32[1]{0}', space=sflag, size = 0x4, scoped, tag = 'scoped memory for rot_red_global_forward.1']
    #allocation6 [shape = 'u8[131072]{0}', space=vmem, size = 0x20000, scoped, tag = 'input window, operand 4, single buffered']
    #allocation7 [shape = 'u8[98304]{0}', space=vmem, size = 0x18000, scoped, tag = 'input window, operand 7, single buffered']
    #allocation8 [shape = 's32[1]{0}', space=sflag, size = 0x4, scoped, tag = 'scoped memory for rot_red_global_forward.1']
    %13 = vsyncpa [#allocation3], 0
    %14 = vsyncpa [#allocation5], 0
    %15 = vsyncpa [#allocation8], 0
    // Predicated region
    $region2: #{rot_red_global_forward.1} parent=1 // pred_check
      _
    $region3: #{rot_red_global_forward.1} parent=1 // pred_check_branch
      %17 = sbr.rel (0) target = $region5
    $region4: #{rot_red_global_forward.1} parent=1 // pred_region
      _
    $region5: #{rot_red_global_forward.1} parent=1 // pred_fallthru
      _
    // Predicated region
    $region6: #{rot_red_global_forward.1} parent=1 // pred_check
      _
    $region7: #{rot_red_global_forward.1} parent=1 // pred_check_branch
      %19 = sbr.rel (0) target = $region9
    $region8: #{rot_red_global_forward.1} parent=1 // pred_region
      _
    $region9: #{rot_red_global_forward.1} parent=1 // pred_fallthru
      _
    // Predicated region
    $region10: #{rot_red_global_forward.1} parent=1 // pred_check
      _
    $region11: #{rot_red_global_forward.1} parent=1 // pred_check_branch
      %21 = sbr.rel (0) target = $region13
    $region12: #{rot_red_global_forward.1} parent=1 // pred_region
      %23 = vsyncadd [#allocation3], 0
      %s24 = sshll.u32 %s2, 4
      %s25 = int_to_ptr.hbm [resolvable:$true] %s24
      %s26 = sshll.u32 [#allocation2], 4
      %s27 = int_to_ptr.vmem [resolvable:$true] %s26
      %32 = dma.hbm_to_vmem [thread:$0]  %s25, 16384, %s27, [#allocation3], 1024, 1024, 64
    $region13: #{rot_red_global_forward.1} parent=1 // pred_fallthru
      _
    // Predicated region
    $region14: #{rot_red_global_forward.1} parent=1 // pred_check
      _
    $region15: #{rot_red_global_forward.1} parent=1 // pred_check_branch
      %34 = sbr.rel (0) target = $region17
    $region16: #{rot_red_global_forward.1} parent=1 // pred_region
      %36 = vsyncadd [#allocation5], 0
      %s37 = sshll.u32 %s3, 4
      %s38 = int_to_ptr.hbm [resolvable:$true] %s37
      %s39 = sshll.u32 [#allocation4], 4
      %s40 = int_to_ptr.vmem [resolvable:$true] %s39
      %45 = dma.hbm_to_vmem [thread:$0]  %s38, 16384, %s40, [#allocation5], 512, 512, 32
    $region17: #{rot_red_global_forward.1} parent=1 // pred_fallthru
      _
    // Predicated region
    $region18: #{rot_red_global_forward.1} parent=1 // pred_check
      _
    $region19: #{rot_red_global_forward.1} parent=1 // pred_check_branch
      %47 = sbr.rel (0) target = $region21
    $region20: #{rot_red_global_forward.1} parent=1 // pred_region
      %49 = vsyncadd [#allocation5], 0
      %s50 = sshll.u32 %s4, 4
      %s51 = int_to_ptr.hbm [resolvable:$true] %s50
      %s52 = sshll.u32 [#allocation6], 4
      %s53 = int_to_ptr.vmem [resolvable:$true] %s52
      %58 = dma.hbm_to_vmem [thread:$0]  %s51, 4096, %s53, [#allocation5], 256, 256, 16
    $region21: #{rot_red_global_forward.1} parent=1 // pred_fallthru
      _
    // Predicated region
    $region22: #{rot_red_global_forward.1} parent=1 // pred_check
      _
    $region23: #{rot_red_global_forward.1} parent=1 // pred_check_branch
      %60 = sbr.rel (0) target = $region25
    $region24: #{rot_red_global_forward.1} parent=1 // pred_region
      _
    $region25: #{rot_red_global_forward.1} parent=1 // pred_fallthru
      _
    // Predicated region
    $region26: #{rot_red_global_forward.1} parent=1 // pred_check
      _
    $region27: #{rot_red_global_forward.1} parent=1 // pred_check_branch
      %62 = sbr.rel (0) target = $region29
    $region28: #{rot_red_global_forward.1} parent=1 // pred_region
      _
    $region29: #{rot_red_global_forward.1} parent=1 // pred_fallthru
      _
    // Predicated region
    $region30: #{rot_red_global_forward.1} parent=1 // pred_check
      _
    $region31: #{rot_red_global_forward.1} parent=1 // pred_check_branch
      %64 = sbr.rel (0) target = $region33
    $region32: #{rot_red_global_forward.1} parent=1 // pred_region
      %66 = vsyncadd [#allocation8], 0
      %s67 = sshll.u32 %s7, 4
      %s68 = int_to_ptr.hbm [resolvable:$true] %s67
      %s69 = sshll.u32 [#allocation7], 4
      %s70 = int_to_ptr.vmem [resolvable:$true] %s69
      %75 = dma.hbm_to_vmem [thread:$0]  %s68, 3072, %s70, [#allocation8], 1024, 1024, 64
    $region33: #{rot_red_global_forward.1} parent=1 // pred_fallthru
      _
    // Predicated region
    $region34: #{rot_red_global_forward.1} parent=1 // pred_check
      _
    $region35: #{rot_red_global_forward.1} parent=1 // pred_check_branch
      %77 = sbr.rel (0) target = $region37
    $region36: #{rot_red_global_forward.1} parent=1 // pred_region
      %79 = dma.done [#allocation3], 16384
    $region37: #{rot_red_global_forward.1} parent=1 // pred_fallthru
      _
    // Predicated region
    $region38: #{rot_red_global_forward.1} parent=1 // pred_check
      _
    $region39: #{rot_red_global_forward.1} parent=1 // pred_check_branch
      %81 = sbr.rel (0) target = $region41
    $region40: #{rot_red_global_forward.1} parent=1 // pred_region
      %83 = dma.done [#allocation5], 16384
    $region41: #{rot_red_global_forward.1} parent=1 // pred_fallthru
      _
    // Predicated region
    $region42: #{rot_red_global_forward.1} parent=1 // pred_check
      _
    $region43: #{rot_red_global_forward.1} parent=1 // pred_check_branch
      %85 = sbr.rel (0) target = $region45
    $region44: #{rot_red_global_forward.1} parent=1 // pred_region
      %87 = dma.done [#allocation5], 4096
    $region45: #{rot_red_global_forward.1} parent=1 // pred_fallthru
      _
    // Predicated region
    $region46: #{rot_red_global_forward.1} parent=1 // pred_check
      _
    $region47: #{rot_red_global_forward.1} parent=1 // pred_check_branch
      %89 = sbr.rel (0) target = $region49
    $region48: #{rot_red_global_forward.1} parent=1 // pred_region
      %91 = dma.done [#allocation8], 3072
    $region49: #{rot_red_global_forward.1} parent=1 // pred_fallthru
      _
    %v93 = vld [vmem:[%s0] sm:$0xff]
    %v94 = vld [vmem:[%s1] sm:$0xff]
    %v95 = vld [vmem:[%s1 + $0x8] sm:$0xff]
    %v96 = vld [vmem:[%s1 + $0x10] sm:$0xff]
    %v97 = vld [vmem:[%s1 + $0x18] sm:$0xff]
    %v98 = vunpack.c.0.s8 %v94
    %v99 = vunpack.c.0.s8 %v95
    %v100 = vunpack.c.0.s8 %v96
    %v101 = vunpack.c.0.s8 %v97
    %v102 = vunpack.c.1.s8 %v94
    %v103 = vunpack.c.1.s8 %v95
    %v104 = vunpack.c.1.s8 %v96
    %v105 = vunpack.c.1.s8 %v97
    %v106 = vunpack.c.2.s8 %v94
    %v107 = vunpack.c.2.s8 %v95
    %v108 = vunpack.c.2.s8 %v96
    %v109 = vunpack.c.2.s8 %v97
    %v110 = vunpack.c.3.s8 %v94
    %v111 = vunpack.c.3.s8 %v95
    %v112 = vunpack.c.3.s8 %v96
    %v113 = vunpack.c.3.s8 %v97
    %v114 = vcvt.s32.f32 %v98
    %v115 = vcvt.s32.f32 %v99
    %v116 = vcvt.s32.f32 %v100
    %v117 = vcvt.s32.f32 %v101
    %v118 = vcvt.s32.f32 %v102
    %v119 = vcvt.s32.f32 %v103
    %v120 = vcvt.s32.f32 %v104
    %v121 = vcvt.s32.f32 %v105
    %v122 = vcvt.s32.f32 %v106
    %v123 = vcvt.s32.f32 %v107
    %v124 = vcvt.s32.f32 %v108
    %v125 = vcvt.s32.f32 %v109
    %v126 = vcvt.s32.f32 %v110
    %v127 = vcvt.s32.f32 %v111
    %v128 = vcvt.s32.f32 %v112
    %v129 = vcvt.s32.f32 %v113
    %v130 = vpack.c.bf16 %v118, %v114
    %v131 = vpack.c.bf16 %v119, %v115
    %v132 = vpack.c.bf16 %v120, %v116
    %v133 = vpack.c.bf16 %v121, %v117
    %v134 = vpack.c.bf16 %v126, %v122
    %v135 = vpack.c.bf16 %v127, %v123
    %v136 = vpack.c.bf16 %v128, %v124
    %v137 = vpack.c.bf16 %v129, %v125
    %v138 = vpack.c.bf16 %v93, %v93
    %vm139 = vcmask 261120
    %v141 = vsel %vm139, %v138, 0
    %143 = vmatpush.bf16.msra.mxu0 0
    %144 = vmatpush.bf16.msra.mxu0 0
    %145 = vmatpush.bf16.msra.mxu0 0
    %146 = vmatpush.bf16.msra.mxu0 0
    %147 = vmatpush.bf16.msra.mxu0 0
    %148 = vmatpush.bf16.msra.mxu0 0
    %149 = vmatpush.bf16.msra.mxu0 %v134
    %150 = vmatpush.bf16.msra.mxu0 %v130
    %151 = vmatmul.bf16.gmra.mxu0 %v141
    %v152 = vpop.f32.mrf.mxu0
    %v153 = vadd.f32 0.0, %v152
    %v154 = vpop.f32.mrf.mxu0
    %155 = vdwg.mxu0
    %156 = vmatpush.bf16.msra.mxu0 0
    %157 = vmatpush.bf16.msra.mxu0 0
    %158 = vmatpush.bf16.msra.mxu0 0
    %159 = vmatpush.bf16.msra.mxu0 0
    %160 = vmatpush.bf16.msra.mxu0 0
    %161 = vmatpush.bf16.msra.mxu0 0
    %162 = vmatpush.bf16.msra.mxu0 %v135
    %163 = vmatpush.bf16.msra.mxu0 %v131
    %164 = vmatmul.bf16.gmra.mxu0 %v141
    %v165 = vpop.f32.mrf.mxu0
    %v166 = vadd.f32 0.0, %v165
    %v167 = vpop.f32.mrf.mxu0
    %168 = vdwg.mxu0
    %169 = vmatpush.bf16.msra.mxu0 0
    %170 = vmatpush.bf16.msra.mxu0 0
    %171 = vmatpush.bf16.msra.mxu0 0
    %172 = vmatpush.bf16.msra.mxu0 0
    %173 = vmatpush.bf16.msra.mxu0 0
    %174 = vmatpush.bf16.msra.mxu0 0
    %175 = vmatpush.bf16.msra.mxu0 %v136
    %176 = vmatpush.bf16.msra.mxu0 %v132
    %177 = vmatmul.bf16.gmra.mxu0 %v141
    %v178 = vpop.f32.mrf.mxu0
    %v179 = vadd.f32 0.0, %v178
    %v180 = vpop.f32.mrf.mxu0
    %181 = vdwg.mxu0
    %182 = vmatpush.bf16.msra.mxu0 0
    %183 = vmatpush.bf16.msra.mxu0 0
    %184 = vmatpush.bf16.msra.mxu0 0
    %185 = vmatpush.bf16.msra.mxu0 0
    %186 = vmatpush.bf16.msra.mxu0 0
    %187 = vmatpush.bf16.msra.mxu0 0
    %188 = vmatpush.bf16.msra.mxu0 %v137
    %189 = vmatpush.bf16.msra.mxu0 %v133
    %190 = vmatmul.bf16.gmra.mxu0 %v141
    %v191 = vpop.f32.mrf.mxu0
    %v192 = vadd.f32 0.0, %v191
    %v193 = vpop.f32.mrf.mxu0
    %194 = vdwg.mxu0
    %s195 = scalar_lea.vmem [#allocation7], 3
    %v196 = vld [vmem:[%s195] ss:$8 sm:$0xf]
    %v198 = vperm.slane %v196, 0
    %v199 = vperm.slane %v196, 1
    %v200 = vperm.slane %v196, 2
    %v201 = vperm.slane %v196, 3
    %v206 = vmul.f32 %v153, %v198
    %v207 = vmul.f32 %v166, %v199
    %v208 = vmul.f32 %v179, %v200
    %v209 = vmul.f32 %v192, %v201
    %v210 = vld [vmem:[#allocation7] ss:$8 sm:$0xf]
    %v212 = vperm.slane %v210, 0
    %v213 = vperm.slane %v210, 1
    %v214 = vperm.slane %v210, 2
    %v215 = vperm.slane %v210, 3
    %v220 = vadd.f32 %v206, %v212
    %v221 = vadd.f32 %v207, %v213
    %v222 = vadd.f32 %v208, %v214
    %v223 = vadd.f32 %v209, %v215
    %v224 = vadd.f32 %v220, %v221
    %v225 = vadd.f32 %v224, %v222
    %v226 = vadd.f32 %v225, %v223
    %227 = vadd.xlane.f32.xlu0 %v226
    %v228 = vpop.xlane.xlu0 %227
    %v229 = vrcp.pop 512.0
    %v230 = vmul.f32 512.0, %v229
    %v231 = vsub.f32 1.0, %v230
    %v232 = vmul.f32 %v229, %v231
    %v233 = vadd.f32 %v229, %v232
    %vm234 = vweird.f32 %v229
    %v235 = vsel %vm234, %v229, %v233
    %v236 = vmul.f32 %v228, %v235
    %v237 = vmul.f32 %v220, %v220
    %v238 = vmul.f32 %v221, %v221
    %v239 = vmul.f32 %v222, %v222
    %v240 = vmul.f32 %v223, %v223
    %v241 = vadd.f32 %v237, %v238
    %v242 = vadd.f32 %v241, %v239
    %v243 = vadd.f32 %v242, %v240
    %244 = vadd.xlane.f32.xlu0 %v243
    %v245 = vpop.xlane.xlu0 %244
    %v246 = vmul.f32 %v245, %v235
    %v247 = vmul.f32 %v236, %v236
    %v248 = vsub.f32 %v246, %v247
    %v249 = vmax.f32 %v248, 0.0
    %v250 = vsub.f32 %v220, %v236
    %v251 = vsub.f32 %v221, %v236
    %v252 = vsub.f32 %v222, %v236
    %v253 = vsub.f32 %v223, %v236
    %v254 = vadd.f32 %v249, 1e-05
    %v255 = vrsqrt.pop %v254
    %v256 = vmul.f32 %v255, %v254
    %v257 = vmul.f32 %v256, %v255
    %v258 = vmul.f32 0.5, %v257
    %v259 = vsub.f32 1.5, %v258
    %v260 = vmul.f32 %v255, %v259
    %vm261 = vweird.f32 %v254
    %vm262 = vweird.f32 %v255
    %vm263 = vmor %vm261, %vm262
    %v264 = vsel %vm263, %v255, %v260
    %v265 = vmul.f32 %v250, %v264
    %v266 = vmul.f32 %v251, %v264
    %v267 = vmul.f32 %v252, %v264
    %v268 = vmul.f32 %v253, %v264
    %s269 = scalar_lea.vmem [#allocation7], 1
    %v270 = vld [vmem:[%s269] ss:$8 sm:$0xf]
    %v272 = vperm.slane %v270, 0
    %v273 = vperm.slane %v270, 1
    %v274 = vperm.slane %v270, 2
    %v275 = vperm.slane %v270, 3
    %v280 = vmul.f32 %v265, %v272
    %v281 = vmul.f32 %v266, %v273
    %v282 = vmul.f32 %v267, %v274
    %v283 = vmul.f32 %v268, %v275
    %s284 = scalar_lea.vmem [#allocation7], 2
    %v285 = vld [vmem:[%s284] ss:$8 sm:$0xf]
    %v287 = vperm.slane %v285, 0
    %v288 = vperm.slane %v285, 1
    %v289 = vperm.slane %v285, 2
    %v290 = vperm.slane %v285, 3
    %v295 = vadd.f32 %v280, %v287
    %v296 = vadd.f32 %v281, %v288
    %v297 = vadd.f32 %v282, %v289
    %v298 = vadd.f32 %v283, %v290
    %v299 = vmax.f32 %v295, 0.0
    %v300 = vmax.f32 %v296, 0.0
    %v301 = vmax.f32 %v297, 0.0
    %v302 = vmax.f32 %v298, 0.0
    %v303 = vld [vmem:[#allocation2] sm:$0xff]
    %v304 = vld [vmem:[#allocation2 + $0x8] sm:$0xff]
    %v305 = vld [vmem:[#allocation2 + $0x10] sm:$0xff]
    %v306 = vld [vmem:[#allocation2 + $0x18] sm:$0xff]
    %v307 = vld [vmem:[#allocation2 + $0x20] sm:$0xff]
    %v308 = vld [vmem:[#allocation2 + $0x28] sm:$0xff]
    %v309 = vld [vmem:[#allocation2 + $0x30] sm:$0xff]
    %v310 = vld [vmem:[#allocation2 + $0x38] sm:$0xff]
    %v311 = vld [vmem:[#allocation2 + $0x40] sm:$0xff]
    %v312 = vld [vmem:[#allocation2 + $0x48] sm:$0xff]
    %v313 = vld [vmem:[#allocation2 + $0x50] sm:$0xff]
    %v314 = vld [vmem:[#allocation2 + $0x58] sm:$0xff]
    %v315 = vld [vmem:[#allocation2 + $0x60] sm:$0xff]
    %v316 = vld [vmem:[#allocation2 + $0x68] sm:$0xff]
    %v317 = vld [vmem:[#allocation2 + $0x70] sm:$0xff]
    %v318 = vld [vmem:[#allocation2 + $0x78] sm:$0xff]
    %v319 = vld [vmem:[#allocation2 + $0x80] sm:$0xff]
    %v320 = vld [vmem:[#allocation2 + $0x88] sm:$0xff]
    %v321 = vld [vmem:[#allocation2 + $0x90] sm:$0xff]
    %v322 = vld [vmem:[#allocation2 + $0x98] sm:$0xff]
    %v323 = vld [vmem:[#allocation2 + $0xa0] sm:$0xff]
    %v324 = vld [vmem:[#allocation2 + $0xa8] sm:$0xff]
    %v325 = vld [vmem:[#allocation2 + $0xb0] sm:$0xff]
    %v326 = vld [vmem:[#allocation2 + $0xb8] sm:$0xff]
    %v327 = vld [vmem:[#allocation2 + $0xc0] sm:$0xff]
    %v328 = vld [vmem:[#allocation2 + $0xc8] sm:$0xff]
    %v329 = vld [vmem:[#allocation2 + $0xd0] sm:$0xff]
    %v330 = vld [vmem:[#allocation2 + $0xd8] sm:$0xff]
    %v331 = vld [vmem:[#allocation2 + $0xe0] sm:$0xff]
    %v332 = vld [vmem:[#allocation2 + $0xe8] sm:$0xff]
    %v333 = vld [vmem:[#allocation2 + $0xf0] sm:$0xff]
    %v334 = vld [vmem:[#allocation2 + $0xf8] sm:$0xff]
    %v335 = vld [vmem:[#allocation2 + $0x100] sm:$0xff]
    %v336 = vld [vmem:[#allocation2 + $0x108] sm:$0xff]
    %v337 = vld [vmem:[#allocation2 + $0x110] sm:$0xff]
    %v338 = vld [vmem:[#allocation2 + $0x118] sm:$0xff]
    %v339 = vld [vmem:[#allocation2 + $0x120] sm:$0xff]
    %v340 = vld [vmem:[#allocation2 + $0x128] sm:$0xff]
    %v341 = vld [vmem:[#allocation2 + $0x130] sm:$0xff]
    %v342 = vld [vmem:[#allocation2 + $0x138] sm:$0xff]
    %v343 = vld [vmem:[#allocation2 + $0x140] sm:$0xff]
    %v344 = vld [vmem:[#allocation2 + $0x148] sm:$0xff]
    %v345 = vld [vmem:[#allocation2 + $0x150] sm:$0xff]
    %v346 = vld [vmem:[#allocation2 + $0x158] sm:$0xff]
    %v347 = vld [vmem:[#allocation2 + $0x160] sm:$0xff]
    %v348 = vld [vmem:[#allocation2 + $0x168] sm:$0xff]
    %v349 = vld [vmem:[#allocation2 + $0x170] sm:$0xff]
    %v350 = vld [vmem:[#allocation2 + $0x178] sm:$0xff]
    %v351 = vld [vmem:[#allocation2 + $0x180] sm:$0xff]
    %v352 = vld [vmem:[#allocation2 + $0x188] sm:$0xff]
    %v353 = vld [vmem:[#allocation2 + $0x190] sm:$0xff]
    %v354 = vld [vmem:[#allocation2 + $0x198] sm:$0xff]
    %v355 = vld [vmem:[#allocation2 + $0x1a0] sm:$0xff]
    %v356 = vld [vmem:[#allocation2 + $0x1a8] sm:$0xff]
    %v357 = vld [vmem:[#allocation2 + $0x1b0] sm:$0xff]
    %v358 = vld [vmem:[#allocation2 + $0x1b8] sm:$0xff]
    %v359 = vld [vmem:[#allocation2 + $0x1c0] sm:$0xff]
    %v360 = vld [vmem:[#allocation2 + $0x1c8] sm:$0xff]
    %v361 = vld [vmem:[#allocation2 + $0x1d0] sm:$0xff]
    %v362 = vld [vmem:[#allocation2 + $0x1d8] sm:$0xff]
    %v363 = vld [vmem:[#allocation2 + $0x1e0] sm:$0xff]
    %v364 = vld [vmem:[#allocation2 + $0x1e8] sm:$0xff]
    %v365 = vld [vmem:[#allocation2 + $0x1f0] sm:$0xff]
    %v366 = vld [vmem:[#allocation2 + $0x1f8] sm:$0xff]
    %v367 = vld [vmem:[#allocation2 + $0x200] sm:$0xff]
    %v368 = vld [vmem:[#allocation2 + $0x208] sm:$0xff]
    %v369 = vld [vmem:[#allocation2 + $0x210] sm:$0xff]
    %v370 = vld [vmem:[#allocation2 + $0x218] sm:$0xff]
    %v371 = vld [vmem:[#allocation2 + $0x220] sm:$0xff]
    %v372 = vld [vmem:[#allocation2 + $0x228] sm:$0xff]
    %v373 = vld [vmem:[#allocation2 + $0x230] sm:$0xff]
    %v374 = vld [vmem:[#allocation2 + $0x238] sm:$0xff]
    %v375 = vld [vmem:[#allocation2 + $0x240] sm:$0xff]
    %v376 = vld [vmem:[#allocation2 + $0x248] sm:$0xff]
    %v377 = vld [vmem:[#allocation2 + $0x250] sm:$0xff]
    %v378 = vld [vmem:[#allocation2 + $0x258] sm:$0xff]
    %v379 = vld [vmem:[#allocation2 + $0x260] sm:$0xff]
    %v380 = vld [vmem:[#allocation2 + $0x268] sm:$0xff]
    %v381 = vld [vmem:[#allocation2 + $0x270] sm:$0xff]
    %v382 = vld [vmem:[#allocation2 + $0x278] sm:$0xff]
    %v383 = vld [vmem:[#allocation2 + $0x280] sm:$0xff]
    %v384 = vld [vmem:[#allocation2 + $0x288] sm:$0xff]
    %v385 = vld [vmem:[#allocation2 + $0x290] sm:$0xff]
    %v386 = vld [vmem:[#allocation2 + $0x298] sm:$0xff]
    %v387 = vld [vmem:[#allocation2 + $0x2a0] sm:$0xff]
    %v388 = vld [vmem:[#allocation2 + $0x2a8] sm:$0xff]
    %v389 = vld [vmem:[#allocation2 + $0x2b0] sm:$0xff]
    %v390 = vld [vmem:[#allocation2 + $0x2b8] sm:$0xff]
    %v391 = vld [vmem:[#allocation2 + $0x2c0] sm:$0xff]
    %v392 = vld [vmem:[#allocation2 + $0x2c8] sm:$0xff]
    %v393 = vld [vmem:[#allocation2 + $0x2d0] sm:$0xff]
    %v394 = vld [vmem:[#allocation2 + $0x2d8] sm:$0xff]
    %v395 = vld [vmem:[#allocation2 + $0x2e0] sm:$0xff]
    %v396 = vld [vmem:[#allocation2 + $0x2e8] sm:$0xff]
    %v397 = vld [vmem:[#allocation2 + $0x2f0] sm:$0xff]
    %v398 = vld [vmem:[#allocation2 + $0x2f8] sm:$0xff]
    %v399 = vld [vmem:[#allocation2 + $0x300] sm:$0xff]
    %v400 = vld [vmem:[#allocation2 + $0x308] sm:$0xff]
    %v401 = vld [vmem:[#allocation2 + $0x310] sm:$0xff]
    %v402 = vld [vmem:[#allocation2 + $0x318] sm:$0xff]
    %v403 = vld [vmem:[#allocation2 + $0x320] sm:$0xff]
    %v404 = vld [vmem:[#allocation2 + $0x328] sm:$0xff]
    %v405 = vld [vmem:[#allocation2 + $0x330] sm:$0xff]
    %v406 = vld [vmem:[#allocation2 + $0x338] sm:$0xff]
    %v407 = vld [vmem:[#allocation2 + $0x340] sm:$0xff]
    %v408 = vld [vmem:[#allocation2 + $0x348] sm:$0xff]
    %v409 = vld [vmem:[#allocation2 + $0x350] sm:$0xff]
    %v410 = vld [vmem:[#allocation2 + $0x358] sm:$0xff]
    %v411 = vld [vmem:[#allocation2 + $0x360] sm:$0xff]
    %v412 = vld [vmem:[#allocation2 + $0x368] sm:$0xff]
    %v413 = vld [vmem:[#allocation2 + $0x370] sm:$0xff]
    %v414 = vld [vmem:[#allocation2 + $0x378] sm:$0xff]
    %v415 = vld [vmem:[#allocation2 + $0x380] sm:$0xff]
    %v416 = vld [vmem:[#allocation2 + $0x388] sm:$0xff]
    %v417 = vld [vmem:[#allocation2 + $0x390] sm:$0xff]
    %v418 = vld [vmem:[#allocation2 + $0x398] sm:$0xff]
    %v419 = vld [vmem:[#allocation2 + $0x3a0] sm:$0xff]
    %v420 = vld [vmem:[#allocation2 + $0x3a8] sm:$0xff]
    %v421 = vld [vmem:[#allocation2 + $0x3b0] sm:$0xff]
    %v422 = vld [vmem:[#allocation2 + $0x3b8] sm:$0xff]
    %v423 = vld [vmem:[#allocation2 + $0x3c0] sm:$0xff]
    %v424 = vld [vmem:[#allocation2 + $0x3c8] sm:$0xff]
    %v425 = vld [vmem:[#allocation2 + $0x3d0] sm:$0xff]
    %v426 = vld [vmem:[#allocation2 + $0x3d8] sm:$0xff]
    %v427 = vld [vmem:[#allocation2 + $0x3e0] sm:$0xff]
    %v428 = vld [vmem:[#allocation2 + $0x3e8] sm:$0xff]
    %v429 = vld [vmem:[#allocation2 + $0x3f0] sm:$0xff]
    %v430 = vld [vmem:[#allocation2 + $0x3f8] sm:$0xff]
    %v431 = vunpack.c.0.s8 %v303
    %v432 = vunpack.c.0.s8 %v304
    %v433 = vunpack.c.0.s8 %v305
    %v434 = vunpack.c.0.s8 %v306
    %v435 = vunpack.c.0.s8 %v307
    %v436 = vunpack.c.0.s8 %v308
    %v437 = vunpack.c.0.s8 %v309
    %v438 = vunpack.c.0.s8 %v310
    %v439 = vunpack.c.1.s8 %v303
    %v440 = vunpack.c.1.s8 %v304
    %v441 = vunpack.c.1.s8 %v305
    %v442 = vunpack.c.1.s8 %v306
    %v443 = vunpack.c.1.s8 %v307
    %v444 = vunpack.c.1.s8 %v308
    %v445 = vunpack.c.1.s8 %v309
    %v446 = vunpack.c.1.s8 %v310
    %v447 = vunpack.c.2.s8 %v303
    %v448 = vunpack.c.2.s8 %v304
    %v449 = vunpack.c.2.s8 %v305
    %v450 = vunpack.c.2.s8 %v306
    %v451 = vunpack.c.2.s8 %v307
    %v452 = vunpack.c.2.s8 %v308
    %v453 = vunpack.c.2.s8 %v309
    %v454 = vunpack.c.2.s8 %v310
    %v455 = vunpack.c.3.s8 %v303
    %v456 = vunpack.c.3.s8 %v304
    %v457 = vunpack.c.3.s8 %v305
    %v458 = vunpack.c.3.s8 %v306
    %v459 = vunpack.c.3.s8 %v307
    %v460 = vunpack.c.3.s8 %v308
    %v461 = vunpack.c.3.s8 %v309
    %v462 = vunpack.c.3.s8 %v310
    %v463 = vunpack.c.0.s8 %v311
    %v464 = vunpack.c.0.s8 %v312
    %v465 = vunpack.c.0.s8 %v313
    %v466 = vunpack.c.0.s8 %v314
    %v467 = vunpack.c.0.s8 %v315
    %v468 = vunpack.c.0.s8 %v316
    %v469 = vunpack.c.0.s8 %v317
    %v470 = vunpack.c.0.s8 %v318
    %v471 = vunpack.c.1.s8 %v311
    %v472 = vunpack.c.1.s8 %v312
    %v473 = vunpack.c.1.s8 %v313
    %v474 = vunpack.c.1.s8 %v314
    %v475 = vunpack.c.1.s8 %v315
    %v476 = vunpack.c.1.s8 %v316
    %v477 = vunpack.c.1.s8 %v317
    %v478 = vunpack.c.1.s8 %v318
    %v479 = vunpack.c.2.s8 %v311
    %v480 = vunpack.c.2.s8 %v312
    %v481 = vunpack.c.2.s8 %v313
    %v482 = vunpack.c.2.s8 %v314
    %v483 = vunpack.c.2.s8 %v315
    %v484 = vunpack.c.2.s8 %v316
    %v485 = vunpack.c.2.s8 %v317
    %v486 = vunpack.c.2.s8 %v318
    %v487 = vunpack.c.3.s8 %v311
    %v488 = vunpack.c.3.s8 %v312
    %v489 = vunpack.c.3.s8 %v313
    %v490 = vunpack.c.3.s8 %v314
    %v491 = vunpack.c.3.s8 %v315
    %v492 = vunpack.c.3.s8 %v316
    %v493 = vunpack.c.3.s8 %v317
    %v494 = vunpack.c.3.s8 %v318
    %v495 = vunpack.c.0.s8 %v319
    %v496 = vunpack.c.0.s8 %v320
    %v497 = vunpack.c.0.s8 %v321
    %v498 = vunpack.c.0.s8 %v322
    %v499 = vunpack.c.0.s8 %v323
    %v500 = vunpack.c.0.s8 %v324
    %v501 = vunpack.c.0.s8 %v325
    %v502 = vunpack.c.0.s8 %v326
    %v503 = vunpack.c.1.s8 %v319
    %v504 = vunpack.c.1.s8 %v320
    %v505 = vunpack.c.1.s8 %v321
    %v506 = vunpack.c.1.s8 %v322
    %v507 = vunpack.c.1.s8 %v323
    %v508 = vunpack.c.1.s8 %v324
    %v509 = vunpack.c.1.s8 %v325
    %v510 = vunpack.c.1.s8 %v326
    %v511 = vunpack.c.2.s8 %v319
    %v512 = vunpack.c.2.s8 %v320
    %v513 = vunpack.c.2.s8 %v321
    %v514 = vunpack.c.2.s8 %v322
    %v515 = vunpack.c.2.s8 %v323
    %v516 = vunpack.c.2.s8 %v324
    %v517 = vunpack.c.2.s8 %v325
    %v518 = vunpack.c.2.s8 %v326
    %v519 = vunpack.c.3.s8 %v319
    %v520 = vunpack.c.3.s8 %v320
    %v521 = vunpack.c.3.s8 %v321
    %v522 = vunpack.c.3.s8 %v322
    %v523 = vunpack.c.3.s8 %v323
    %v524 = vunpack.c.3.s8 %v324
    %v525 = vunpack.c.3.s8 %v325
    %v526 = vunpack.c.3.s8 %v326
    %v527 = vunpack.c.0.s8 %v327
    %v528 = vunpack.c.0.s8 %v328
    %v529 = vunpack.c.0.s8 %v329
    %v530 = vunpack.c.0.s8 %v330
    %v531 = vunpack.c.0.s8 %v331
    %v532 = vunpack.c.0.s8 %v332
    %v533 = vunpack.c.0.s8 %v333
    %v534 = vunpack.c.0.s8 %v334
    %v535 = vunpack.c.1.s8 %v327
    %v536 = vunpack.c.1.s8 %v328
    %v537 = vunpack.c.1.s8 %v329
    %v538 = vunpack.c.1.s8 %v330
    %v539 = vunpack.c.1.s8 %v331
    %v540 = vunpack.c.1.s8 %v332
    %v541 = vunpack.c.1.s8 %v333
    %v542 = vunpack.c.1.s8 %v334
    %v543 = vunpack.c.2.s8 %v327
    %v544 = vunpack.c.2.s8 %v328
    %v545 = vunpack.c.2.s8 %v329
    %v546 = vunpack.c.2.s8 %v330
    %v547 = vunpack.c.2.s8 %v331
    %v548 = vunpack.c.2.s8 %v332
    %v549 = vunpack.c.2.s8 %v333
    %v550 = vunpack.c.2.s8 %v334
    %v551 = vunpack.c.3.s8 %v327
    %v552 = vunpack.c.3.s8 %v328
    %v553 = vunpack.c.3.s8 %v329
    %v554 = vunpack.c.3.s8 %v330
    %v555 = vunpack.c.3.s8 %v331
    %v556 = vunpack.c.3.s8 %v332
    %v557 = vunpack.c.3.s8 %v333
    %v558 = vunpack.c.3.s8 %v334
    %v559 = vunpack.c.0.s8 %v335
    %v560 = vunpack.c.0.s8 %v336
    %v561 = vunpack.c.0.s8 %v337
    %v562 = vunpack.c.0.s8 %v338
    %v563 = vunpack.c.0.s8 %v339
    %v564 = vunpack.c.0.s8 %v340
    %v565 = vunpack.c.0.s8 %v341
    %v566 = vunpack.c.0.s8 %v342
    %v567 = vunpack.c.1.s8 %v335
    %v568 = vunpack.c.1.s8 %v336
    %v569 = vunpack.c.1.s8 %v337
    %v570 = vunpack.c.1.s8 %v338
    %v571 = vunpack.c.1.s8 %v339
    %v572 = vunpack.c.1.s8 %v340
    %v573 = vunpack.c.1.s8 %v341
    %v574 = vunpack.c.1.s8 %v342
    %v575 = vunpack.c.2.s8 %v335
    %v576 = vunpack.c.2.s8 %v336
    %v577 = vunpack.c.2.s8 %v337
    %v578 = vunpack.c.2.s8 %v338
    %v579 = vunpack.c.2.s8 %v339
    %v580 = vunpack.c.2.s8 %v340
    %v581 = vunpack.c.2.s8 %v341
    %v582 = vunpack.c.2.s8 %v342
    %v583 = vunpack.c.3.s8 %v335
    %v584 = vunpack.c.3.s8 %v336
    %v585 = vunpack.c.3.s8 %v337
    %v586 = vunpack.c.3.s8 %v338
    %v587 = vunpack.c.3.s8 %v339
    %v588 = vunpack.c.3.s8 %v340
    %v589 = vunpack.c.3.s8 %v341
    %v590 = vunpack.c.3.s8 %v342
    %v591 = vunpack.c.0.s8 %v343
    %v592 = vunpack.c.0.s8 %v344
    %v593 = vunpack.c.0.s8 %v345
    %v594 = vunpack.c.0.s8 %v346
    %v595 = vunpack.c.0.s8 %v347
    %v596 = vunpack.c.0.s8 %v348
    %v597 = vunpack.c.0.s8 %v349
    %v598 = vunpack.c.0.s8 %v350
    %v599 = vunpack.c.1.s8 %v343
    %v600 = vunpack.c.1.s8 %v344
    %v601 = vunpack.c.1.s8 %v345
    %v602 = vunpack.c.1.s8 %v346
    %v603 = vunpack.c.1.s8 %v347
    %v604 = vunpack.c.1.s8 %v348
    %v605 = vunpack.c.1.s8 %v349
    %v606 = vunpack.c.1.s8 %v350
    %v607 = vunpack.c.2.s8 %v343
    %v608 = vunpack.c.2.s8 %v344
    %v609 = vunpack.c.2.s8 %v345
    %v610 = vunpack.c.2.s8 %v346
    %v611 = vunpack.c.2.s8 %v347
    %v612 = vunpack.c.2.s8 %v348
    %v613 = vunpack.c.2.s8 %v349
    %v614 = vunpack.c.2.s8 %v350
    %v615 = vunpack.c.3.s8 %v343
    %v616 = vunpack.c.3.s8 %v344
    %v617 = vunpack.c.3.s8 %v345
    %v618 = vunpack.c.3.s8 %v346
    %v619 = vunpack.c.3.s8 %v347
    %v620 = vunpack.c.3.s8 %v348
    %v621 = vunpack.c.3.s8 %v349
    %v622 = vunpack.c.3.s8 %v350
    %v623 = vunpack.c.0.s8 %v351
    %v624 = vunpack.c.0.s8 %v352
    %v625 = vunpack.c.0.s8 %v353
    %v626 = vunpack.c.0.s8 %v354
    %v627 = vunpack.c.0.s8 %v355
    %v628 = vunpack.c.0.s8 %v356
    %v629 = vunpack.c.0.s8 %v357
    %v630 = vunpack.c.0.s8 %v358
    %v631 = vunpack.c.1.s8 %v351
    %v632 = vunpack.c.1.s8 %v352
    %v633 = vunpack.c.1.s8 %v353
    %v634 = vunpack.c.1.s8 %v354
    %v635 = vunpack.c.1.s8 %v355
    %v636 = vunpack.c.1.s8 %v356
    %v637 = vunpack.c.1.s8 %v357
    %v638 = vunpack.c.1.s8 %v358
    %v639 = vunpack.c.2.s8 %v351
    %v640 = vunpack.c.2.s8 %v352
    %v641 = vunpack.c.2.s8 %v353
    %v642 = vunpack.c.2.s8 %v354
    %v643 = vunpack.c.2.s8 %v355
    %v644 = vunpack.c.2.s8 %v356
    %v645 = vunpack.c.2.s8 %v357
    %v646 = vunpack.c.2.s8 %v358
    %v647 = vunpack.c.3.s8 %v351
    %v648 = vunpack.c.3.s8 %v352
    %v649 = vunpack.c.3.s8 %v353
    %v650 = vunpack.c.3.s8 %v354
    %v651 = vunpack.c.3.s8 %v355
    %v652 = vunpack.c.3.s8 %v356
    %v653 = vunpack.c.3.s8 %v357
    %v654 = vunpack.c.3.s8 %v358
    %v655 = vunpack.c.0.s8 %v359
    %v656 = vunpack.c.0.s8 %v360
    %v657 = vunpack.c.0.s8 %v361
    %v658 = vunpack.c.0.s8 %v362
    %v659 = vunpack.c.0.s8 %v363
    %v660 = vunpack.c.0.s8 %v364
    %v661 = vunpack.c.0.s8 %v365
    %v662 = vunpack.c.0.s8 %v366
    %v663 = vunpack.c.1.s8 %v359
    %v664 = vunpack.c.1.s8 %v360
    %v665 = vunpack.c.1.s8 %v361
    %v666 = vunpack.c.1.s8 %v362
    %v667 = vunpack.c.1.s8 %v363
    %v668 = vunpack.c.1.s8 %v364
    %v669 = vunpack.c.1.s8 %v365
    %v670 = vunpack.c.1.s8 %v366
    %v671 = vunpack.c.2.s8 %v359
    %v672 = vunpack.c.2.s8 %v360
    %v673 = vunpack.c.2.s8 %v361
    %v674 = vunpack.c.2.s8 %v362
    %v675 = vunpack.c.2.s8 %v363
    %v676 = vunpack.c.2.s8 %v364
    %v677 = vunpack.c.2.s8 %v365
    %v678 = vunpack.c.2.s8 %v366
    %v679 = vunpack.c.3.s8 %v359
    %v680 = vunpack.c.3.s8 %v360
    %v681 = vunpack.c.3.s8 %v361
    %v682 = vunpack.c.3.s8 %v362
    %v683 = vunpack.c.3.s8 %v363
    %v684 = vunpack.c.3.s8 %v364
    %v685 = vunpack.c.3.s8 %v365
    %v686 = vunpack.c.3.s8 %v366
    %v687 = vunpack.c.0.s8 %v367
    %v688 = vunpack.c.0.s8 %v368
    %v689 = vunpack.c.0.s8 %v369
    %v690 = vunpack.c.0.s8 %v370
    %v691 = vunpack.c.0.s8 %v371
    %v692 = vunpack.c.0.s8 %v372
    %v693 = vunpack.c.0.s8 %v373
    %v694 = vunpack.c.0.s8 %v374
    %v695 = vunpack.c.1.s8 %v367
    %v696 = vunpack.c.1.s8 %v368
    %v697 = vunpack.c.1.s8 %v369
    %v698 = vunpack.c.1.s8 %v370
    %v699 = vunpack.c.1.s8 %v371
    %v700 = vunpack.c.1.s8 %v372
    %v701 = vunpack.c.1.s8 %v373
    %v702 = vunpack.c.1.s8 %v374
    %v703 = vunpack.c.2.s8 %v367
    %v704 = vunpack.c.2.s8 %v368
    %v705 = vunpack.c.2.s8 %v369
    %v706 = vunpack.c.2.s8 %v370
    %v707 = vunpack.c.2.s8 %v371
    %v708 = vunpack.c.2.s8 %v372
    %v709 = vunpack.c.2.s8 %v373
    %v710 = vunpack.c.2.s8 %v374
    %v711 = vunpack.c.3.s8 %v367
    %v712 = vunpack.c.3.s8 %v368
    %v713 = vunpack.c.3.s8 %v369
    %v714 = vunpack.c.3.s8 %v370
    %v715 = vunpack.c.3.s8 %v371
    %v716 = vunpack.c.3.s8 %v372
    %v717 = vunpack.c.3.s8 %v373
    %v718 = vunpack.c.3.s8 %v374
    %v719 = vunpack.c.0.s8 %v375
    %v720 = vunpack.c.0.s8 %v376
    %v721 = vunpack.c.0.s8 %v377
    %v722 = vunpack.c.0.s8 %v378
    %v723 = vunpack.c.0.s8 %v379
    %v724 = vunpack.c.0.s8 %v380
    %v725 = vunpack.c.0.s8 %v381
    %v726 = vunpack.c.0.s8 %v382
    %v727 = vunpack.c.1.s8 %v375
    %v728 = vunpack.c.1.s8 %v376
    %v729 = vunpack.c.1.s8 %v377
    %v730 = vunpack.c.1.s8 %v378
    %v731 = vunpack.c.1.s8 %v379
    %v732 = vunpack.c.1.s8 %v380
    %v733 = vunpack.c.1.s8 %v381
    %v734 = vunpack.c.1.s8 %v382
    %v735 = vunpack.c.2.s8 %v375
    %v736 = vunpack.c.2.s8 %v376
    %v737 = vunpack.c.2.s8 %v377
    %v738 = vunpack.c.2.s8 %v378
    %v739 = vunpack.c.2.s8 %v379
    %v740 = vunpack.c.2.s8 %v380
    %v741 = vunpack.c.2.s8 %v381
    %v742 = vunpack.c.2.s8 %v382
    %v743 = vunpack.c.3.s8 %v375
    %v744 = vunpack.c.3.s8 %v376
    %v745 = vunpack.c.3.s8 %v377
    %v746 = vunpack.c.3.s8 %v378
    %v747 = vunpack.c.3.s8 %v379
    %v748 = vunpack.c.3.s8 %v380
    %v749 = vunpack.c.3.s8 %v381
    %v750 = vunpack.c.3.s8 %v382
    %v751 = vunpack.c.0.s8 %v383
    %v752 = vunpack.c.0.s8 %v384
    %v753 = vunpack.c.0.s8 %v385
    %v754 = vunpack.c.0.s8 %v386
    %v755 = vunpack.c.0.s8 %v387
    %v756 = vunpack.c.0.s8 %v388
    %v757 = vunpack.c.0.s8 %v389
    %v758 = vunpack.c.0.s8 %v390
    %v759 = vunpack.c.1.s8 %v383
    %v760 = vunpack.c.1.s8 %v384
    %v761 = vunpack.c.1.s8 %v385
    %v762 = vunpack.c.1.s8 %v386
    %v763 = vunpack.c.1.s8 %v387
    %v764 = vunpack.c.1.s8 %v388
    %v765 = vunpack.c.1.s8 %v389
    %v766 = vunpack.c.1.s8 %v390
    %v767 = vunpack.c.2.s8 %v383
    %v768 = vunpack.c.2.s8 %v384
    %v769 = vunpack.c.2.s8 %v385
    %v770 = vunpack.c.2.s8 %v386
    %v771 = vunpack.c.2.s8 %v387
    %v772 = vunpack.c.2.s8 %v388
    %v773 = vunpack.c.2.s8 %v389
    %v774 = vunpack.c.2.s8 %v390
    %v775 = vunpack.c.3.s8 %v383
    %v776 = vunpack.c.3.s8 %v384
    %v777 = vunpack.c.3.s8 %v385
    %v778 = vunpack.c.3.s8 %v386
    %v779 = vunpack.c.3.s8 %v387
    %v780 = vunpack.c.3.s8 %v388
    %v781 = vunpack.c.3.s8 %v389
    %v782 = vunpack.c.3.s8 %v390
    %v783 = vunpack.c.0.s8 %v391
    %v784 = vunpack.c.0.s8 %v392
    %v785 = vunpack.c.0.s8 %v393
    %v786 = vunpack.c.0.s8 %v394
    %v787 = vunpack.c.0.s8 %v395
    %v788 = vunpack.c.0.s8 %v396
    %v789 = vunpack.c.0.s8 %v397
    %v790 = vunpack.c.0.s8 %v398
    %v791 = vunpack.c.1.s8 %v391
    %v792 = vunpack.c.1.s8 %v392
    %v793 = vunpack.c.1.s8 %v393
    %v794 = vunpack.c.1.s8 %v394
    %v795 = vunpack.c.1.s8 %v395
    %v796 = vunpack.c.1.s8 %v396
    %v797 = vunpack.c.1.s8 %v397
    %v798 = vunpack.c.1.s8 %v398
    %v799 = vunpack.c.2.s8 %v391
    %v800 = vunpack.c.2.s8 %v392
    %v801 = vunpack.c.2.s8 %v393
    %v802 = vunpack.c.2.s8 %v394
    %v803 = vunpack.c.2.s8 %v395
    %v804 = vunpack.c.2.s8 %v396
    %v805 = vunpack.c.2.s8 %v397
    %v806 = vunpack.c.2.s8 %v398
    %v807 = vunpack.c.3.s8 %v391
    %v808 = vunpack.c.3.s8 %v392
    %v809 = vunpack.c.3.s8 %v393
    %v810 = vunpack.c.3.s8 %v394
    %v811 = vunpack.c.3.s8 %v395
    %v812 = vunpack.c.3.s8 %v396
    %v813 = vunpack.c.3.s8 %v397
    %v814 = vunpack.c.3.s8 %v398
    %v815 = vunpack.c.0.s8 %v399
    %v816 = vunpack.c.0.s8 %v400
    %v817 = vunpack.c.0.s8 %v401
    %v818 = vunpack.c.0.s8 %v402
    %v819 = vunpack.c.0.s8 %v403
    %v820 = vunpack.c.0.s8 %v404
    %v821 = vunpack.c.0.s8 %v405
    %v822 = vunpack.c.0.s8 %v406
    %v823 = vunpack.c.1.s8 %v399
    %v824 = vunpack.c.1.s8 %v400
    %v825 = vunpack.c.1.s8 %v401
    %v826 = vunpack.c.1.s8 %v402
    %v827 = vunpack.c.1.s8 %v403
    %v828 = vunpack.c.1.s8 %v404
    %v829 = vunpack.c.1.s8 %v405
    %v830 = vunpack.c.1.s8 %v406
    %v831 = vunpack.c.2.s8 %v399
    %v832 = vunpack.c.2.s8 %v400
    %v833 = vunpack.c.2.s8 %v401
    %v834 = vunpack.c.2.s8 %v402
    %v835 = vunpack.c.2.s8 %v403
    %v836 = vunpack.c.2.s8 %v404
    %v837 = vunpack.c.2.s8 %v405
    %v838 = vunpack.c.2.s8 %v406
    %v839 = vunpack.c.3.s8 %v399
    %v840 = vunpack.c.3.s8 %v400
    %v841 = vunpack.c.3.s8 %v401
    %v842 = vunpack.c.3.s8 %v402
    %v843 = vunpack.c.3.s8 %v403
    %v844 = vunpack.c.3.s8 %v404
    %v845 = vunpack.c.3.s8 %v405
    %v846 = vunpack.c.3.s8 %v406
    %v847 = vunpack.c.0.s8 %v407
    %v848 = vunpack.c.0.s8 %v408
    %v849 = vunpack.c.0.s8 %v409
    %v850 = vunpack.c.0.s8 %v410
    %v851 = vunpack.c.0.s8 %v411
    %v852 = vunpack.c.0.s8 %v412
    %v853 = vunpack.c.0.s8 %v413
    %v854 = vunpack.c.0.s8 %v414
    %v855 = vunpack.c.1.s8 %v407
    %v856 = vunpack.c.1.s8 %v408
    %v857 = vunpack.c.1.s8 %v409
    %v858 = vunpack.c.1.s8 %v410
    %v859 = vunpack.c.1.s8 %v411
    %v860 = vunpack.c.1.s8 %v412
    %v861 = vunpack.c.1.s8 %v413
    %v862 = vunpack.c.1.s8 %v414
    %v863 = vunpack.c.2.s8 %v407
    %v864 = vunpack.c.2.s8 %v408
    %v865 = vunpack.c.2.s8 %v409
    %v866 = vunpack.c.2.s8 %v410
    %v867 = vunpack.c.2.s8 %v411
    %v868 = vunpack.c.2.s8 %v412
    %v869 = vunpack.c.2.s8 %v413
    %v870 = vunpack.c.2.s8 %v414
    %v871 = vunpack.c.3.s8 %v407
    %v872 = vunpack.c.3.s8 %v408
    %v873 = vunpack.c.3.s8 %v409
    %v874 = vunpack.c.3.s8 %v410
    %v875 = vunpack.c.3.s8 %v411
    %v876 = vunpack.c.3.s8 %v412
    %v877 = vunpack.c.3.s8 %v413
    %v878 = vunpack.c.3.s8 %v414
    %v879 = vunpack.c.0.s8 %v415
    %v880 = vunpack.c.0.s8 %v416
    %v881 = vunpack.c.0.s8 %v417
    %v882 = vunpack.c.0.s8 %v418
    %v883 = vunpack.c.0.s8 %v419
    %v884 = vunpack.c.0.s8 %v420
    %v885 = vunpack.c.0.s8 %v421
    %v886 = vunpack.c.0.s8 %v422
    %v887 = vunpack.c.1.s8 %v415
    %v888 = vunpack.c.1.s8 %v416
    %v889 = vunpack.c.1.s8 %v417
    %v890 = vunpack.c.1.s8 %v418
    %v891 = vunpack.c.1.s8 %v419
    %v892 = vunpack.c.1.s8 %v420
    %v893 = vunpack.c.1.s8 %v421
    %v894 = vunpack.c.1.s8 %v422
    %v895 = vunpack.c.2.s8 %v415
    %v896 = vunpack.c.2.s8 %v416
    %v897 = vunpack.c.2.s8 %v417
    %v898 = vunpack.c.2.s8 %v418
    %v899 = vunpack.c.2.s8 %v419
    %v900 = vunpack.c.2.s8 %v420
    %v901 = vunpack.c.2.s8 %v421
    %v902 = vunpack.c.2.s8 %v422
    %v903 = vunpack.c.3.s8 %v415
    %v904 = vunpack.c.3.s8 %v416
    %v905 = vunpack.c.3.s8 %v417
    %v906 = vunpack.c.3.s8 %v418
    %v907 = vunpack.c.3.s8 %v419
    %v908 = vunpack.c.3.s8 %v420
    %v909 = vunpack.c.3.s8 %v421
    %v910 = vunpack.c.3.s8 %v422
    %v911 = vunpack.c.0.s8 %v423
    %v912 = vunpack.c.0.s8 %v424
    %v913 = vunpack.c.0.s8 %v425
    %v914 = vunpack.c.0.s8 %v426
    %v915 = vunpack.c.0.s8 %v427
    %v916 = vunpack.c.0.s8 %v428
    %v917 = vunpack.c.0.s8 %v429
    %v918 = vunpack.c.0.s8 %v430
    %v919 = vunpack.c.1.s8 %v423
    %v920 = vunpack.c.1.s8 %v424
    %v921 = vunpack.c.1.s8 %v425
    %v922 = vunpack.c.1.s8 %v426
    %v923 = vunpack.c.1.s8 %v427
    %v924 = vunpack.c.1.s8 %v428
    %v925 = vunpack.c.1.s8 %v429
    %v926 = vunpack.c.1.s8 %v430
    %v927 = vunpack.c.2.s8 %v423
    %v928 = vunpack.c.2.s8 %v424
    %v929 = vunpack.c.2.s8 %v425
    %v930 = vunpack.c.2.s8 %v426
    %v931 = vunpack.c.2.s8 %v427
    %v932 = vunpack.c.2.s8 %v428
    %v933 = vunpack.c.2.s8 %v429
    %v934 = vunpack.c.2.s8 %v430
    %v935 = vunpack.c.3.s8 %v423
    %v936 = vunpack.c.3.s8 %v424
    %v937 = vunpack.c.3.s8 %v425
    %v938 = vunpack.c.3.s8 %v426
    %v939 = vunpack.c.3.s8 %v427
    %v940 = vunpack.c.3.s8 %v428
    %v941 = vunpack.c.3.s8 %v429
    %v942 = vunpack.c.3.s8 %v430
    %v943 = vcvt.s32.f32 %v431
    %v944 = vcvt.s32.f32 %v432
    %v945 = vcvt.s32.f32 %v433
    %v946 = vcvt.s32.f32 %v434
    %v947 = vcvt.s32.f32 %v435
    %v948 = vcvt.s32.f32 %v436
    %v949 = vcvt.s32.f32 %v437
    %v950 = vcvt.s32.f32 %v438
    %v951 = vcvt.s32.f32 %v439
    %v952 = vcvt.s32.f32 %v440
    %v953 = vcvt.s32.f32 %v441
    %v954 = vcvt.s32.f32 %v442
    %v955 = vcvt.s32.f32 %v443
    %v956 = vcvt.s32.f32 %v444
    %v957 = vcvt.s32.f32 %v445
    %v958 = vcvt.s32.f32 %v446
    %v959 = vcvt.s32.f32 %v447
    %v960 = vcvt.s32.f32 %v448
    %v961 = vcvt.s32.f32 %v449
    %v962 = vcvt.s32.f32 %v450
    %v963 = vcvt.s32.f32 %v451
    %v964 = vcvt.s32.f32 %v452
    %v965 = vcvt.s32.f32 %v453
    %v966 = vcvt.s32.f32 %v454
    %v967 = vcvt.s32.f32 %v455
    %v968 = vcvt.s32.f32 %v456
    %v969 = vcvt.s32.f32 %v457
    %v970 = vcvt.s32.f32 %v458
    %v971 = vcvt.s32.f32 %v459
    %v972 = vcvt.s32.f32 %v460
    %v973 = vcvt.s32.f32 %v461
    %v974 = vcvt.s32.f32 %v462
    %v975 = vcvt.s32.f32 %v463
    %v976 = vcvt.s32.f32 %v464
    %v977 = vcvt.s32.f32 %v465
    %v978 = vcvt.s32.f32 %v466
    %v979 = vcvt.s32.f32 %v467
    %v980 = vcvt.s32.f32 %v468
    %v981 = vcvt.s32.f32 %v469
    %v982 = vcvt.s32.f32 %v470
    %v983 = vcvt.s32.f32 %v471
    %v984 = vcvt.s32.f32 %v472
    %v985 = vcvt.s32.f32 %v473
    %v986 = vcvt.s32.f32 %v474
    %v987 = vcvt.s32.f32 %v475
    %v988 = vcvt.s32.f32 %v476
    %v989 = vcvt.s32.f32 %v477
    %v990 = vcvt.s32.f32 %v478
    %v991 = vcvt.s32.f32 %v479
    %v992 = vcvt.s32.f32 %v480
    %v993 = vcvt.s32.f32 %v481
    %v994 = vcvt.s32.f32 %v482
    %v995 = vcvt.s32.f32 %v483
    %v996 = vcvt.s32.f32 %v484
    %v997 = vcvt.s32.f32 %v485
    %v998 = vcvt.s32.f32 %v486
    %v999 = vcvt.s32.f32 %v487
    %v1000 = vcvt.s32.f32 %v488
    %v1001 = vcvt.s32.f32 %v489
    %v1002 = vcvt.s32.f32 %v490
    %v1003 = vcvt.s32.f32 %v491
    %v1004 = vcvt.s32.f32 %v492
    %v1005 = vcvt.s32.f32 %v493
    %v1006 = vcvt.s32.f32 %v494
    %v1007 = vcvt.s32.f32 %v495
    %v1008 = vcvt.s32.f32 %v496
    %v1009 = vcvt.s32.f32 %v497
    %v1010 = vcvt.s32.f32 %v498
    %v1011 = vcvt.s32.f32 %v499
    %v1012 = vcvt.s32.f32 %v500
    %v1013 = vcvt.s32.f32 %v501
    %v1014 = vcvt.s32.f32 %v502
    %v1015 = vcvt.s32.f32 %v503
    %v1016 = vcvt.s32.f32 %v504
    %v1017 = vcvt.s32.f32 %v505
    %v1018 = vcvt.s32.f32 %v506
    %v1019 = vcvt.s32.f32 %v507
    %v1020 = vcvt.s32.f32 %v508
    %v1021 = vcvt.s32.f32 %v509
    %v1022 = vcvt.s32.f32 %v510
    %v1023 = vcvt.s32.f32 %v511
    %v1024 = vcvt.s32.f32 %v512
    %v1025 = vcvt.s32.f32 %v513
    %v1026 = vcvt.s32.f32 %v514
    %v1027 = vcvt.s32.f32 %v515
    %v1028 = vcvt.s32.f32 %v516
    %v1029 = vcvt.s32.f32 %v517
    %v1030 = vcvt.s32.f32 %v518
    %v1031 = vcvt.s32.f32 %v519
    %v1032 = vcvt.s32.f32 %v520
    %v1033 = vcvt.s32.f32 %v521
    %v1034 = vcvt.s32.f32 %v522
    %v1035 = vcvt.s32.f32 %v523
    %v1036 = vcvt.s32.f32 %v524
    %v1037 = vcvt.s32.f32 %v525
    %v1038 = vcvt.s32.f32 %v526
    %v1039 = vcvt.s32.f32 %v527
    %v1040 = vcvt.s32.f32 %v528
    %v1041 = vcvt.s32.f32 %v529
    %v1042 = vcvt.s32.f32 %v530
    %v1043 = vcvt.s32.f32 %v531
    %v1044 = vcvt.s32.f32 %v532
    %v1045 = vcvt.s32.f32 %v533
    %v1046 = vcvt.s32.f32 %v534
    %v1047 = vcvt.s32.f32 %v535
    %v1048 = vcvt.s32.f32 %v536
    %v1049 = vcvt.s32.f32 %v537
    %v1050 = vcvt.s32.f32 %v538
    %v1051 = vcvt.s32.f32 %v539
    %v1052 = vcvt.s32.f32 %v540
    %v1053 = vcvt.s32.f32 %v541
    %v1054 = vcvt.s32.f32 %v542
    %v1055 = vcvt.s32.f32 %v543
    %v1056 = vcvt.s32.f32 %v544
    %v1057 = vcvt.s32.f32 %v545
    %v1058 = vcvt.s32.f32 %v546
    %v1059 = vcvt.s32.f32 %v547
    %v1060 = vcvt.s32.f32 %v548
    %v1061 = vcvt.s32.f32 %v549
    %v1062 = vcvt.s32.f32 %v550
    %v1063 = vcvt.s32.f32 %v551
    %v1064 = vcvt.s32.f32 %v552
    %v1065 = vcvt.s32.f32 %v553
    %v1066 = vcvt.s32.f32 %v554
    %v1067 = vcvt.s32.f32 %v555
    %v1068 = vcvt.s32.f32 %v556
    %v1069 = vcvt.s32.f32 %v557
    %v1070 = vcvt.s32.f32 %v558
    %v1071 = vcvt.s32.f32 %v559
    %v1072 = vcvt.s32.f32 %v560
    %v1073 = vcvt.s32.f32 %v561
    %v1074 = vcvt.s32.f32 %v562
    %v1075 = vcvt.s32.f32 %v563
    %v1076 = vcvt.s32.f32 %v564
    %v1077 = vcvt.s32.f32 %v565
    %v1078 = vcvt.s32.f32 %v566
    %v1079 = vcvt.s32.f32 %v567
    %v1080 = vcvt.s32.f32 %v568
    %v1081 = vcvt.s32.f32 %v569
    %v1082 = vcvt.s32.f32 %v570
    %v1083 = vcvt.s32.f32 %v571
    %v1084 = vcvt.s32.f32 %v572
    %v1085 = vcvt.s32.f32 %v573
    %v1086 = vcvt.s32.f32 %v574
    %v1087 = vcvt.s32.f32 %v575
    %v1088 = vcvt.s32.f32 %v576
    %v1089 = vcvt.s32.f32 %v577
    %v1090 = vcvt.s32.f32 %v578
    %v1091 = vcvt.s32.f32 %v579
    %v1092 = vcvt.s32.f32 %v580
    %v1093 = vcvt.s32.f32 %v581
    %v1094 = vcvt.s32.f32 %v582
    %v1095 = vcvt.s32.f32 %v583
    %v1096 = vcvt.s32.f32 %v584
    %v1097 = vcvt.s32.f32 %v585
    %v1098 = vcvt.s32.f32 %v586
    %v1099 = vcvt.s32.f32 %v587
    %v1100 = vcvt.s32.f32 %v588
    %v1101 = vcvt.s32.f32 %v589
    %v1102 = vcvt.s32.f32 %v590
    %v1103 = vcvt.s32.f32 %v591
    %v1104 = vcvt.s32.f32 %v592
    %v1105 = vcvt.s32.f32 %v593
    %v1106 = vcvt.s32.f32 %v594
    %v1107 = vcvt.s32.f32 %v595
    %v1108 = vcvt.s32.f32 %v596
    %v1109 = vcvt.s32.f32 %v597
    %v1110 = vcvt.s32.f32 %v598
    %v1111 = vcvt.s32.f32 %v599
    %v1112 = vcvt.s32.f32 %v600
    %v1113 = vcvt.s32.f32 %v601
    %v1114 = vcvt.s32.f32 %v602
    %v1115 = vcvt.s32.f32 %v603
    %v1116 = vcvt.s32.f32 %v604
    %v1117 = vcvt.s32.f32 %v605
    %v1118 = vcvt.s32.f32 %v606
    %v1119 = vcvt.s32.f32 %v607
    %v1120 = vcvt.s32.f32 %v608
    %v1121 = vcvt.s32.f32 %v609
    %v1122 = vcvt.s32.f32 %v610
    %v1123 = vcvt.s32.f32 %v611
    %v1124 = vcvt.s32.f32 %v612
    %v1125 = vcvt.s32.f32 %v613
    %v1126 = vcvt.s32.f32 %v614
    %v1127 = vcvt.s32.f32 %v615
    %v1128 = vcvt.s32.f32 %v616
    %v1129 = vcvt.s32.f32 %v617
    %v1130 = vcvt.s32.f32 %v618
    %v1131 = vcvt.s32.f32 %v619
    %v1132 = vcvt.s32.f32 %v620
    %v1133 = vcvt.s32.f32 %v621
    %v1134 = vcvt.s32.f32 %v622
    %v1135 = vcvt.s32.f32 %v623
    %v1136 = vcvt.s32.f32 %v624
    %v1137 = vcvt.s32.f32 %v625
    %v1138 = vcvt.s32.f32 %v626
    %v1139 = vcvt.s32.f32 %v627
    %v1140 = vcvt.s32.f32 %v628
    %v1141 = vcvt.s32.f32 %v629
    %v1142 = vcvt.s32.f32 %v630
    %v1143 = vcvt.s32.f32 %v631
    %v1144 = vcvt.s32.f32 %v632
    %v1145 = vcvt.s32.f32 %v633
    %v1146 = vcvt.s32.f32 %v634
    %v1147 = vcvt.s32.f32 %v635
    %v1148 = vcvt.s32.f32 %v636
    %v1149 = vcvt.s32.f32 %v637
    %v1150 = vcvt.s32.f32 %v638
    %v1151 = vcvt.s32.f32 %v639
    %v1152 = vcvt.s32.f32 %v640
    %v1153 = vcvt.s32.f32 %v641
    %v1154 = vcvt.s32.f32 %v642
    %v1155 = vcvt.s32.f32 %v643
    %v1156 = vcvt.s32.f32 %v644
    %v1157 = vcvt.s32.f32 %v645
    %v1158 = vcvt.s32.f32 %v646
    %v1159 = vcvt.s32.f32 %v647
    %v1160 = vcvt.s32.f32 %v648
    %v1161 = vcvt.s32.f32 %v649
    %v1162 = vcvt.s32.f32 %v650
    %v1163 = vcvt.s32.f32 %v651
    %v1164 = vcvt.s32.f32 %v652
    %v1165 = vcvt.s32.f32 %v653
    %v1166 = vcvt.s32.f32 %v654
    %v1167 = vcvt.s32.f32 %v655
    %v1168 = vcvt.s32.f32 %v656
    %v1169 = vcvt.s32.f32 %v657
    %v1170 = vcvt.s32.f32 %v658
    %v1171 = vcvt.s32.f32 %v659
    %v1172 = vcvt.s32.f32 %v660
    %v1173 = vcvt.s32.f32 %v661
    %v1174 = vcvt.s32.f32 %v662
    %v1175 = vcvt.s32.f32 %v663
    %v1176 = vcvt.s32.f32 %v664
    %v1177 = vcvt.s32.f32 %v665
    %v1178 = vcvt.s32.f32 %v666
    %v1179 = vcvt.s32.f32 %v667
    %v1180 = vcvt.s32.f32 %v668
    %v1181 = vcvt.s32.f32 %v669
    %v1182 = vcvt.s32.f32 %v670
    %v1183 = vcvt.s32.f32 %v671
    %v1184 = vcvt.s32.f32 %v672
    %v1185 = vcvt.s32.f32 %v673
    %v1186 = vcvt.s32.f32 %v674
    %v1187 = vcvt.s32.f32 %v675
    %v1188 = vcvt.s32.f32 %v676
    %v1189 = vcvt.s32.f32 %v677
    %v1190 = vcvt.s32.f32 %v678
    %v1191 = vcvt.s32.f32 %v679
    %v1192 = vcvt.s32.f32 %v680
    %v1193 = vcvt.s32.f32 %v681
    %v1194 = vcvt.s32.f32 %v682
    %v1195 = vcvt.s32.f32 %v683
    %v1196 = vcvt.s32.f32 %v684
    %v1197 = vcvt.s32.f32 %v685
    %v1198 = vcvt.s32.f32 %v686
    %v1199 = vcvt.s32.f32 %v687
    %v1200 = vcvt.s32.f32 %v688
    %v1201 = vcvt.s32.f32 %v689
    %v1202 = vcvt.s32.f32 %v690
    %v1203 = vcvt.s32.f32 %v691
    %v1204 = vcvt.s32.f32 %v692
    %v1205 = vcvt.s32.f32 %v693
    %v1206 = vcvt.s32.f32 %v694
    %v1207 = vcvt.s32.f32 %v695
    %v1208 = vcvt.s32.f32 %v696
    %v1209 = vcvt.s32.f32 %v697
    %v1210 = vcvt.s32.f32 %v698
    %v1211 = vcvt.s32.f32 %v699
    %v1212 = vcvt.s32.f32 %v700
    %v1213 = vcvt.s32.f32 %v701
    %v1214 = vcvt.s32.f32 %v702
    %v1215 = vcvt.s32.f32 %v703
    %v1216 = vcvt.s32.f32 %v704
    %v1217 = vcvt.s32.f32 %v705
    %v1218 = vcvt.s32.f32 %v706
    %v1219 = vcvt.s32.f32 %v707
    %v1220 = vcvt.s32.f32 %v708
    %v1221 = vcvt.s32.f32 %v709
    %v1222 = vcvt.s32.f32 %v710
    %v1223 = vcvt.s32.f32 %v711
    %v1224 = vcvt.s32.f32 %v712
    %v1225 = vcvt.s32.f32 %v713
    %v1226 = vcvt.s32.f32 %v714
    %v1227 = vcvt.s32.f32 %v715
    %v1228 = vcvt.s32.f32 %v716
    %v1229 = vcvt.s32.f32 %v717
    %v1230 = vcvt.s32.f32 %v718
    %v1231 = vcvt.s32.f32 %v719
    %v1232 = vcvt.s32.f32 %v720
    %v1233 = vcvt.s32.f32 %v721
    %v1234 = vcvt.s32.f32 %v722
    %v1235 = vcvt.s32.f32 %v723
    %v1236 = vcvt.s32.f32 %v724
    %v1237 = vcvt.s32.f32 %v725
    %v1238 = vcvt.s32.f32 %v726
    %v1239 = vcvt.s32.f32 %v727
    %v1240 = vcvt.s32.f32 %v728
    %v1241 = vcvt.s32.f32 %v729
    %v1242 = vcvt.s32.f32 %v730
    %v1243 = vcvt.s32.f32 %v731
    %v1244 = vcvt.s32.f32 %v732
    %v1245 = vcvt.s32.f32 %v733
    %v1246 = vcvt.s32.f32 %v734
    %v1247 = vcvt.s32.f32 %v735
    %v1248 = vcvt.s32.f32 %v736
    %v1249 = vcvt.s32.f32 %v737
    %v1250 = vcvt.s32.f32 %v738
    %v1251 = vcvt.s32.f32 %v739
    %v1252 = vcvt.s32.f32 %v740
    %v1253 = vcvt.s32.f32 %v741
    %v1254 = vcvt.s32.f32 %v742
    %v1255 = vcvt.s32.f32 %v743
    %v1256 = vcvt.s32.f32 %v744
    %v1257 = vcvt.s32.f32 %v745
    %v1258 = vcvt.s32.f32 %v746
    %v1259 = vcvt.s32.f32 %v747
    %v1260 = vcvt.s32.f32 %v748
    %v1261 = vcvt.s32.f32 %v749
    %v1262 = vcvt.s32.f32 %v750
    %v1263 = vcvt.s32.f32 %v751
    %v1264 = vcvt.s32.f32 %v752
    %v1265 = vcvt.s32.f32 %v753
    %v1266 = vcvt.s32.f32 %v754
    %v1267 = vcvt.s32.f32 %v755
    %v1268 = vcvt.s32.f32 %v756
    %v1269 = vcvt.s32.f32 %v757
    %v1270 = vcvt.s32.f32 %v758
    %v1271 = vcvt.s32.f32 %v759
    %v1272 = vcvt.s32.f32 %v760
    %v1273 = vcvt.s32.f32 %v761
    %v1274 = vcvt.s32.f32 %v762
    %v1275 = vcvt.s32.f32 %v763
    %v1276 = vcvt.s32.f32 %v764
    %v1277 = vcvt.s32.f32 %v765
    %v1278 = vcvt.s32.f32 %v766
    %v1279 = vcvt.s32.f32 %v767
    %v1280 = vcvt.s32.f32 %v768
    %v1281 = vcvt.s32.f32 %v769
    %v1282 = vcvt.s32.f32 %v770
    %v1283 = vcvt.s32.f32 %v771
    %v1284 = vcvt.s32.f32 %v772
    %v1285 = vcvt.s32.f32 %v773
    %v1286 = vcvt.s32.f32 %v774
    %v1287 = vcvt.s32.f32 %v775
    %v1288 = vcvt.s32.f32 %v776
    %v1289 = vcvt.s32.f32 %v777
    %v1290 = vcvt.s32.f32 %v778
    %v1291 = vcvt.s32.f32 %v779
    %v1292 = vcvt.s32.f32 %v780
    %v1293 = vcvt.s32.f32 %v781
    %v1294 = vcvt.s32.f32 %v782
    %v1295 = vcvt.s32.f32 %v783
    %v1296 = vcvt.s32.f32 %v784
    %v1297 = vcvt.s32.f32 %v785
    %v1298 = vcvt.s32.f32 %v786
    %v1299 = vcvt.s32.f32 %v787
    %v1300 = vcvt.s32.f32 %v788
    %v1301 = vcvt.s32.f32 %v789
    %v1302 = vcvt.s32.f32 %v790
    %v1303 = vcvt.s32.f32 %v791
    %v1304 = vcvt.s32.f32 %v792
    %v1305 = vcvt.s32.f32 %v793
    %v1306 = vcvt.s32.f32 %v794
    %v1307 = vcvt.s32.f32 %v795
    %v1308 = vcvt.s32.f32 %v796
    %v1309 = vcvt.s32.f32 %v797
    %v1310 = vcvt.s32.f32 %v798
    %v1311 = vcvt.s32.f32 %v799
    %v1312 = vcvt.s32.f32 %v800
    %v1313 = vcvt.s32.f32 %v801
    %v1314 = vcvt.s32.f32 %v802
    %v1315 = vcvt.s32.f32 %v803
    %v1316 = vcvt.s32.f32 %v804
    %v1317 = vcvt.s32.f32 %v805
    %v1318 = vcvt.s32.f32 %v806
    %v1319 = vcvt.s32.f32 %v807
    %v1320 = vcvt.s32.f32 %v808
    %v1321 = vcvt.s32.f32 %v809
    %v1322 = vcvt.s32.f32 %v810
    %v1323 = vcvt.s32.f32 %v811
    %v1324 = vcvt.s32.f32 %v812
    %v1325 = vcvt.s32.f32 %v813
    %v1326 = vcvt.s32.f32 %v814
    %v1327 = vcvt.s32.f32 %v815
    %v1328 = vcvt.s32.f32 %v816
    %v1329 = vcvt.s32.f32 %v817
    %v1330 = vcvt.s32.f32 %v818
    %v1331 = vcvt.s32.f32 %v819
    %v1332 = vcvt.s32.f32 %v820
    %v1333 = vcvt.s32.f32 %v821
    %v1334 = vcvt.s32.f32 %v822
    %v1335 = vcvt.s32.f32 %v823
    %v1336 = vcvt.s32.f32 %v824
    %v1337 = vcvt.s32.f32 %v825
    %v1338 = vcvt.s32.f32 %v826
    %v1339 = vcvt.s32.f32 %v827
    %v1340 = vcvt.s32.f32 %v828
    %v1341 = vcvt.s32.f32 %v829
    %v1342 = vcvt.s32.f32 %v830
    %v1343 = vcvt.s32.f32 %v831
    %v1344 = vcvt.s32.f32 %v832
    %v1345 = vcvt.s32.f32 %v833
    %v1346 = vcvt.s32.f32 %v834
    %v1347 = vcvt.s32.f32 %v835
    %v1348 = vcvt.s32.f32 %v836
    %v1349 = vcvt.s32.f32 %v837
    %v1350 = vcvt.s32.f32 %v838
    %v1351 = vcvt.s32.f32 %v839
    %v1352 = vcvt.s32.f32 %v840
    %v1353 = vcvt.s32.f32 %v841
    %v1354 = vcvt.s32.f32 %v842
    %v1355 = vcvt.s32.f32 %v843
    %v1356 = vcvt.s32.f32 %v844
    %v1357 = vcvt.s32.f32 %v845
    %v1358 = vcvt.s32.f32 %v846
    %v1359 = vcvt.s32.f32 %v847
    %v1360 = vcvt.s32.f32 %v848
    %v1361 = vcvt.s32.f32 %v849
    %v1362 = vcvt.s32.f32 %v850
    %v1363 = vcvt.s32.f32 %v851
    %v1364 = vcvt.s32.f32 %v852
    %v1365 = vcvt.s32.f32 %v853
    %v1366 = vcvt.s32.f32 %v854
    %v1367 = vcvt.s32.f32 %v855
    %v1368 = vcvt.s32.f32 %v856
    %v1369 = vcvt.s32.f32 %v857
    %v1370 = vcvt.s32.f32 %v858
    %v1371 = vcvt.s32.f32 %v859
    %v1372 = vcvt.s32.f32 %v860
    %v1373 = vcvt.s32.f32 %v861
    %v1374 = vcvt.s32.f32 %v862
    %v1375 = vcvt.s32.f32 %v863
    %v1376 = vcvt.s32.f32 %v864
    %v1377 = vcvt.s32.f32 %v865
    %v1378 = vcvt.s32.f32 %v866
    %v1379 = vcvt.s32.f32 %v867
    %v1380 = vcvt.s32.f32 %v868
    %v1381 = vcvt.s32.f32 %v869
    %v1382 = vcvt.s32.f32 %v870
    %v1383 = vcvt.s32.f32 %v871
    %v1384 = vcvt.s32.f32 %v872
    %v1385 = vcvt.s32.f32 %v873
    %v1386 = vcvt.s32.f32 %v874
    %v1387 = vcvt.s32.f32 %v875
    %v1388 = vcvt.s32.f32 %v876
    %v1389 = vcvt.s32.f32 %v877
    %v1390 = vcvt.s32.f32 %v878
    %v1391 = vcvt.s32.f32 %v879
    %v1392 = vcvt.s32.f32 %v880
    %v1393 = vcvt.s32.f32 %v881
    %v1394 = vcvt.s32.f32 %v882
    %v1395 = vcvt.s32.f32 %v883
    %v1396 = vcvt.s32.f32 %v884
    %v1397 = vcvt.s32.f32 %v885
    %v1398 = vcvt.s32.f32 %v886
    %v1399 = vcvt.s32.f32 %v887
    %v1400 = vcvt.s32.f32 %v888
    %v1401 = vcvt.s32.f32 %v889
    %v1402 = vcvt.s32.f32 %v890
    %v1403 = vcvt.s32.f32 %v891
    %v1404 = vcvt.s32.f32 %v892
    %v1405 = vcvt.s32.f32 %v893
    %v1406 = vcvt.s32.f32 %v894
    %v1407 = vcvt.s32.f32 %v895
    %v1408 = vcvt.s32.f32 %v896
    %v1409 = vcvt.s32.f32 %v897
    %v1410 = vcvt.s32.f32 %v898
    %v1411 = vcvt.s32.f32 %v899
    %v1412 = vcvt.s32.f32 %v900
    %v1413 = vcvt.s32.f32 %v901
    %v1414 = vcvt.s32.f32 %v902
    %v1415 = vcvt.s32.f32 %v903
    %v1416 = vcvt.s32.f32 %v904
    %v1417 = vcvt.s32.f32 %v905
    %v1418 = vcvt.s32.f32 %v906
    %v1419 = vcvt.s32.f32 %v907
    %v1420 = vcvt.s32.f32 %v908
    %v1421 = vcvt.s32.f32 %v909
    %v1422 = vcvt.s32.f32 %v910
    %v1423 = vcvt.s32.f32 %v911
    %v1424 = vcvt.s32.f32 %v912
    %v1425 = vcvt.s32.f32 %v913
    %v1426 = vcvt.s32.f32 %v914
    %v1427 = vcvt.s32.f32 %v915
    %v1428 = vcvt.s32.f32 %v916
    %v1429 = vcvt.s32.f32 %v917
    %v1430 = vcvt.s32.f32 %v918
    %v1431 = vcvt.s32.f32 %v919
    %v1432 = vcvt.s32.f32 %v920
    %v1433 = vcvt.s32.f32 %v921
    %v1434 = vcvt.s32.f32 %v922
    %v1435 = vcvt.s32.f32 %v923
    %v1436 = vcvt.s32.f32 %v924
    %v1437 = vcvt.s32.f32 %v925
    %v1438 = vcvt.s32.f32 %v926
    %v1439 = vcvt.s32.f32 %v927
    %v1440 = vcvt.s32.f32 %v928
    %v1441 = vcvt.s32.f32 %v929
    %v1442 = vcvt.s32.f32 %v930
    %v1443 = vcvt.s32.f32 %v931
    %v1444 = vcvt.s32.f32 %v932
    %v1445 = vcvt.s32.f32 %v933
    %v1446 = vcvt.s32.f32 %v934
    %v1447 = vcvt.s32.f32 %v935
    %v1448 = vcvt.s32.f32 %v936
    %v1449 = vcvt.s32.f32 %v937
    %v1450 = vcvt.s32.f32 %v938
    %v1451 = vcvt.s32.f32 %v939
    %v1452 = vcvt.s32.f32 %v940
    %v1453 = vcvt.s32.f32 %v941
    %v1454 = vcvt.s32.f32 %v942
    %v1455 = vpack.c.bf16 %v951, %v943
    %v1456 = vpack.c.bf16 %v952, %v944
    %v1457 = vpack.c.bf16 %v953, %v945
    %v1458 = vpack.c.bf16 %v954, %v946
    %v1459 = vpack.c.bf16 %v955, %v947
    %v1460 = vpack.c.bf16 %v956, %v948
    %v1461 = vpack.c.bf16 %v957, %v949
    %v1462 = vpack.c.bf16 %v958, %v950
    %v1463 = vpack.c.bf16 %v967, %v959
    %v1464 = vpack.c.bf16 %v968, %v960
    %v1465 = vpack.c.bf16 %v969, %v961
    %v1466 = vpack.c.bf16 %v970, %v962
    %v1467 = vpack.c.bf16 %v971, %v963
    %v1468 = vpack.c.bf16 %v972, %v964
    %v1469 = vpack.c.bf16 %v973, %v965
    %v1470 = vpack.c.bf16 %v974, %v966
    %v1471 = vpack.c.bf16 %v983, %v975
    %v1472 = vpack.c.bf16 %v984, %v976
    %v1473 = vpack.c.bf16 %v985, %v977
    %v1474 = vpack.c.bf16 %v986, %v978
    %v1475 = vpack.c.bf16 %v987, %v979
    %v1476 = vpack.c.bf16 %v988, %v980
    %v1477 = vpack.c.bf16 %v989, %v981
    %v1478 = vpack.c.bf16 %v990, %v982
    %v1479 = vpack.c.bf16 %v999, %v991
    %v1480 = vpack.c.bf16 %v1000, %v992
    %v1481 = vpack.c.bf16 %v1001, %v993
    %v1482 = vpack.c.bf16 %v1002, %v994
    %v1483 = vpack.c.bf16 %v1003, %v995
    %v1484 = vpack.c.bf16 %v1004, %v996
    %v1485 = vpack.c.bf16 %v1005, %v997
    %v1486 = vpack.c.bf16 %v1006, %v998
    %v1487 = vpack.c.bf16 %v1015, %v1007
    %v1488 = vpack.c.bf16 %v1016, %v1008
    %v1489 = vpack.c.bf16 %v1017, %v1009
    %v1490 = vpack.c.bf16 %v1018, %v1010
    %v1491 = vpack.c.bf16 %v1019, %v1011
    %v1492 = vpack.c.bf16 %v1020, %v1012
    %v1493 = vpack.c.bf16 %v1021, %v1013
    %v1494 = vpack.c.bf16 %v1022, %v1014
    %v1495 = vpack.c.bf16 %v1031, %v1023
    %v1496 = vpack.c.bf16 %v1032, %v1024
    %v1497 = vpack.c.bf16 %v1033, %v1025
    %v1498 = vpack.c.bf16 %v1034, %v1026
    %v1499 = vpack.c.bf16 %v1035, %v1027
    %v1500 = vpack.c.bf16 %v1036, %v1028
    %v1501 = vpack.c.bf16 %v1037, %v1029
    %v1502 = vpack.c.bf16 %v1038, %v1030
    %v1503 = vpack.c.bf16 %v1047, %v1039
    %v1504 = vpack.c.bf16 %v1048, %v1040
    %v1505 = vpack.c.bf16 %v1049, %v1041
    %v1506 = vpack.c.bf16 %v1050, %v1042
    %v1507 = vpack.c.bf16 %v1051, %v1043
    %v1508 = vpack.c.bf16 %v1052, %v1044
    %v1509 = vpack.c.bf16 %v1053, %v1045
    %v1510 = vpack.c.bf16 %v1054, %v1046
    %v1511 = vpack.c.bf16 %v1063, %v1055
    %v1512 = vpack.c.bf16 %v1064, %v1056
    %v1513 = vpack.c.bf16 %v1065, %v1057
    %v1514 = vpack.c.bf16 %v1066, %v1058
    %v1515 = vpack.c.bf16 %v1067, %v1059
    %v1516 = vpack.c.bf16 %v1068, %v1060
    %v1517 = vpack.c.bf16 %v1069, %v1061
    %v1518 = vpack.c.bf16 %v1070, %v1062
    %v1519 = vpack.c.bf16 %v1079, %v1071
    %v1520 = vpack.c.bf16 %v1080, %v1072
    %v1521 = vpack.c.bf16 %v1081, %v1073
    %v1522 = vpack.c.bf16 %v1082, %v1074
    %v1523 = vpack.c.bf16 %v1083, %v1075
    %v1524 = vpack.c.bf16 %v1084, %v1076
    %v1525 = vpack.c.bf16 %v1085, %v1077
    %v1526 = vpack.c.bf16 %v1086, %v1078
    %v1527 = vpack.c.bf16 %v1095, %v1087
    %v1528 = vpack.c.bf16 %v1096, %v1088
    %v1529 = vpack.c.bf16 %v1097, %v1089
    %v1530 = vpack.c.bf16 %v1098, %v1090
    %v1531 = vpack.c.bf16 %v1099, %v1091
    %v1532 = vpack.c.bf16 %v1100, %v1092
    %v1533 = vpack.c.bf16 %v1101, %v1093
    %v1534 = vpack.c.bf16 %v1102, %v1094
    %v1535 = vpack.c.bf16 %v1111, %v1103
    %v1536 = vpack.c.bf16 %v1112, %v1104
    %v1537 = vpack.c.bf16 %v1113, %v1105
    %v1538 = vpack.c.bf16 %v1114, %v1106
    %v1539 = vpack.c.bf16 %v1115, %v1107
    %v1540 = vpack.c.bf16 %v1116, %v1108
    %v1541 = vpack.c.bf16 %v1117, %v1109
    %v1542 = vpack.c.bf16 %v1118, %v1110
    %v1543 = vpack.c.bf16 %v1127, %v1119
    %v1544 = vpack.c.bf16 %v1128, %v1120
    %v1545 = vpack.c.bf16 %v1129, %v1121
    %v1546 = vpack.c.bf16 %v1130, %v1122
    %v1547 = vpack.c.bf16 %v1131, %v1123
    %v1548 = vpack.c.bf16 %v1132, %v1124
    %v1549 = vpack.c.bf16 %v1133, %v1125
    %v1550 = vpack.c.bf16 %v1134, %v1126
    %v1551 = vpack.c.bf16 %v1143, %v1135
    %v1552 = vpack.c.bf16 %v1144, %v1136
    %v1553 = vpack.c.bf16 %v1145, %v1137
    %v1554 = vpack.c.bf16 %v1146, %v1138
    %v1555 = vpack.c.bf16 %v1147, %v1139
    %v1556 = vpack.c.bf16 %v1148, %v1140
    %v1557 = vpack.c.bf16 %v1149, %v1141
    %v1558 = vpack.c.bf16 %v1150, %v1142
    %v1559 = vpack.c.bf16 %v1159, %v1151
    %v1560 = vpack.c.bf16 %v1160, %v1152
    %v1561 = vpack.c.bf16 %v1161, %v1153
    %v1562 = vpack.c.bf16 %v1162, %v1154
    %v1563 = vpack.c.bf16 %v1163, %v1155
    %v1564 = vpack.c.bf16 %v1164, %v1156
    %v1565 = vpack.c.bf16 %v1165, %v1157
    %v1566 = vpack.c.bf16 %v1166, %v1158
    %v1567 = vpack.c.bf16 %v1175, %v1167
    %v1568 = vpack.c.bf16 %v1176, %v1168
    %v1569 = vpack.c.bf16 %v1177, %v1169
    %v1570 = vpack.c.bf16 %v1178, %v1170
    %v1571 = vpack.c.bf16 %v1179, %v1171
    %v1572 = vpack.c.bf16 %v1180, %v1172
    %v1573 = vpack.c.bf16 %v1181, %v1173
    %v1574 = vpack.c.bf16 %v1182, %v1174
    %v1575 = vpack.c.bf16 %v1191, %v1183
    %v1576 = vpack.c.bf16 %v1192, %v1184
    %v1577 = vpack.c.bf16 %v1193, %v1185
    %v1578 = vpack.c.bf16 %v1194, %v1186
    %v1579 = vpack.c.bf16 %v1195, %v1187
    %v1580 = vpack.c.bf16 %v1196, %v1188
    %v1581 = vpack.c.bf16 %v1197, %v1189
    %v1582 = vpack.c.bf16 %v1198, %v1190
    %v1583 = vpack.c.bf16 %v1207, %v1199
    %v1584 = vpack.c.bf16 %v1208, %v1200
    %v1585 = vpack.c.bf16 %v1209, %v1201
    %v1586 = vpack.c.bf16 %v1210, %v1202
    %v1587 = vpack.c.bf16 %v1211, %v1203
    %v1588 = vpack.c.bf16 %v1212, %v1204
    %v1589 = vpack.c.bf16 %v1213, %v1205
    %v1590 = vpack.c.bf16 %v1214, %v1206
    %v1591 = vpack.c.bf16 %v1223, %v1215
    %v1592 = vpack.c.bf16 %v1224, %v1216
    %v1593 = vpack.c.bf16 %v1225, %v1217
    %v1594 = vpack.c.bf16 %v1226, %v1218
    %v1595 = vpack.c.bf16 %v1227, %v1219
    %v1596 = vpack.c.bf16 %v1228, %v1220
    %v1597 = vpack.c.bf16 %v1229, %v1221
    %v1598 = vpack.c.bf16 %v1230, %v1222
    %v1599 = vpack.c.bf16 %v1239, %v1231
    %v1600 = vpack.c.bf16 %v1240, %v1232
    %v1601 = vpack.c.bf16 %v1241, %v1233
    %v1602 = vpack.c.bf16 %v1242, %v1234
    %v1603 = vpack.c.bf16 %v1243, %v1235
    %v1604 = vpack.c.bf16 %v1244, %v1236
    %v1605 = vpack.c.bf16 %v1245, %v1237
    %v1606 = vpack.c.bf16 %v1246, %v1238
    %v1607 = vpack.c.bf16 %v1255, %v1247
    %v1608 = vpack.c.bf16 %v1256, %v1248
    %v1609 = vpack.c.bf16 %v1257, %v1249
    %v1610 = vpack.c.bf16 %v1258, %v1250
    %v1611 = vpack.c.bf16 %v1259, %v1251
    %v1612 = vpack.c.bf16 %v1260, %v1252
    %v1613 = vpack.c.bf16 %v1261, %v1253
    %v1614 = vpack.c.bf16 %v1262, %v1254
    %v1615 = vpack.c.bf16 %v1271, %v1263
    %v1616 = vpack.c.bf16 %v1272, %v1264
    %v1617 = vpack.c.bf16 %v1273, %v1265
    %v1618 = vpack.c.bf16 %v1274, %v1266
    %v1619 = vpack.c.bf16 %v1275, %v1267
    %v1620 = vpack.c.bf16 %v1276, %v1268
    %v1621 = vpack.c.bf16 %v1277, %v1269
    %v1622 = vpack.c.bf16 %v1278, %v1270
    %v1623 = vpack.c.bf16 %v1287, %v1279
    %v1624 = vpack.c.bf16 %v1288, %v1280
    %v1625 = vpack.c.bf16 %v1289, %v1281
    %v1626 = vpack.c.bf16 %v1290, %v1282
    %v1627 = vpack.c.bf16 %v1291, %v1283
    %v1628 = vpack.c.bf16 %v1292, %v1284
    %v1629 = vpack.c.bf16 %v1293, %v1285
    %v1630 = vpack.c.bf16 %v1294, %v1286
    %v1631 = vpack.c.bf16 %v1303, %v1295
    %v1632 = vpack.c.bf16 %v1304, %v1296
    %v1633 = vpack.c.bf16 %v1305, %v1297
    %v1634 = vpack.c.bf16 %v1306, %v1298
    %v1635 = vpack.c.bf16 %v1307, %v1299
    %v1636 = vpack.c.bf16 %v1308, %v1300
    %v1637 = vpack.c.bf16 %v1309, %v1301
    %v1638 = vpack.c.bf16 %v1310, %v1302
    %v1639 = vpack.c.bf16 %v1319, %v1311
    %v1640 = vpack.c.bf16 %v1320, %v1312
    %v1641 = vpack.c.bf16 %v1321, %v1313
    %v1642 = vpack.c.bf16 %v1322, %v1314
    %v1643 = vpack.c.bf16 %v1323, %v1315
    %v1644 = vpack.c.bf16 %v1324, %v1316
    %v1645 = vpack.c.bf16 %v1325, %v1317
    %v1646 = vpack.c.bf16 %v1326, %v1318
    %v1647 = vpack.c.bf16 %v1335, %v1327
    %v1648 = vpack.c.bf16 %v1336, %v1328
    %v1649 = vpack.c.bf16 %v1337, %v1329
    %v1650 = vpack.c.bf16 %v1338, %v1330
    %v1651 = vpack.c.bf16 %v1339, %v1331
    %v1652 = vpack.c.bf16 %v1340, %v1332
    %v1653 = vpack.c.bf16 %v1341, %v1333
    %v1654 = vpack.c.bf16 %v1342, %v1334
    %v1655 = vpack.c.bf16 %v1351, %v1343
    %v1656 = vpack.c.bf16 %v1352, %v1344
    %v1657 = vpack.c.bf16 %v1353, %v1345
    %v1658 = vpack.c.bf16 %v1354, %v1346
    %v1659 = vpack.c.bf16 %v1355, %v1347
    %v1660 = vpack.c.bf16 %v1356, %v1348
    %v1661 = vpack.c.bf16 %v1357, %v1349
    %v1662 = vpack.c.bf16 %v1358, %v1350
    %v1663 = vpack.c.bf16 %v1367, %v1359
    %v1664 = vpack.c.bf16 %v1368, %v1360
    %v1665 = vpack.c.bf16 %v1369, %v1361
    %v1666 = vpack.c.bf16 %v1370, %v1362
    %v1667 = vpack.c.bf16 %v1371, %v1363
    %v1668 = vpack.c.bf16 %v1372, %v1364
    %v1669 = vpack.c.bf16 %v1373, %v1365
    %v1670 = vpack.c.bf16 %v1374, %v1366
    %v1671 = vpack.c.bf16 %v1383, %v1375
    %v1672 = vpack.c.bf16 %v1384, %v1376
    %v1673 = vpack.c.bf16 %v1385, %v1377
    %v1674 = vpack.c.bf16 %v1386, %v1378
    %v1675 = vpack.c.bf16 %v1387, %v1379
    %v1676 = vpack.c.bf16 %v1388, %v1380
    %v1677 = vpack.c.bf16 %v1389, %v1381
    %v1678 = vpack.c.bf16 %v1390, %v1382
    %v1679 = vpack.c.bf16 %v1399, %v1391
    %v1680 = vpack.c.bf16 %v1400, %v1392
    %v1681 = vpack.c.bf16 %v1401, %v1393
    %v1682 = vpack.c.bf16 %v1402, %v1394
    %v1683 = vpack.c.bf16 %v1403, %v1395
    %v1684 = vpack.c.bf16 %v1404, %v1396
    %v1685 = vpack.c.bf16 %v1405, %v1397
    %v1686 = vpack.c.bf16 %v1406, %v1398
    %v1687 = vpack.c.bf16 %v1415, %v1407
    %v1688 = vpack.c.bf16 %v1416, %v1408
    %v1689 = vpack.c.bf16 %v1417, %v1409
    %v1690 = vpack.c.bf16 %v1418, %v1410
    %v1691 = vpack.c.bf16 %v1419, %v1411
    %v1692 = vpack.c.bf16 %v1420, %v1412
    %v1693 = vpack.c.bf16 %v1421, %v1413
    %v1694 = vpack.c.bf16 %v1422, %v1414
    %v1695 = vpack.c.bf16 %v1431, %v1423
    %v1696 = vpack.c.bf16 %v1432, %v1424
    %v1697 = vpack.c.bf16 %v1433, %v1425
    %v1698 = vpack.c.bf16 %v1434, %v1426
    %v1699 = vpack.c.bf16 %v1435, %v1427
    %v1700 = vpack.c.bf16 %v1436, %v1428
    %v1701 = vpack.c.bf16 %v1437, %v1429
    %v1702 = vpack.c.bf16 %v1438, %v1430
    %v1703 = vpack.c.bf16 %v1447, %v1439
    %v1704 = vpack.c.bf16 %v1448, %v1440
    %v1705 = vpack.c.bf16 %v1449, %v1441
    %v1706 = vpack.c.bf16 %v1450, %v1442
    %v1707 = vpack.c.bf16 %v1451, %v1443
    %v1708 = vpack.c.bf16 %v1452, %v1444
    %v1709 = vpack.c.bf16 %v1453, %v1445
    %v1710 = vpack.c.bf16 %v1454, %v1446
    %v1711 = vpack.c.bf16 %v299, %v299
    %v1712 = vpack.c.bf16 %v300, %v300
    %v1713 = vpack.c.bf16 %v301, %v301
    %v1714 = vpack.c.bf16 %v302, %v302
    %1715 = vmatpush.bf16.msra.mxu0 %v1511
    %1716 = vmatpush.bf16.msra.mxu0 %v1503
    %1717 = vmatpush.bf16.msra.mxu0 %v1495
    %1718 = vmatpush.bf16.msra.mxu0 %v1487
    %1719 = vmatpush.bf16.msra.mxu0 %v1479
    %1720 = vmatpush.bf16.msra.mxu0 %v1471
    %1721 = vmatpush.bf16.msra.mxu0 %v1463
    %1722 = vmatpush.bf16.msra.mxu0 %v1455
    %1723 = vmatmul.bf16.gmra.mxu0 %v1711
    %v1724 = vpop.f32.mrf.mxu0
    %v1725 = vadd.f32 0.0, %v1724
    %v1726 = vpop.f32.mrf.mxu0
    %1727 = vdwg.mxu0
    %1728 = vmatpush.bf16.msra.mxu0 %v1575
    %1729 = vmatpush.bf16.msra.mxu0 %v1567
    %1730 = vmatpush.bf16.msra.mxu0 %v1559
    %1731 = vmatpush.bf16.msra.mxu0 %v1551
    %1732 = vmatpush.bf16.msra.mxu0 %v1543
    %1733 = vmatpush.bf16.msra.mxu0 %v1535
    %1734 = vmatpush.bf16.msra.mxu0 %v1527
    %1735 = vmatpush.bf16.msra.mxu0 %v1519
    %1736 = vmatmul.bf16.gmra.mxu0 %v1712
    %v1737 = vpop.f32.mrf.mxu0
    %v1738 = vadd.f32 %v1725, %v1737
    %v1739 = vpop.f32.mrf.mxu0
    %1740 = vdwg.mxu0
    %1741 = vmatpush.bf16.msra.mxu0 %v1639
    %1742 = vmatpush.bf16.msra.mxu0 %v1631
    %1743 = vmatpush.bf16.msra.mxu0 %v1623
    %1744 = vmatpush.bf16.msra.mxu0 %v1615
    %1745 = vmatpush.bf16.msra.mxu0 %v1607
    %1746 = vmatpush.bf16.msra.mxu0 %v1599
    %1747 = vmatpush.bf16.msra.mxu0 %v1591
    %1748 = vmatpush.bf16.msra.mxu0 %v1583
    %1749 = vmatmul.bf16.gmra.mxu0 %v1713
    %v1750 = vpop.f32.mrf.mxu0
    %v1751 = vadd.f32 %v1738, %v1750
    %v1752 = vpop.f32.mrf.mxu0
    %1753 = vdwg.mxu0
    %1754 = vmatpush.bf16.msra.mxu0 %v1703
    %1755 = vmatpush.bf16.msra.mxu0 %v1695
    %1756 = vmatpush.bf16.msra.mxu0 %v1687
    %1757 = vmatpush.bf16.msra.mxu0 %v1679
    %1758 = vmatpush.bf16.msra.mxu0 %v1671
    %1759 = vmatpush.bf16.msra.mxu0 %v1663
    %1760 = vmatpush.bf16.msra.mxu0 %v1655
    %1761 = vmatpush.bf16.msra.mxu0 %v1647
    %1762 = vmatmul.bf16.gmra.mxu0 %v1714
    %v1763 = vpop.f32.mrf.mxu0
    %v1764 = vadd.f32 %v1751, %v1763
    %v1765 = vpop.f32.mrf.mxu0
    %1766 = vdwg.mxu0
    %1767 = vmatpush.bf16.msra.mxu0 %v1512
    %1768 = vmatpush.bf16.msra.mxu0 %v1504
    %1769 = vmatpush.bf16.msra.mxu0 %v1496
    %1770 = vmatpush.bf16.msra.mxu0 %v1488
    %1771 = vmatpush.bf16.msra.mxu0 %v1480
    %1772 = vmatpush.bf16.msra.mxu0 %v1472
    %1773 = vmatpush.bf16.msra.mxu0 %v1464
    %1774 = vmatpush.bf16.msra.mxu0 %v1456
    %1775 = vmatmul.bf16.gmra.mxu0 %v1711
    %v1776 = vpop.f32.mrf.mxu0
    %v1777 = vadd.f32 0.0, %v1776
    %v1778 = vpop.f32.mrf.mxu0
    %1779 = vdwg.mxu0
    %1780 = vmatpush.bf16.msra.mxu0 %v1576
    %1781 = vmatpush.bf16.msra.mxu0 %v1568
    %1782 = vmatpush.bf16.msra.mxu0 %v1560
    %1783 = vmatpush.bf16.msra.mxu0 %v1552
    %1784 = vmatpush.bf16.msra.mxu0 %v1544
    %1785 = vmatpush.bf16.msra.mxu0 %v1536
    %1786 = vmatpush.bf16.msra.mxu0 %v1528
    %1787 = vmatpush.bf16.msra.mxu0 %v1520
    %1788 = vmatmul.bf16.gmra.mxu0 %v1712
    %v1789 = vpop.f32.mrf.mxu0
    %v1790 = vadd.f32 %v1777, %v1789
    %v1791 = vpop.f32.mrf.mxu0
    %1792 = vdwg.mxu0
    %1793 = vmatpush.bf16.msra.mxu0 %v1640
    %1794 = vmatpush.bf16.msra.mxu0 %v1632
    %1795 = vmatpush.bf16.msra.mxu0 %v1624
    %1796 = vmatpush.bf16.msra.mxu0 %v1616
    %1797 = vmatpush.bf16.msra.mxu0 %v1608
    %1798 = vmatpush.bf16.msra.mxu0 %v1600
    %1799 = vmatpush.bf16.msra.mxu0 %v1592
    %1800 = vmatpush.bf16.msra.mxu0 %v1584
    %1801 = vmatmul.bf16.gmra.mxu0 %v1713
    %v1802 = vpop.f32.mrf.mxu0
    %v1803 = vadd.f32 %v1790, %v1802
    %v1804 = vpop.f32.mrf.mxu0
    %1805 = vdwg.mxu0
    %1806 = vmatpush.bf16.msra.mxu0 %v1704
    %1807 = vmatpush.bf16.msra.mxu0 %v1696
    %1808 = vmatpush.bf16.msra.mxu0 %v1688
    %1809 = vmatpush.bf16.msra.mxu0 %v1680
    %1810 = vmatpush.bf16.msra.mxu0 %v1672
    %1811 = vmatpush.bf16.msra.mxu0 %v1664
    %1812 = vmatpush.bf16.msra.mxu0 %v1656
    %1813 = vmatpush.bf16.msra.mxu0 %v1648
    %1814 = vmatmul.bf16.gmra.mxu0 %v1714
    %v1815 = vpop.f32.mrf.mxu0
    %v1816 = vadd.f32 %v1803, %v1815
    %v1817 = vpop.f32.mrf.mxu0
    %1818 = vdwg.mxu0
    %1819 = vmatpush.bf16.msra.mxu0 %v1513
    %1820 = vmatpush.bf16.msra.mxu0 %v1505
    %1821 = vmatpush.bf16.msra.mxu0 %v1497
    %1822 = vmatpush.bf16.msra.mxu0 %v1489
    %1823 = vmatpush.bf16.msra.mxu0 %v1481
    %1824 = vmatpush.bf16.msra.mxu0 %v1473
    %1825 = vmatpush.bf16.msra.mxu0 %v1465
    %1826 = vmatpush.bf16.msra.mxu0 %v1457
    %1827 = vmatmul.bf16.gmra.mxu0 %v1711
    %v1828 = vpop.f32.mrf.mxu0
    %v1829 = vadd.f32 0.0, %v1828
    %v1830 = vpop.f32.mrf.mxu0
    %1831 = vdwg.mxu0
    %1832 = vmatpush.bf16.msra.mxu0 %v1577
    %1833 = vmatpush.bf16.msra.mxu0 %v1569
    %1834 = vmatpush.bf16.msra.mxu0 %v1561
    %1835 = vmatpush.bf16.msra.mxu0 %v1553
    %1836 = vmatpush.bf16.msra.mxu0 %v1545
    %1837 = vmatpush.bf16.msra.mxu0 %v1537
    %1838 = vmatpush.bf16.msra.mxu0 %v1529
    %1839 = vmatpush.bf16.msra.mxu0 %v1521
    %1840 = vmatmul.bf16.gmra.mxu0 %v1712
    %v1841 = vpop.f32.mrf.mxu0
    %v1842 = vadd.f32 %v1829, %v1841
    %v1843 = vpop.f32.mrf.mxu0
    %1844 = vdwg.mxu0
    %1845 = vmatpush.bf16.msra.mxu0 %v1641
    %1846 = vmatpush.bf16.msra.mxu0 %v1633
    %1847 = vmatpush.bf16.msra.mxu0 %v1625
    %1848 = vmatpush.bf16.msra.mxu0 %v1617
    %1849 = vmatpush.bf16.msra.mxu0 %v1609
    %1850 = vmatpush.bf16.msra.mxu0 %v1601
    %1851 = vmatpush.bf16.msra.mxu0 %v1593
    %1852 = vmatpush.bf16.msra.mxu0 %v1585
    %1853 = vmatmul.bf16.gmra.mxu0 %v1713
    %v1854 = vpop.f32.mrf.mxu0
    %v1855 = vadd.f32 %v1842, %v1854
    %v1856 = vpop.f32.mrf.mxu0
    %1857 = vdwg.mxu0
    %1858 = vmatpush.bf16.msra.mxu0 %v1705
    %1859 = vmatpush.bf16.msra.mxu0 %v1697
    %1860 = vmatpush.bf16.msra.mxu0 %v1689
    %1861 = vmatpush.bf16.msra.mxu0 %v1681
    %1862 = vmatpush.bf16.msra.mxu0 %v1673
    %1863 = vmatpush.bf16.msra.mxu0 %v1665
    %1864 = vmatpush.bf16.msra.mxu0 %v1657
    %1865 = vmatpush.bf16.msra.mxu0 %v1649
    %1866 = vmatmul.bf16.gmra.mxu0 %v1714
    %v1867 = vpop.f32.mrf.mxu0
    %v1868 = vadd.f32 %v1855, %v1867
    %v1869 = vpop.f32.mrf.mxu0
    %1870 = vdwg.mxu0
    %1871 = vmatpush.bf16.msra.mxu0 %v1514
    %1872 = vmatpush.bf16.msra.mxu0 %v1506
    %1873 = vmatpush.bf16.msra.mxu0 %v1498
    %1874 = vmatpush.bf16.msra.mxu0 %v1490
    %1875 = vmatpush.bf16.msra.mxu0 %v1482
    %1876 = vmatpush.bf16.msra.mxu0 %v1474
    %1877 = vmatpush.bf16.msra.mxu0 %v1466
    %1878 = vmatpush.bf16.msra.mxu0 %v1458
    %1879 = vmatmul.bf16.gmra.mxu0 %v1711
    %v1880 = vpop.f32.mrf.mxu0
    %v1881 = vadd.f32 0.0, %v1880
    %v1882 = vpop.f32.mrf.mxu0
    %1883 = vdwg.mxu0
    %1884 = vmatpush.bf16.msra.mxu0 %v1578
    %1885 = vmatpush.bf16.msra.mxu0 %v1570
    %1886 = vmatpush.bf16.msra.mxu0 %v1562
    %1887 = vmatpush.bf16.msra.mxu0 %v1554
    %1888 = vmatpush.bf16.msra.mxu0 %v1546
    %1889 = vmatpush.bf16.msra.mxu0 %v1538
    %1890 = vmatpush.bf16.msra.mxu0 %v1530
    %1891 = vmatpush.bf16.msra.mxu0 %v1522
    %1892 = vmatmul.bf16.gmra.mxu0 %v1712
    %v1893 = vpop.f32.mrf.mxu0
    %v1894 = vadd.f32 %v1881, %v1893
    %v1895 = vpop.f32.mrf.mxu0
    %1896 = vdwg.mxu0
    %1897 = vmatpush.bf16.msra.mxu0 %v1642
    %1898 = vmatpush.bf16.msra.mxu0 %v1634
    %1899 = vmatpush.bf16.msra.mxu0 %v1626
    %1900 = vmatpush.bf16.msra.mxu0 %v1618
    %1901 = vmatpush.bf16.msra.mxu0 %v1610
    %1902 = vmatpush.bf16.msra.mxu0 %v1602
    %1903 = vmatpush.bf16.msra.mxu0 %v1594
    %1904 = vmatpush.bf16.msra.mxu0 %v1586
    %1905 = vmatmul.bf16.gmra.mxu0 %v1713
    %v1906 = vpop.f32.mrf.mxu0
    %v1907 = vadd.f32 %v1894, %v1906
    %v1908 = vpop.f32.mrf.mxu0
    %1909 = vdwg.mxu0
    %1910 = vmatpush.bf16.msra.mxu0 %v1706
    %1911 = vmatpush.bf16.msra.mxu0 %v1698
    %1912 = vmatpush.bf16.msra.mxu0 %v1690
    %1913 = vmatpush.bf16.msra.mxu0 %v1682
    %1914 = vmatpush.bf16.msra.mxu0 %v1674
    %1915 = vmatpush.bf16.msra.mxu0 %v1666
    %1916 = vmatpush.bf16.msra.mxu0 %v1658
    %1917 = vmatpush.bf16.msra.mxu0 %v1650
    %1918 = vmatmul.bf16.gmra.mxu0 %v1714
    %v1919 = vpop.f32.mrf.mxu0
    %v1920 = vadd.f32 %v1907, %v1919
    %v1921 = vpop.f32.mrf.mxu0
    %1922 = vdwg.mxu0
    %1923 = vmatpush.bf16.msra.mxu0 %v1515
    %1924 = vmatpush.bf16.msra.mxu0 %v1507
    %1925 = vmatpush.bf16.msra.mxu0 %v1499
    %1926 = vmatpush.bf16.msra.mxu0 %v1491
    %1927 = vmatpush.bf16.msra.mxu0 %v1483
    %1928 = vmatpush.bf16.msra.mxu0 %v1475
    %1929 = vmatpush.bf16.msra.mxu0 %v1467
    %1930 = vmatpush.bf16.msra.mxu0 %v1459
    %1931 = vmatmul.bf16.gmra.mxu0 %v1711
    %v1932 = vpop.f32.mrf.mxu0
    %v1933 = vadd.f32 0.0, %v1932
    %v1934 = vpop.f32.mrf.mxu0
    %1935 = vdwg.mxu0
    %1936 = vmatpush.bf16.msra.mxu0 %v1579
    %1937 = vmatpush.bf16.msra.mxu0 %v1571
    %1938 = vmatpush.bf16.msra.mxu0 %v1563
    %1939 = vmatpush.bf16.msra.mxu0 %v1555
    %1940 = vmatpush.bf16.msra.mxu0 %v1547
    %1941 = vmatpush.bf16.msra.mxu0 %v1539
    %1942 = vmatpush.bf16.msra.mxu0 %v1531
    %1943 = vmatpush.bf16.msra.mxu0 %v1523
    %1944 = vmatmul.bf16.gmra.mxu0 %v1712
    %v1945 = vpop.f32.mrf.mxu0
    %v1946 = vadd.f32 %v1933, %v1945
    %v1947 = vpop.f32.mrf.mxu0
    %1948 = vdwg.mxu0
    %1949 = vmatpush.bf16.msra.mxu0 %v1643
    %1950 = vmatpush.bf16.msra.mxu0 %v1635
    %1951 = vmatpush.bf16.msra.mxu0 %v1627
    %1952 = vmatpush.bf16.msra.mxu0 %v1619
    %1953 = vmatpush.bf16.msra.mxu0 %v1611
    %1954 = vmatpush.bf16.msra.mxu0 %v1603
    %1955 = vmatpush.bf16.msra.mxu0 %v1595
    %1956 = vmatpush.bf16.msra.mxu0 %v1587
    %1957 = vmatmul.bf16.gmra.mxu0 %v1713
    %v1958 = vpop.f32.mrf.mxu0
    %v1959 = vadd.f32 %v1946, %v1958
    %v1960 = vpop.f32.mrf.mxu0
    %1961 = vdwg.mxu0
    %1962 = vmatpush.bf16.msra.mxu0 %v1707
    %1963 = vmatpush.bf16.msra.mxu0 %v1699
    %1964 = vmatpush.bf16.msra.mxu0 %v1691
    %1965 = vmatpush.bf16.msra.mxu0 %v1683
    %1966 = vmatpush.bf16.msra.mxu0 %v1675
    %1967 = vmatpush.bf16.msra.mxu0 %v1667
    %1968 = vmatpush.bf16.msra.mxu0 %v1659
    %1969 = vmatpush.bf16.msra.mxu0 %v1651
    %1970 = vmatmul.bf16.gmra.mxu0 %v1714
    %v1971 = vpop.f32.mrf.mxu0
    %v1972 = vadd.f32 %v1959, %v1971
    %v1973 = vpop.f32.mrf.mxu0
    %1974 = vdwg.mxu0
    %1975 = vmatpush.bf16.msra.mxu0 %v1516
    %1976 = vmatpush.bf16.msra.mxu0 %v1508
    %1977 = vmatpush.bf16.msra.mxu0 %v1500
    %1978 = vmatpush.bf16.msra.mxu0 %v1492
    %1979 = vmatpush.bf16.msra.mxu0 %v1484
    %1980 = vmatpush.bf16.msra.mxu0 %v1476
    %1981 = vmatpush.bf16.msra.mxu0 %v1468
    %1982 = vmatpush.bf16.msra.mxu0 %v1460
    %1983 = vmatmul.bf16.gmra.mxu0 %v1711
    %v1984 = vpop.f32.mrf.mxu0
    %v1985 = vadd.f32 0.0, %v1984
    %v1986 = vpop.f32.mrf.mxu0
    %1987 = vdwg.mxu0
    %1988 = vmatpush.bf16.msra.mxu0 %v1580
    %1989 = vmatpush.bf16.msra.mxu0 %v1572
    %1990 = vmatpush.bf16.msra.mxu0 %v1564
    %1991 = vmatpush.bf16.msra.mxu0 %v1556
    %1992 = vmatpush.bf16.msra.mxu0 %v1548
    %1993 = vmatpush.bf16.msra.mxu0 %v1540
    %1994 = vmatpush.bf16.msra.mxu0 %v1532
    %1995 = vmatpush.bf16.msra.mxu0 %v1524
    %1996 = vmatmul.bf16.gmra.mxu0 %v1712
    %v1997 = vpop.f32.mrf.mxu0
    %v1998 = vadd.f32 %v1985, %v1997
    %v1999 = vpop.f32.mrf.mxu0
    %2000 = vdwg.mxu0
    %2001 = vmatpush.bf16.msra.mxu0 %v1644
    %2002 = vmatpush.bf16.msra.mxu0 %v1636
    %2003 = vmatpush.bf16.msra.mxu0 %v1628
    %2004 = vmatpush.bf16.msra.mxu0 %v1620
    %2005 = vmatpush.bf16.msra.mxu0 %v1612
    %2006 = vmatpush.bf16.msra.mxu0 %v1604
    %2007 = vmatpush.bf16.msra.mxu0 %v1596
    %2008 = vmatpush.bf16.msra.mxu0 %v1588
    %2009 = vmatmul.bf16.gmra.mxu0 %v1713
    %v2010 = vpop.f32.mrf.mxu0
    %v2011 = vadd.f32 %v1998, %v2010
    %v2012 = vpop.f32.mrf.mxu0
    %2013 = vdwg.mxu0
    %2014 = vmatpush.bf16.msra.mxu0 %v1708
    %2015 = vmatpush.bf16.msra.mxu0 %v1700
    %2016 = vmatpush.bf16.msra.mxu0 %v1692
    %2017 = vmatpush.bf16.msra.mxu0 %v1684
    %2018 = vmatpush.bf16.msra.mxu0 %v1676
    %2019 = vmatpush.bf16.msra.mxu0 %v1668
    %2020 = vmatpush.bf16.msra.mxu0 %v1660
    %2021 = vmatpush.bf16.msra.mxu0 %v1652
    %2022 = vmatmul.bf16.gmra.mxu0 %v1714
    %v2023 = vpop.f32.mrf.mxu0
    %v2024 = vadd.f32 %v2011, %v2023
    %v2025 = vpop.f32.mrf.mxu0
    %2026 = vdwg.mxu0
    %2027 = vmatpush.bf16.msra.mxu0 %v1517
    %2028 = vmatpush.bf16.msra.mxu0 %v1509
    %2029 = vmatpush.bf16.msra.mxu0 %v1501
    %2030 = vmatpush.bf16.msra.mxu0 %v1493
    %2031 = vmatpush.bf16.msra.mxu0 %v1485
    %2032 = vmatpush.bf16.msra.mxu0 %v1477
    %2033 = vmatpush.bf16.msra.mxu0 %v1469
    %2034 = vmatpush.bf16.msra.mxu0 %v1461
    %2035 = vmatmul.bf16.gmra.mxu0 %v1711
    %v2036 = vpop.f32.mrf.mxu0
    %v2037 = vadd.f32 0.0, %v2036
    %v2038 = vpop.f32.mrf.mxu0
    %2039 = vdwg.mxu0
    %2040 = vmatpush.bf16.msra.mxu0 %v1581
    %2041 = vmatpush.bf16.msra.mxu0 %v1573
    %2042 = vmatpush.bf16.msra.mxu0 %v1565
    %2043 = vmatpush.bf16.msra.mxu0 %v1557
    %2044 = vmatpush.bf16.msra.mxu0 %v1549
    %2045 = vmatpush.bf16.msra.mxu0 %v1541
    %2046 = vmatpush.bf16.msra.mxu0 %v1533
    %2047 = vmatpush.bf16.msra.mxu0 %v1525
    %2048 = vmatmul.bf16.gmra.mxu0 %v1712
    %v2049 = vpop.f32.mrf.mxu0
    %v2050 = vadd.f32 %v2037, %v2049
    %v2051 = vpop.f32.mrf.mxu0
    %2052 = vdwg.mxu0
    %2053 = vmatpush.bf16.msra.mxu0 %v1645
    %2054 = vmatpush.bf16.msra.mxu0 %v1637
    %2055 = vmatpush.bf16.msra.mxu0 %v1629
    %2056 = vmatpush.bf16.msra.mxu0 %v1621
    %2057 = vmatpush.bf16.msra.mxu0 %v1613
    %2058 = vmatpush.bf16.msra.mxu0 %v1605
    %2059 = vmatpush.bf16.msra.mxu0 %v1597
    %2060 = vmatpush.bf16.msra.mxu0 %v1589
    %2061 = vmatmul.bf16.gmra.mxu0 %v1713
    %v2062 = vpop.f32.mrf.mxu0
    %v2063 = vadd.f32 %v2050, %v2062
    %v2064 = vpop.f32.mrf.mxu0
    %2065 = vdwg.mxu0
    %2066 = vmatpush.bf16.msra.mxu0 %v1709
    %2067 = vmatpush.bf16.msra.mxu0 %v1701
    %2068 = vmatpush.bf16.msra.mxu0 %v1693
    %2069 = vmatpush.bf16.msra.mxu0 %v1685
    %2070 = vmatpush.bf16.msra.mxu0 %v1677
    %2071 = vmatpush.bf16.msra.mxu0 %v1669
    %2072 = vmatpush.bf16.msra.mxu0 %v1661
    %2073 = vmatpush.bf16.msra.mxu0 %v1653
    %2074 = vmatmul.bf16.gmra.mxu0 %v1714
    %v2075 = vpop.f32.mrf.mxu0
    %v2076 = vadd.f32 %v2063, %v2075
    %v2077 = vpop.f32.mrf.mxu0
    %2078 = vdwg.mxu0
    %2079 = vmatpush.bf16.msra.mxu0 %v1518
    %2080 = vmatpush.bf16.msra.mxu0 %v1510
    %2081 = vmatpush.bf16.msra.mxu0 %v1502
    %2082 = vmatpush.bf16.msra.mxu0 %v1494
    %2083 = vmatpush.bf16.msra.mxu0 %v1486
    %2084 = vmatpush.bf16.msra.mxu0 %v1478
    %2085 = vmatpush.bf16.msra.mxu0 %v1470
    %2086 = vmatpush.bf16.msra.mxu0 %v1462
    %2087 = vmatmul.bf16.gmra.mxu0 %v1711
    %v2088 = vpop.f32.mrf.mxu0
    %v2089 = vadd.f32 0.0, %v2088
    %v2090 = vpop.f32.mrf.mxu0
    %2091 = vdwg.mxu0
    %2092 = vmatpush.bf16.msra.mxu0 %v1582
    %2093 = vmatpush.bf16.msra.mxu0 %v1574
    %2094 = vmatpush.bf16.msra.mxu0 %v1566
    %2095 = vmatpush.bf16.msra.mxu0 %v1558
    %2096 = vmatpush.bf16.msra.mxu0 %v1550
    %2097 = vmatpush.bf16.msra.mxu0 %v1542
    %2098 = vmatpush.bf16.msra.mxu0 %v1534
    %2099 = vmatpush.bf16.msra.mxu0 %v1526
    %2100 = vmatmul.bf16.gmra.mxu0 %v1712
    %v2101 = vpop.f32.mrf.mxu0
    %v2102 = vadd.f32 %v2089, %v2101
    %v2103 = vpop.f32.mrf.mxu0
    %2104 = vdwg.mxu0
    %2105 = vmatpush.bf16.msra.mxu0 %v1646
    %2106 = vmatpush.bf16.msra.mxu0 %v1638
    %2107 = vmatpush.bf16.msra.mxu0 %v1630
    %2108 = vmatpush.bf16.msra.mxu0 %v1622
    %2109 = vmatpush.bf16.msra.mxu0 %v1614
    %2110 = vmatpush.bf16.msra.mxu0 %v1606
    %2111 = vmatpush.bf16.msra.mxu0 %v1598
    %2112 = vmatpush.bf16.msra.mxu0 %v1590
    %2113 = vmatmul.bf16.gmra.mxu0 %v1713
    %v2114 = vpop.f32.mrf.mxu0
    %v2115 = vadd.f32 %v2102, %v2114
    %v2116 = vpop.f32.mrf.mxu0
    %2117 = vdwg.mxu0
    %2118 = vmatpush.bf16.msra.mxu0 %v1710
    %2119 = vmatpush.bf16.msra.mxu0 %v1702
    %2120 = vmatpush.bf16.msra.mxu0 %v1694
    %2121 = vmatpush.bf16.msra.mxu0 %v1686
    %2122 = vmatpush.bf16.msra.mxu0 %v1678
    %2123 = vmatpush.bf16.msra.mxu0 %v1670
    %2124 = vmatpush.bf16.msra.mxu0 %v1662
    %2125 = vmatpush.bf16.msra.mxu0 %v1654
    %2126 = vmatmul.bf16.gmra.mxu0 %v1714
    %v2127 = vpop.f32.mrf.mxu0
    %v2128 = vadd.f32 %v2115, %v2127
    %v2129 = vpop.f32.mrf.mxu0
    %2130 = vdwg.mxu0
    %s2131 = scalar_lea.vmem [#allocation7], 7
    %v2132 = vld [vmem:[%s2131] ss:$8 sm:$0xf]
    %v2133 = vld [vmem:[%s2131] ss:$8 sm:$0xf0]
    %v2134 = vor.u32 %v2132, %v2133
    %v2136 = vperm.slane %v2134, 0
    %v2137 = vperm.slane %v2134, 1
    %v2138 = vperm.slane %v2134, 2
    %v2139 = vperm.slane %v2134, 3
    %v2140 = vperm.slane %v2134, 4
    %v2141 = vperm.slane %v2134, 5
    %v2142 = vperm.slane %v2134, 6
    %v2143 = vperm.slane %v2134, 7
    %v2152 = vmul.f32 %v1764, %v2136
    %v2153 = vmul.f32 %v1816, %v2137
    %v2154 = vmul.f32 %v1868, %v2138
    %v2155 = vmul.f32 %v1920, %v2139
    %v2156 = vmul.f32 %v1972, %v2140
    %v2157 = vmul.f32 %v2024, %v2141
    %v2158 = vmul.f32 %v2076, %v2142
    %v2159 = vmul.f32 %v2128, %v2143
    %s2160 = scalar_lea.vmem [#allocation7], 4
    %v2161 = vld [vmem:[%s2160] ss:$8 sm:$0xf]
    %v2162 = vld [vmem:[%s2160] ss:$8 sm:$0xf0]
    %v2163 = vor.u32 %v2161, %v2162
    %v2165 = vperm.slane %v2163, 0
    %v2166 = vperm.slane %v2163, 1
    %v2167 = vperm.slane %v2163, 2
    %v2168 = vperm.slane %v2163, 3
    %v2169 = vperm.slane %v2163, 4
    %v2170 = vperm.slane %v2163, 5
    %v2171 = vperm.slane %v2163, 6
    %v2172 = vperm.slane %v2163, 7
    %v2181 = vadd.f32 %v2152, %v2165
    %v2182 = vadd.f32 %v2153, %v2166
    %v2183 = vadd.f32 %v2154, %v2167
    %v2184 = vadd.f32 %v2155, %v2168
    %v2185 = vadd.f32 %v2156, %v2169
    %v2186 = vadd.f32 %v2157, %v2170
    %v2187 = vadd.f32 %v2158, %v2171
    %v2188 = vadd.f32 %v2159, %v2172
    %v2189 = vadd.f32 %v2181, %v2182
    %v2190 = vadd.f32 %v2189, %v2183
    %v2191 = vadd.f32 %v2190, %v2184
    %v2192 = vadd.f32 %v2191, %v2185
    %v2193 = vadd.f32 %v2192, %v2186
    %v2194 = vadd.f32 %v2193, %v2187
    %v2195 = vadd.f32 %v2194, %v2188
    %2196 = vadd.xlane.f32.xlu0 %v2195
    %v2197 = vpop.xlane.xlu0 %2196
    %v2198 = vrcp.pop 1024.0
    %v2199 = vmul.f32 1024.0, %v2198
    %v2200 = vsub.f32 1.0, %v2199
    %v2201 = vmul.f32 %v2198, %v2200
    %v2202 = vadd.f32 %v2198, %v2201
    %vm2203 = vweird.f32 %v2198
    %v2204 = vsel %vm2203, %v2198, %v2202
    %v2205 = vmul.f32 %v2197, %v2204
    %v2206 = vmul.f32 %v2181, %v2181
    %v2207 = vmul.f32 %v2182, %v2182
    %v2208 = vmul.f32 %v2183, %v2183
    %v2209 = vmul.f32 %v2184, %v2184
    %v2210 = vmul.f32 %v2185, %v2185
    %v2211 = vmul.f32 %v2186, %v2186
    %v2212 = vmul.f32 %v2187, %v2187
    %v2213 = vmul.f32 %v2188, %v2188
    %v2214 = vadd.f32 %v2206, %v2207
    %v2215 = vadd.f32 %v2214, %v2208
    %v2216 = vadd.f32 %v2215, %v2209
    %v2217 = vadd.f32 %v2216, %v2210
    %v2218 = vadd.f32 %v2217, %v2211
    %v2219 = vadd.f32 %v2218, %v2212
    %v2220 = vadd.f32 %v2219, %v2213
    %2221 = vadd.xlane.f32.xlu0 %v2220
    %v2222 = vpop.xlane.xlu0 %2221
    %v2223 = vmul.f32 %v2222, %v2204
    %v2224 = vmul.f32 %v2205, %v2205
    %v2225 = vsub.f32 %v2223, %v2224
    %v2226 = vmax.f32 %v2225, 0.0
    %v2227 = vsub.f32 %v2181, %v2205
    %v2228 = vsub.f32 %v2182, %v2205
    %v2229 = vsub.f32 %v2183, %v2205
    %v2230 = vsub.f32 %v2184, %v2205
    %v2231 = vsub.f32 %v2185, %v2205
    %v2232 = vsub.f32 %v2186, %v2205
    %v2233 = vsub.f32 %v2187, %v2205
    %v2234 = vsub.f32 %v2188, %v2205
    %v2235 = vadd.f32 %v2226, 1e-05
    %v2236 = vrsqrt.pop %v2235
    %v2237 = vmul.f32 %v2236, %v2235
    %v2238 = vmul.f32 %v2237, %v2236
    %v2239 = vmul.f32 0.5, %v2238
    %v2240 = vsub.f32 1.5, %v2239
    %v2241 = vmul.f32 %v2236, %v2240
    %vm2242 = vweird.f32 %v2235
    %vm2243 = vweird.f32 %v2236
    %vm2244 = vmor %vm2242, %vm2243
    %v2245 = vsel %vm2244, %v2236, %v2241
    %v2246 = vmul.f32 %v2227, %v2245
    %v2247 = vmul.f32 %v2228, %v2245
    %v2248 = vmul.f32 %v2229, %v2245
    %v2249 = vmul.f32 %v2230, %v2245
    %v2250 = vmul.f32 %v2231, %v2245
    %v2251 = vmul.f32 %v2232, %v2245
    %v2252 = vmul.f32 %v2233, %v2245
    %v2253 = vmul.f32 %v2234, %v2245
    %s2254 = scalar_lea.vmem [#allocation7], 5
    %v2255 = vld [vmem:[%s2254] ss:$8 sm:$0xf]
    %v2256 = vld [vmem:[%s2254] ss:$8 sm:$0xf0]
    %v2257 = vor.u32 %v2255, %v2256
    %v2259 = vperm.slane %v2257, 0
    %v2260 = vperm.slane %v2257, 1
    %v2261 = vperm.slane %v2257, 2
    %v2262 = vperm.slane %v2257, 3
    %v2263 = vperm.slane %v2257, 4
    %v2264 = vperm.slane %v2257, 5
    %v2265 = vperm.slane %v2257, 6
    %v2266 = vperm.slane %v2257, 7
    %v2275 = vmul.f32 %v2246, %v2259
    %v2276 = vmul.f32 %v2247, %v2260
    %v2277 = vmul.f32 %v2248, %v2261
    %v2278 = vmul.f32 %v2249, %v2262
    %v2279 = vmul.f32 %v2250, %v2263
    %v2280 = vmul.f32 %v2251, %v2264
    %v2281 = vmul.f32 %v2252, %v2265
    %v2282 = vmul.f32 %v2253, %v2266
    %s2283 = scalar_lea.vmem [#allocation7], 6
    %v2284 = vld [vmem:[%s2283] ss:$8 sm:$0xf]
    %v2285 = vld [vmem:[%s2283] ss:$8 sm:$0xf0]
    %v2286 = vor.u32 %v2284, %v2285
    %v2288 = vperm.slane %v2286, 0
    %v2289 = vperm.slane %v2286, 1
    %v2290 = vperm.slane %v2286, 2
    %v2291 = vperm.slane %v2286, 3
    %v2292 = vperm.slane %v2286, 4
    %v2293 = vperm.slane %v2286, 5
    %v2294 = vperm.slane %v2286, 6
    %v2295 = vperm.slane %v2286, 7
    %v2304 = vadd.f32 %v2275, %v2288
    %v2305 = vadd.f32 %v2276, %v2289
    %v2306 = vadd.f32 %v2277, %v2290
    %v2307 = vadd.f32 %v2278, %v2291
    %v2308 = vadd.f32 %v2279, %v2292
    %v2309 = vadd.f32 %v2280, %v2293
    %v2310 = vadd.f32 %v2281, %v2294
    %v2311 = vadd.f32 %v2282, %v2295
    %v2312 = vmax.f32 %v2304, 0.0
    %v2313 = vmax.f32 %v2305, 0.0
    %v2314 = vmax.f32 %v2306, 0.0
    %v2315 = vmax.f32 %v2307, 0.0
    %v2316 = vmax.f32 %v2308, 0.0
    %v2317 = vmax.f32 %v2309, 0.0
    %v2318 = vmax.f32 %v2310, 0.0
    %v2319 = vmax.f32 %v2311, 0.0
    %v2320 = vld [vmem:[#allocation4] sm:$0xff]
    %v2321 = vld [vmem:[#allocation4 + $0x8] sm:$0xff]
    %v2322 = vld [vmem:[#allocation4 + $0x10] sm:$0xff]
    %v2323 = vld [vmem:[#allocation4 + $0x18] sm:$0xff]
    %v2324 = vld [vmem:[#allocation4 + $0x20] sm:$0xff]
    %v2325 = vld [vmem:[#allocation4 + $0x28] sm:$0xff]
    %v2326 = vld [vmem:[#allocation4 + $0x30] sm:$0xff]
    %v2327 = vld [vmem:[#allocation4 + $0x38] sm:$0xff]
    %v2328 = vld [vmem:[#allocation4 + $0x40] sm:$0xff]
    %v2329 = vld [vmem:[#allocation4 + $0x48] sm:$0xff]
    %v2330 = vld [vmem:[#allocation4 + $0x50] sm:$0xff]
    %v2331 = vld [vmem:[#allocation4 + $0x58] sm:$0xff]
    %v2332 = vld [vmem:[#allocation4 + $0x60] sm:$0xff]
    %v2333 = vld [vmem:[#allocation4 + $0x68] sm:$0xff]
    %v2334 = vld [vmem:[#allocation4 + $0x70] sm:$0xff]
    %v2335 = vld [vmem:[#allocation4 + $0x78] sm:$0xff]
    %v2336 = vld [vmem:[#allocation4 + $0x80] sm:$0xff]
    %v2337 = vld [vmem:[#allocation4 + $0x88] sm:$0xff]
    %v2338 = vld [vmem:[#allocation4 + $0x90] sm:$0xff]
    %v2339 = vld [vmem:[#allocation4 + $0x98] sm:$0xff]
    %v2340 = vld [vmem:[#allocation4 + $0xa0] sm:$0xff]
    %v2341 = vld [vmem:[#allocation4 + $0xa8] sm:$0xff]
    %v2342 = vld [vmem:[#allocation4 + $0xb0] sm:$0xff]
    %v2343 = vld [vmem:[#allocation4 + $0xb8] sm:$0xff]
    %v2344 = vld [vmem:[#allocation4 + $0xc0] sm:$0xff]
    %v2345 = vld [vmem:[#allocation4 + $0xc8] sm:$0xff]
    %v2346 = vld [vmem:[#allocation4 + $0xd0] sm:$0xff]
    %v2347 = vld [vmem:[#allocation4 + $0xd8] sm:$0xff]
    %v2348 = vld [vmem:[#allocation4 + $0xe0] sm:$0xff]
    %v2349 = vld [vmem:[#allocation4 + $0xe8] sm:$0xff]
    %v2350 = vld [vmem:[#allocation4 + $0xf0] sm:$0xff]
    %v2351 = vld [vmem:[#allocation4 + $0xf8] sm:$0xff]
    %v2352 = vld [vmem:[#allocation4 + $0x100] sm:$0xff]
    %v2353 = vld [vmem:[#allocation4 + $0x108] sm:$0xff]
    %v2354 = vld [vmem:[#allocation4 + $0x110] sm:$0xff]
    %v2355 = vld [vmem:[#allocation4 + $0x118] sm:$0xff]
    %v2356 = vld [vmem:[#allocation4 + $0x120] sm:$0xff]
    %v2357 = vld [vmem:[#allocation4 + $0x128] sm:$0xff]
    %v2358 = vld [vmem:[#allocation4 + $0x130] sm:$0xff]
    %v2359 = vld [vmem:[#allocation4 + $0x138] sm:$0xff]
    %v2360 = vld [vmem:[#allocation4 + $0x140] sm:$0xff]
    %v2361 = vld [vmem:[#allocation4 + $0x148] sm:$0xff]
    %v2362 = vld [vmem:[#allocation4 + $0x150] sm:$0xff]
    %v2363 = vld [vmem:[#allocation4 + $0x158] sm:$0xff]
    %v2364 = vld [vmem:[#allocation4 + $0x160] sm:$0xff]
    %v2365 = vld [vmem:[#allocation4 + $0x168] sm:$0xff]
    %v2366 = vld [vmem:[#allocation4 + $0x170] sm:$0xff]
    %v2367 = vld [vmem:[#allocation4 + $0x178] sm:$0xff]
    %v2368 = vld [vmem:[#allocation4 + $0x180] sm:$0xff]
    %v2369 = vld [vmem:[#allocation4 + $0x188] sm:$0xff]
    %v2370 = vld [vmem:[#allocation4 + $0x190] sm:$0xff]
    %v2371 = vld [vmem:[#allocation4 + $0x198] sm:$0xff]
    %v2372 = vld [vmem:[#allocation4 + $0x1a0] sm:$0xff]
    %v2373 = vld [vmem:[#allocation4 + $0x1a8] sm:$0xff]
    %v2374 = vld [vmem:[#allocation4 + $0x1b0] sm:$0xff]
    %v2375 = vld [vmem:[#allocation4 + $0x1b8] sm:$0xff]
    %v2376 = vld [vmem:[#allocation4 + $0x1c0] sm:$0xff]
    %v2377 = vld [vmem:[#allocation4 + $0x1c8] sm:$0xff]
    %v2378 = vld [vmem:[#allocation4 + $0x1d0] sm:$0xff]
    %v2379 = vld [vmem:[#allocation4 + $0x1d8] sm:$0xff]
    %v2380 = vld [vmem:[#allocation4 + $0x1e0] sm:$0xff]
    %v2381 = vld [vmem:[#allocation4 + $0x1e8] sm:$0xff]
    %v2382 = vld [vmem:[#allocation4 + $0x1f0] sm:$0xff]
    %v2383 = vld [vmem:[#allocation4 + $0x1f8] sm:$0xff]
    %v2384 = vld [vmem:[#allocation4 + $0x200] sm:$0xff]
    %v2385 = vld [vmem:[#allocation4 + $0x208] sm:$0xff]
    %v2386 = vld [vmem:[#allocation4 + $0x210] sm:$0xff]
    %v2387 = vld [vmem:[#allocation4 + $0x218] sm:$0xff]
    %v2388 = vld [vmem:[#allocation4 + $0x220] sm:$0xff]
    %v2389 = vld [vmem:[#allocation4 + $0x228] sm:$0xff]
    %v2390 = vld [vmem:[#allocation4 + $0x230] sm:$0xff]
    %v2391 = vld [vmem:[#allocation4 + $0x238] sm:$0xff]
    %v2392 = vld [vmem:[#allocation4 + $0x240] sm:$0xff]
    %v2393 = vld [vmem:[#allocation4 + $0x248] sm:$0xff]
    %v2394 = vld [vmem:[#allocation4 + $0x250] sm:$0xff]
    %v2395 = vld [vmem:[#allocation4 + $0x258] sm:$0xff]
    %v2396 = vld [vmem:[#allocation4 + $0x260] sm:$0xff]
    %v2397 = vld [vmem:[#allocation4 + $0x268] sm:$0xff]
    %v2398 = vld [vmem:[#allocation4 + $0x270] sm:$0xff]
    %v2399 = vld [vmem:[#allocation4 + $0x278] sm:$0xff]
    %v2400 = vld [vmem:[#allocation4 + $0x280] sm:$0xff]
    %v2401 = vld [vmem:[#allocation4 + $0x288] sm:$0xff]
    %v2402 = vld [vmem:[#allocation4 + $0x290] sm:$0xff]
    %v2403 = vld [vmem:[#allocation4 + $0x298] sm:$0xff]
    %v2404 = vld [vmem:[#allocation4 + $0x2a0] sm:$0xff]
    %v2405 = vld [vmem:[#allocation4 + $0x2a8] sm:$0xff]
    %v2406 = vld [vmem:[#allocation4 + $0x2b0] sm:$0xff]
    %v2407 = vld [vmem:[#allocation4 + $0x2b8] sm:$0xff]
    %v2408 = vld [vmem:[#allocation4 + $0x2c0] sm:$0xff]
    %v2409 = vld [vmem:[#allocation4 + $0x2c8] sm:$0xff]
    %v2410 = vld [vmem:[#allocation4 + $0x2d0] sm:$0xff]
    %v2411 = vld [vmem:[#allocation4 + $0x2d8] sm:$0xff]
    %v2412 = vld [vmem:[#allocation4 + $0x2e0] sm:$0xff]
    %v2413 = vld [vmem:[#allocation4 + $0x2e8] sm:$0xff]
    %v2414 = vld [vmem:[#allocation4 + $0x2f0] sm:$0xff]
    %v2415 = vld [vmem:[#allocation4 + $0x2f8] sm:$0xff]
    %v2416 = vld [vmem:[#allocation4 + $0x300] sm:$0xff]
    %v2417 = vld [vmem:[#allocation4 + $0x308] sm:$0xff]
    %v2418 = vld [vmem:[#allocation4 + $0x310] sm:$0xff]
    %v2419 = vld [vmem:[#allocation4 + $0x318] sm:$0xff]
    %v2420 = vld [vmem:[#allocation4 + $0x320] sm:$0xff]
    %v2421 = vld [vmem:[#allocation4 + $0x328] sm:$0xff]
    %v2422 = vld [vmem:[#allocation4 + $0x330] sm:$0xff]
    %v2423 = vld [vmem:[#allocation4 + $0x338] sm:$0xff]
    %v2424 = vld [vmem:[#allocation4 + $0x340] sm:$0xff]
    %v2425 = vld [vmem:[#allocation4 + $0x348] sm:$0xff]
    %v2426 = vld [vmem:[#allocation4 + $0x350] sm:$0xff]
    %v2427 = vld [vmem:[#allocation4 + $0x358] sm:$0xff]
    %v2428 = vld [vmem:[#allocation4 + $0x360] sm:$0xff]
    %v2429 = vld [vmem:[#allocation4 + $0x368] sm:$0xff]
    %v2430 = vld [vmem:[#allocation4 + $0x370] sm:$0xff]
    %v2431 = vld [vmem:[#allocation4 + $0x378] sm:$0xff]
    %v2432 = vld [vmem:[#allocation4 + $0x380] sm:$0xff]
    %v2433 = vld [vmem:[#allocation4 + $0x388] sm:$0xff]
    %v2434 = vld [vmem:[#allocation4 + $0x390] sm:$0xff]
    %v2435 = vld [vmem:[#allocation4 + $0x398] sm:$0xff]
    %v2436 = vld [vmem:[#allocation4 + $0x3a0] sm:$0xff]
    %v2437 = vld [vmem:[#allocation4 + $0x3a8] sm:$0xff]
    %v2438 = vld [vmem:[#allocation4 + $0x3b0] sm:$0xff]
    %v2439 = vld [vmem:[#allocation4 + $0x3b8] sm:$0xff]
    %v2440 = vld [vmem:[#allocation4 + $0x3c0] sm:$0xff]
    %v2441 = vld [vmem:[#allocation4 + $0x3c8] sm:$0xff]
    %v2442 = vld [vmem:[#allocation4 + $0x3d0] sm:$0xff]
    %v2443 = vld [vmem:[#allocation4 + $0x3d8] sm:$0xff]
    %v2444 = vld [vmem:[#allocation4 + $0x3e0] sm:$0xff]
    %v2445 = vld [vmem:[#allocation4 + $0x3e8] sm:$0xff]
    %v2446 = vld [vmem:[#allocation4 + $0x3f0] sm:$0xff]
    %v2447 = vld [vmem:[#allocation4 + $0x3f8] sm:$0xff]
    %v2448 = vunpack.c.0.s8 %v2320
    %v2449 = vunpack.c.0.s8 %v2321
    %v2450 = vunpack.c.0.s8 %v2322
    %v2451 = vunpack.c.0.s8 %v2323
    %v2452 = vunpack.c.1.s8 %v2320
    %v2453 = vunpack.c.1.s8 %v2321
    %v2454 = vunpack.c.1.s8 %v2322
    %v2455 = vunpack.c.1.s8 %v2323
    %v2456 = vunpack.c.2.s8 %v2320
    %v2457 = vunpack.c.2.s8 %v2321
    %v2458 = vunpack.c.2.s8 %v2322
    %v2459 = vunpack.c.2.s8 %v2323
    %v2460 = vunpack.c.3.s8 %v2320
    %v2461 = vunpack.c.3.s8 %v2321
    %v2462 = vunpack.c.3.s8 %v2322
    %v2463 = vunpack.c.3.s8 %v2323
    %v2464 = vunpack.c.0.s8 %v2324
    %v2465 = vunpack.c.0.s8 %v2325
    %v2466 = vunpack.c.0.s8 %v2326
    %v2467 = vunpack.c.0.s8 %v2327
    %v2468 = vunpack.c.1.s8 %v2324
    %v2469 = vunpack.c.1.s8 %v2325
    %v2470 = vunpack.c.1.s8 %v2326
    %v2471 = vunpack.c.1.s8 %v2327
    %v2472 = vunpack.c.2.s8 %v2324
    %v2473 = vunpack.c.2.s8 %v2325
    %v2474 = vunpack.c.2.s8 %v2326
    %v2475 = vunpack.c.2.s8 %v2327
    %v2476 = vunpack.c.3.s8 %v2324
    %v2477 = vunpack.c.3.s8 %v2325
    %v2478 = vunpack.c.3.s8 %v2326
    %v2479 = vunpack.c.3.s8 %v2327
    %v2480 = vunpack.c.0.s8 %v2328
    %v2481 = vunpack.c.0.s8 %v2329
    %v2482 = vunpack.c.0.s8 %v2330
    %v2483 = vunpack.c.0.s8 %v2331
    %v2484 = vunpack.c.1.s8 %v2328
    %v2485 = vunpack.c.1.s8 %v2329
    %v2486 = vunpack.c.1.s8 %v2330
    %v2487 = vunpack.c.1.s8 %v2331
    %v2488 = vunpack.c.2.s8 %v2328
    %v2489 = vunpack.c.2.s8 %v2329
    %v2490 = vunpack.c.2.s8 %v2330
    %v2491 = vunpack.c.2.s8 %v2331
    %v2492 = vunpack.c.3.s8 %v2328
    %v2493 = vunpack.c.3.s8 %v2329
    %v2494 = vunpack.c.3.s8 %v2330
    %v2495 = vunpack.c.3.s8 %v2331
    %v2496 = vunpack.c.0.s8 %v2332
    %v2497 = vunpack.c.0.s8 %v2333
    %v2498 = vunpack.c.0.s8 %v2334
    %v2499 = vunpack.c.0.s8 %v2335
    %v2500 = vunpack.c.1.s8 %v2332
    %v2501 = vunpack.c.1.s8 %v2333
    %v2502 = vunpack.c.1.s8 %v2334
    %v2503 = vunpack.c.1.s8 %v2335
    %v2504 = vunpack.c.2.s8 %v2332
    %v2505 = vunpack.c.2.s8 %v2333
    %v2506 = vunpack.c.2.s8 %v2334
    %v2507 = vunpack.c.2.s8 %v2335
    %v2508 = vunpack.c.3.s8 %v2332
    %v2509 = vunpack.c.3.s8 %v2333
    %v2510 = vunpack.c.3.s8 %v2334
    %v2511 = vunpack.c.3.s8 %v2335
    %v2512 = vunpack.c.0.s8 %v2336
    %v2513 = vunpack.c.0.s8 %v2337
    %v2514 = vunpack.c.0.s8 %v2338
    %v2515 = vunpack.c.0.s8 %v2339
    %v2516 = vunpack.c.1.s8 %v2336
    %v2517 = vunpack.c.1.s8 %v2337
    %v2518 = vunpack.c.1.s8 %v2338
    %v2519 = vunpack.c.1.s8 %v2339
    %v2520 = vunpack.c.2.s8 %v2336
    %v2521 = vunpack.c.2.s8 %v2337
    %v2522 = vunpack.c.2.s8 %v2338
    %v2523 = vunpack.c.2.s8 %v2339
    %v2524 = vunpack.c.3.s8 %v2336
    %v2525 = vunpack.c.3.s8 %v2337
    %v2526 = vunpack.c.3.s8 %v2338
    %v2527 = vunpack.c.3.s8 %v2339
    %v2528 = vunpack.c.0.s8 %v2340
    %v2529 = vunpack.c.0.s8 %v2341
    %v2530 = vunpack.c.0.s8 %v2342
    %v2531 = vunpack.c.0.s8 %v2343
    %v2532 = vunpack.c.1.s8 %v2340
    %v2533 = vunpack.c.1.s8 %v2341
    %v2534 = vunpack.c.1.s8 %v2342
    %v2535 = vunpack.c.1.s8 %v2343
    %v2536 = vunpack.c.2.s8 %v2340
    %v2537 = vunpack.c.2.s8 %v2341
    %v2538 = vunpack.c.2.s8 %v2342
    %v2539 = vunpack.c.2.s8 %v2343
    %v2540 = vunpack.c.3.s8 %v2340
    %v2541 = vunpack.c.3.s8 %v2341
    %v2542 = vunpack.c.3.s8 %v2342
    %v2543 = vunpack.c.3.s8 %v2343
    %v2544 = vunpack.c.0.s8 %v2344
    %v2545 = vunpack.c.0.s8 %v2345
    %v2546 = vunpack.c.0.s8 %v2346
    %v2547 = vunpack.c.0.s8 %v2347
    %v2548 = vunpack.c.1.s8 %v2344
    %v2549 = vunpack.c.1.s8 %v2345
    %v2550 = vunpack.c.1.s8 %v2346
    %v2551 = vunpack.c.1.s8 %v2347
    %v2552 = vunpack.c.2.s8 %v2344
    %v2553 = vunpack.c.2.s8 %v2345
    %v2554 = vunpack.c.2.s8 %v2346
    %v2555 = vunpack.c.2.s8 %v2347
    %v2556 = vunpack.c.3.s8 %v2344
    %v2557 = vunpack.c.3.s8 %v2345
    %v2558 = vunpack.c.3.s8 %v2346
    %v2559 = vunpack.c.3.s8 %v2347
    %v2560 = vunpack.c.0.s8 %v2348
    %v2561 = vunpack.c.0.s8 %v2349
    %v2562 = vunpack.c.0.s8 %v2350
    %v2563 = vunpack.c.0.s8 %v2351
    %v2564 = vunpack.c.1.s8 %v2348
    %v2565 = vunpack.c.1.s8 %v2349
    %v2566 = vunpack.c.1.s8 %v2350
    %v2567 = vunpack.c.1.s8 %v2351
    %v2568 = vunpack.c.2.s8 %v2348
    %v2569 = vunpack.c.2.s8 %v2349
    %v2570 = vunpack.c.2.s8 %v2350
    %v2571 = vunpack.c.2.s8 %v2351
    %v2572 = vunpack.c.3.s8 %v2348
    %v2573 = vunpack.c.3.s8 %v2349
    %v2574 = vunpack.c.3.s8 %v2350
    %v2575 = vunpack.c.3.s8 %v2351
    %v2576 = vunpack.c.0.s8 %v2352
    %v2577 = vunpack.c.0.s8 %v2353
    %v2578 = vunpack.c.0.s8 %v2354
    %v2579 = vunpack.c.0.s8 %v2355
    %v2580 = vunpack.c.1.s8 %v2352
    %v2581 = vunpack.c.1.s8 %v2353
    %v2582 = vunpack.c.1.s8 %v2354
    %v2583 = vunpack.c.1.s8 %v2355
    %v2584 = vunpack.c.2.s8 %v2352
    %v2585 = vunpack.c.2.s8 %v2353
    %v2586 = vunpack.c.2.s8 %v2354
    %v2587 = vunpack.c.2.s8 %v2355
    %v2588 = vunpack.c.3.s8 %v2352
    %v2589 = vunpack.c.3.s8 %v2353
    %v2590 = vunpack.c.3.s8 %v2354
    %v2591 = vunpack.c.3.s8 %v2355
    %v2592 = vunpack.c.0.s8 %v2356
    %v2593 = vunpack.c.0.s8 %v2357
    %v2594 = vunpack.c.0.s8 %v2358
    %v2595 = vunpack.c.0.s8 %v2359
    %v2596 = vunpack.c.1.s8 %v2356
    %v2597 = vunpack.c.1.s8 %v2357
    %v2598 = vunpack.c.1.s8 %v2358
    %v2599 = vunpack.c.1.s8 %v2359
    %v2600 = vunpack.c.2.s8 %v2356
    %v2601 = vunpack.c.2.s8 %v2357
    %v2602 = vunpack.c.2.s8 %v2358
    %v2603 = vunpack.c.2.s8 %v2359
    %v2604 = vunpack.c.3.s8 %v2356
    %v2605 = vunpack.c.3.s8 %v2357
    %v2606 = vunpack.c.3.s8 %v2358
    %v2607 = vunpack.c.3.s8 %v2359
    %v2608 = vunpack.c.0.s8 %v2360
    %v2609 = vunpack.c.0.s8 %v2361
    %v2610 = vunpack.c.0.s8 %v2362
    %v2611 = vunpack.c.0.s8 %v2363
    %v2612 = vunpack.c.1.s8 %v2360
    %v2613 = vunpack.c.1.s8 %v2361
    %v2614 = vunpack.c.1.s8 %v2362
    %v2615 = vunpack.c.1.s8 %v2363
    %v2616 = vunpack.c.2.s8 %v2360
    %v2617 = vunpack.c.2.s8 %v2361
    %v2618 = vunpack.c.2.s8 %v2362
    %v2619 = vunpack.c.2.s8 %v2363
    %v2620 = vunpack.c.3.s8 %v2360
    %v2621 = vunpack.c.3.s8 %v2361
    %v2622 = vunpack.c.3.s8 %v2362
    %v2623 = vunpack.c.3.s8 %v2363
    %v2624 = vunpack.c.0.s8 %v2364
    %v2625 = vunpack.c.0.s8 %v2365
    %v2626 = vunpack.c.0.s8 %v2366
    %v2627 = vunpack.c.0.s8 %v2367
    %v2628 = vunpack.c.1.s8 %v2364
    %v2629 = vunpack.c.1.s8 %v2365
    %v2630 = vunpack.c.1.s8 %v2366
    %v2631 = vunpack.c.1.s8 %v2367
    %v2632 = vunpack.c.2.s8 %v2364
    %v2633 = vunpack.c.2.s8 %v2365
    %v2634 = vunpack.c.2.s8 %v2366
    %v2635 = vunpack.c.2.s8 %v2367
    %v2636 = vunpack.c.3.s8 %v2364
    %v2637 = vunpack.c.3.s8 %v2365
    %v2638 = vunpack.c.3.s8 %v2366
    %v2639 = vunpack.c.3.s8 %v2367
    %v2640 = vunpack.c.0.s8 %v2368
    %v2641 = vunpack.c.0.s8 %v2369
    %v2642 = vunpack.c.0.s8 %v2370
    %v2643 = vunpack.c.0.s8 %v2371
    %v2644 = vunpack.c.1.s8 %v2368
    %v2645 = vunpack.c.1.s8 %v2369
    %v2646 = vunpack.c.1.s8 %v2370
    %v2647 = vunpack.c.1.s8 %v2371
    %v2648 = vunpack.c.2.s8 %v2368
    %v2649 = vunpack.c.2.s8 %v2369
    %v2650 = vunpack.c.2.s8 %v2370
    %v2651 = vunpack.c.2.s8 %v2371
    %v2652 = vunpack.c.3.s8 %v2368
    %v2653 = vunpack.c.3.s8 %v2369
    %v2654 = vunpack.c.3.s8 %v2370
    %v2655 = vunpack.c.3.s8 %v2371
    %v2656 = vunpack.c.0.s8 %v2372
    %v2657 = vunpack.c.0.s8 %v2373
    %v2658 = vunpack.c.0.s8 %v2374
    %v2659 = vunpack.c.0.s8 %v2375
    %v2660 = vunpack.c.1.s8 %v2372
    %v2661 = vunpack.c.1.s8 %v2373
    %v2662 = vunpack.c.1.s8 %v2374
    %v2663 = vunpack.c.1.s8 %v2375
    %v2664 = vunpack.c.2.s8 %v2372
    %v2665 = vunpack.c.2.s8 %v2373
    %v2666 = vunpack.c.2.s8 %v2374
    %v2667 = vunpack.c.2.s8 %v2375
    %v2668 = vunpack.c.3.s8 %v2372
    %v2669 = vunpack.c.3.s8 %v2373
    %v2670 = vunpack.c.3.s8 %v2374
    %v2671 = vunpack.c.3.s8 %v2375
    %v2672 = vunpack.c.0.s8 %v2376
    %v2673 = vunpack.c.0.s8 %v2377
    %v2674 = vunpack.c.0.s8 %v2378
    %v2675 = vunpack.c.0.s8 %v2379
    %v2676 = vunpack.c.1.s8 %v2376
    %v2677 = vunpack.c.1.s8 %v2377
    %v2678 = vunpack.c.1.s8 %v2378
    %v2679 = vunpack.c.1.s8 %v2379
    %v2680 = vunpack.c.2.s8 %v2376
    %v2681 = vunpack.c.2.s8 %v2377
    %v2682 = vunpack.c.2.s8 %v2378
    %v2683 = vunpack.c.2.s8 %v2379
    %v2684 = vunpack.c.3.s8 %v2376
    %v2685 = vunpack.c.3.s8 %v2377
    %v2686 = vunpack.c.3.s8 %v2378
    %v2687 = vunpack.c.3.s8 %v2379
    %v2688 = vunpack.c.0.s8 %v2380
    %v2689 = vunpack.c.0.s8 %v2381
    %v2690 = vunpack.c.0.s8 %v2382
    %v2691 = vunpack.c.0.s8 %v2383
    %v2692 = vunpack.c.1.s8 %v2380
    %v2693 = vunpack.c.1.s8 %v2381
    %v2694 = vunpack.c.1.s8 %v2382
    %v2695 = vunpack.c.1.s8 %v2383
    %v2696 = vunpack.c.2.s8 %v2380
    %v2697 = vunpack.c.2.s8 %v2381
    %v2698 = vunpack.c.2.s8 %v2382
    %v2699 = vunpack.c.2.s8 %v2383
    %v2700 = vunpack.c.3.s8 %v2380
    %v2701 = vunpack.c.3.s8 %v2381
    %v2702 = vunpack.c.3.s8 %v2382
    %v2703 = vunpack.c.3.s8 %v2383
    %v2704 = vunpack.c.0.s8 %v2384
    %v2705 = vunpack.c.0.s8 %v2385
    %v2706 = vunpack.c.0.s8 %v2386
    %v2707 = vunpack.c.0.s8 %v2387
    %v2708 = vunpack.c.1.s8 %v2384
    %v2709 = vunpack.c.1.s8 %v2385
    %v2710 = vunpack.c.1.s8 %v2386
    %v2711 = vunpack.c.1.s8 %v2387
    %v2712 = vunpack.c.2.s8 %v2384
    %v2713 = vunpack.c.2.s8 %v2385
    %v2714 = vunpack.c.2.s8 %v2386
    %v2715 = vunpack.c.2.s8 %v2387
    %v2716 = vunpack.c.3.s8 %v2384
    %v2717 = vunpack.c.3.s8 %v2385
    %v2718 = vunpack.c.3.s8 %v2386
    %v2719 = vunpack.c.3.s8 %v2387
    %v2720 = vunpack.c.0.s8 %v2388
    %v2721 = vunpack.c.0.s8 %v2389
    %v2722 = vunpack.c.0.s8 %v2390
    %v2723 = vunpack.c.0.s8 %v2391
    %v2724 = vunpack.c.1.s8 %v2388
    %v2725 = vunpack.c.1.s8 %v2389
    %v2726 = vunpack.c.1.s8 %v2390
    %v2727 = vunpack.c.1.s8 %v2391
    %v2728 = vunpack.c.2.s8 %v2388
    %v2729 = vunpack.c.2.s8 %v2389
    %v2730 = vunpack.c.2.s8 %v2390
    %v2731 = vunpack.c.2.s8 %v2391
    %v2732 = vunpack.c.3.s8 %v2388
    %v2733 = vunpack.c.3.s8 %v2389
    %v2734 = vunpack.c.3.s8 %v2390
    %v2735 = vunpack.c.3.s8 %v2391
    %v2736 = vunpack.c.0.s8 %v2392
    %v2737 = vunpack.c.0.s8 %v2393
    %v2738 = vunpack.c.0.s8 %v2394
    %v2739 = vunpack.c.0.s8 %v2395
    %v2740 = vunpack.c.1.s8 %v2392
    %v2741 = vunpack.c.1.s8 %v2393
    %v2742 = vunpack.c.1.s8 %v2394
    %v2743 = vunpack.c.1.s8 %v2395
    %v2744 = vunpack.c.2.s8 %v2392
    %v2745 = vunpack.c.2.s8 %v2393
    %v2746 = vunpack.c.2.s8 %v2394
    %v2747 = vunpack.c.2.s8 %v2395
    %v2748 = vunpack.c.3.s8 %v2392
    %v2749 = vunpack.c.3.s8 %v2393
    %v2750 = vunpack.c.3.s8 %v2394
    %v2751 = vunpack.c.3.s8 %v2395
    %v2752 = vunpack.c.0.s8 %v2396
    %v2753 = vunpack.c.0.s8 %v2397
    %v2754 = vunpack.c.0.s8 %v2398
    %v2755 = vunpack.c.0.s8 %v2399
    %v2756 = vunpack.c.1.s8 %v2396
    %v2757 = vunpack.c.1.s8 %v2397
    %v2758 = vunpack.c.1.s8 %v2398
    %v2759 = vunpack.c.1.s8 %v2399
    %v2760 = vunpack.c.2.s8 %v2396
    %v2761 = vunpack.c.2.s8 %v2397
    %v2762 = vunpack.c.2.s8 %v2398
    %v2763 = vunpack.c.2.s8 %v2399
    %v2764 = vunpack.c.3.s8 %v2396
    %v2765 = vunpack.c.3.s8 %v2397
    %v2766 = vunpack.c.3.s8 %v2398
    %v2767 = vunpack.c.3.s8 %v2399
    %v2768 = vunpack.c.0.s8 %v2400
    %v2769 = vunpack.c.0.s8 %v2401
    %v2770 = vunpack.c.0.s8 %v2402
    %v2771 = vunpack.c.0.s8 %v2403
    %v2772 = vunpack.c.1.s8 %v2400
    %v2773 = vunpack.c.1.s8 %v2401
    %v2774 = vunpack.c.1.s8 %v2402
    %v2775 = vunpack.c.1.s8 %v2403
    %v2776 = vunpack.c.2.s8 %v2400
    %v2777 = vunpack.c.2.s8 %v2401
    %v2778 = vunpack.c.2.s8 %v2402
    %v2779 = vunpack.c.2.s8 %v2403
    %v2780 = vunpack.c.3.s8 %v2400
    %v2781 = vunpack.c.3.s8 %v2401
    %v2782 = vunpack.c.3.s8 %v2402
    %v2783 = vunpack.c.3.s8 %v2403
    %v2784 = vunpack.c.0.s8 %v2404
    %v2785 = vunpack.c.0.s8 %v2405
    %v2786 = vunpack.c.0.s8 %v2406
    %v2787 = vunpack.c.0.s8 %v2407
    %v2788 = vunpack.c.1.s8 %v2404
    %v2789 = vunpack.c.1.s8 %v2405
    %v2790 = vunpack.c.1.s8 %v2406
    %v2791 = vunpack.c.1.s8 %v2407
    %v2792 = vunpack.c.2.s8 %v2404
    %v2793 = vunpack.c.2.s8 %v2405
    %v2794 = vunpack.c.2.s8 %v2406
    %v2795 = vunpack.c.2.s8 %v2407
    %v2796 = vunpack.c.3.s8 %v2404
    %v2797 = vunpack.c.3.s8 %v2405
    %v2798 = vunpack.c.3.s8 %v2406
    %v2799 = vunpack.c.3.s8 %v2407
    %v2800 = vunpack.c.0.s8 %v2408
    %v2801 = vunpack.c.0.s8 %v2409
    %v2802 = vunpack.c.0.s8 %v2410
    %v2803 = vunpack.c.0.s8 %v2411
    %v2804 = vunpack.c.1.s8 %v2408
    %v2805 = vunpack.c.1.s8 %v2409
    %v2806 = vunpack.c.1.s8 %v2410
    %v2807 = vunpack.c.1.s8 %v2411
    %v2808 = vunpack.c.2.s8 %v2408
    %v2809 = vunpack.c.2.s8 %v2409
    %v2810 = vunpack.c.2.s8 %v2410
    %v2811 = vunpack.c.2.s8 %v2411
    %v2812 = vunpack.c.3.s8 %v2408
    %v2813 = vunpack.c.3.s8 %v2409
    %v2814 = vunpack.c.3.s8 %v2410
    %v2815 = vunpack.c.3.s8 %v2411
    %v2816 = vunpack.c.0.s8 %v2412
    %v2817 = vunpack.c.0.s8 %v2413
    %v2818 = vunpack.c.0.s8 %v2414
    %v2819 = vunpack.c.0.s8 %v2415
    %v2820 = vunpack.c.1.s8 %v2412
    %v2821 = vunpack.c.1.s8 %v2413
    %v2822 = vunpack.c.1.s8 %v2414
    %v2823 = vunpack.c.1.s8 %v2415
    %v2824 = vunpack.c.2.s8 %v2412
    %v2825 = vunpack.c.2.s8 %v2413
    %v2826 = vunpack.c.2.s8 %v2414
    %v2827 = vunpack.c.2.s8 %v2415
    %v2828 = vunpack.c.3.s8 %v2412
    %v2829 = vunpack.c.3.s8 %v2413
    %v2830 = vunpack.c.3.s8 %v2414
    %v2831 = vunpack.c.3.s8 %v2415
    %v2832 = vunpack.c.0.s8 %v2416
    %v2833 = vunpack.c.0.s8 %v2417
    %v2834 = vunpack.c.0.s8 %v2418
    %v2835 = vunpack.c.0.s8 %v2419
    %v2836 = vunpack.c.1.s8 %v2416
    %v2837 = vunpack.c.1.s8 %v2417
    %v2838 = vunpack.c.1.s8 %v2418
    %v2839 = vunpack.c.1.s8 %v2419
    %v2840 = vunpack.c.2.s8 %v2416
    %v2841 = vunpack.c.2.s8 %v2417
    %v2842 = vunpack.c.2.s8 %v2418
    %v2843 = vunpack.c.2.s8 %v2419
    %v2844 = vunpack.c.3.s8 %v2416
    %v2845 = vunpack.c.3.s8 %v2417
    %v2846 = vunpack.c.3.s8 %v2418
    %v2847 = vunpack.c.3.s8 %v2419
    %v2848 = vunpack.c.0.s8 %v2420
    %v2849 = vunpack.c.0.s8 %v2421
    %v2850 = vunpack.c.0.s8 %v2422
    %v2851 = vunpack.c.0.s8 %v2423
    %v2852 = vunpack.c.1.s8 %v2420
    %v2853 = vunpack.c.1.s8 %v2421
    %v2854 = vunpack.c.1.s8 %v2422
    %v2855 = vunpack.c.1.s8 %v2423
    %v2856 = vunpack.c.2.s8 %v2420
    %v2857 = vunpack.c.2.s8 %v2421
    %v2858 = vunpack.c.2.s8 %v2422
    %v2859 = vunpack.c.2.s8 %v2423
    %v2860 = vunpack.c.3.s8 %v2420
    %v2861 = vunpack.c.3.s8 %v2421
    %v2862 = vunpack.c.3.s8 %v2422
    %v2863 = vunpack.c.3.s8 %v2423
    %v2864 = vunpack.c.0.s8 %v2424
    %v2865 = vunpack.c.0.s8 %v2425
    %v2866 = vunpack.c.0.s8 %v2426
    %v2867 = vunpack.c.0.s8 %v2427
    %v2868 = vunpack.c.1.s8 %v2424
    %v2869 = vunpack.c.1.s8 %v2425
    %v2870 = vunpack.c.1.s8 %v2426
    %v2871 = vunpack.c.1.s8 %v2427
    %v2872 = vunpack.c.2.s8 %v2424
    %v2873 = vunpack.c.2.s8 %v2425
    %v2874 = vunpack.c.2.s8 %v2426
    %v2875 = vunpack.c.2.s8 %v2427
    %v2876 = vunpack.c.3.s8 %v2424
    %v2877 = vunpack.c.3.s8 %v2425
    %v2878 = vunpack.c.3.s8 %v2426
    %v2879 = vunpack.c.3.s8 %v2427
    %v2880 = vunpack.c.0.s8 %v2428
    %v2881 = vunpack.c.0.s8 %v2429
    %v2882 = vunpack.c.0.s8 %v2430
    %v2883 = vunpack.c.0.s8 %v2431
    %v2884 = vunpack.c.1.s8 %v2428
    %v2885 = vunpack.c.1.s8 %v2429
    %v2886 = vunpack.c.1.s8 %v2430
    %v2887 = vunpack.c.1.s8 %v2431
    %v2888 = vunpack.c.2.s8 %v2428
    %v2889 = vunpack.c.2.s8 %v2429
    %v2890 = vunpack.c.2.s8 %v2430
    %v2891 = vunpack.c.2.s8 %v2431
    %v2892 = vunpack.c.3.s8 %v2428
    %v2893 = vunpack.c.3.s8 %v2429
    %v2894 = vunpack.c.3.s8 %v2430
    %v2895 = vunpack.c.3.s8 %v2431
    %v2896 = vunpack.c.0.s8 %v2432
    %v2897 = vunpack.c.0.s8 %v2433
    %v2898 = vunpack.c.0.s8 %v2434
    %v2899 = vunpack.c.0.s8 %v2435
    %v2900 = vunpack.c.1.s8 %v2432
    %v2901 = vunpack.c.1.s8 %v2433
    %v2902 = vunpack.c.1.s8 %v2434
    %v2903 = vunpack.c.1.s8 %v2435
    %v2904 = vunpack.c.2.s8 %v2432
    %v2905 = vunpack.c.2.s8 %v2433
    %v2906 = vunpack.c.2.s8 %v2434
    %v2907 = vunpack.c.2.s8 %v2435
    %v2908 = vunpack.c.3.s8 %v2432
    %v2909 = vunpack.c.3.s8 %v2433
    %v2910 = vunpack.c.3.s8 %v2434
    %v2911 = vunpack.c.3.s8 %v2435
    %v2912 = vunpack.c.0.s8 %v2436
    %v2913 = vunpack.c.0.s8 %v2437
    %v2914 = vunpack.c.0.s8 %v2438
    %v2915 = vunpack.c.0.s8 %v2439
    %v2916 = vunpack.c.1.s8 %v2436
    %v2917 = vunpack.c.1.s8 %v2437
    %v2918 = vunpack.c.1.s8 %v2438
    %v2919 = vunpack.c.1.s8 %v2439
    %v2920 = vunpack.c.2.s8 %v2436
    %v2921 = vunpack.c.2.s8 %v2437
    %v2922 = vunpack.c.2.s8 %v2438
    %v2923 = vunpack.c.2.s8 %v2439
    %v2924 = vunpack.c.3.s8 %v2436
    %v2925 = vunpack.c.3.s8 %v2437
    %v2926 = vunpack.c.3.s8 %v2438
    %v2927 = vunpack.c.3.s8 %v2439
    %v2928 = vunpack.c.0.s8 %v2440
    %v2929 = vunpack.c.0.s8 %v2441
    %v2930 = vunpack.c.0.s8 %v2442
    %v2931 = vunpack.c.0.s8 %v2443
    %v2932 = vunpack.c.1.s8 %v2440
    %v2933 = vunpack.c.1.s8 %v2441
    %v2934 = vunpack.c.1.s8 %v2442
    %v2935 = vunpack.c.1.s8 %v2443
    %v2936 = vunpack.c.2.s8 %v2440
    %v2937 = vunpack.c.2.s8 %v2441
    %v2938 = vunpack.c.2.s8 %v2442
    %v2939 = vunpack.c.2.s8 %v2443
    %v2940 = vunpack.c.3.s8 %v2440
    %v2941 = vunpack.c.3.s8 %v2441
    %v2942 = vunpack.c.3.s8 %v2442
    %v2943 = vunpack.c.3.s8 %v2443
    %v2944 = vunpack.c.0.s8 %v2444
    %v2945 = vunpack.c.0.s8 %v2445
    %v2946 = vunpack.c.0.s8 %v2446
    %v2947 = vunpack.c.0.s8 %v2447
    %v2948 = vunpack.c.1.s8 %v2444
    %v2949 = vunpack.c.1.s8 %v2445
    %v2950 = vunpack.c.1.s8 %v2446
    %v2951 = vunpack.c.1.s8 %v2447
    %v2952 = vunpack.c.2.s8 %v2444
    %v2953 = vunpack.c.2.s8 %v2445
    %v2954 = vunpack.c.2.s8 %v2446
    %v2955 = vunpack.c.2.s8 %v2447
    %v2956 = vunpack.c.3.s8 %v2444
    %v2957 = vunpack.c.3.s8 %v2445
    %v2958 = vunpack.c.3.s8 %v2446
    %v2959 = vunpack.c.3.s8 %v2447
    %v2960 = vcvt.s32.f32 %v2448
    %v2961 = vcvt.s32.f32 %v2449
    %v2962 = vcvt.s32.f32 %v2450
    %v2963 = vcvt.s32.f32 %v2451
    %v2964 = vcvt.s32.f32 %v2452
    %v2965 = vcvt.s32.f32 %v2453
    %v2966 = vcvt.s32.f32 %v2454
    %v2967 = vcvt.s32.f32 %v2455
    %v2968 = vcvt.s32.f32 %v2456
    %v2969 = vcvt.s32.f32 %v2457
    %v2970 = vcvt.s32.f32 %v2458
    %v2971 = vcvt.s32.f32 %v2459
    %v2972 = vcvt.s32.f32 %v2460
    %v2973 = vcvt.s32.f32 %v2461
    %v2974 = vcvt.s32.f32 %v2462
    %v2975 = vcvt.s32.f32 %v2463
    %v2976 = vcvt.s32.f32 %v2464
    %v2977 = vcvt.s32.f32 %v2465
    %v2978 = vcvt.s32.f32 %v2466
    %v2979 = vcvt.s32.f32 %v2467
    %v2980 = vcvt.s32.f32 %v2468
    %v2981 = vcvt.s32.f32 %v2469
    %v2982 = vcvt.s32.f32 %v2470
    %v2983 = vcvt.s32.f32 %v2471
    %v2984 = vcvt.s32.f32 %v2472
    %v2985 = vcvt.s32.f32 %v2473
    %v2986 = vcvt.s32.f32 %v2474
    %v2987 = vcvt.s32.f32 %v2475
    %v2988 = vcvt.s32.f32 %v2476
    %v2989 = vcvt.s32.f32 %v2477
    %v2990 = vcvt.s32.f32 %v2478
    %v2991 = vcvt.s32.f32 %v2479
    %v2992 = vcvt.s32.f32 %v2480
    %v2993 = vcvt.s32.f32 %v2481
    %v2994 = vcvt.s32.f32 %v2482
    %v2995 = vcvt.s32.f32 %v2483
    %v2996 = vcvt.s32.f32 %v2484
    %v2997 = vcvt.s32.f32 %v2485
    %v2998 = vcvt.s32.f32 %v2486
    %v2999 = vcvt.s32.f32 %v2487
    %v3000 = vcvt.s32.f32 %v2488
    %v3001 = vcvt.s32.f32 %v2489
    %v3002 = vcvt.s32.f32 %v2490
    %v3003 = vcvt.s32.f32 %v2491
    %v3004 = vcvt.s32.f32 %v2492
    %v3005 = vcvt.s32.f32 %v2493
    %v3006 = vcvt.s32.f32 %v2494
    %v3007 = vcvt.s32.f32 %v2495
    %v3008 = vcvt.s32.f32 %v2496
    %v3009 = vcvt.s32.f32 %v2497
    %v3010 = vcvt.s32.f32 %v2498
    %v3011 = vcvt.s32.f32 %v2499
    %v3012 = vcvt.s32.f32 %v2500
    %v3013 = vcvt.s32.f32 %v2501
    %v3014 = vcvt.s32.f32 %v2502
    %v3015 = vcvt.s32.f32 %v2503
    %v3016 = vcvt.s32.f32 %v2504
    %v3017 = vcvt.s32.f32 %v2505
    %v3018 = vcvt.s32.f32 %v2506
    %v3019 = vcvt.s32.f32 %v2507
    %v3020 = vcvt.s32.f32 %v2508
    %v3021 = vcvt.s32.f32 %v2509
    %v3022 = vcvt.s32.f32 %v2510
    %v3023 = vcvt.s32.f32 %v2511
    %v3024 = vcvt.s32.f32 %v2512
    %v3025 = vcvt.s32.f32 %v2513
    %v3026 = vcvt.s32.f32 %v2514
    %v3027 = vcvt.s32.f32 %v2515
    %v3028 = vcvt.s32.f32 %v2516
    %v3029 = vcvt.s32.f32 %v2517
    %v3030 = vcvt.s32.f32 %v2518
    %v3031 = vcvt.s32.f32 %v2519
    %v3032 = vcvt.s32.f32 %v2520
    %v3033 = vcvt.s32.f32 %v2521
    %v3034 = vcvt.s32.f32 %v2522
    %v3035 = vcvt.s32.f32 %v2523
    %v3036 = vcvt.s32.f32 %v2524
    %v3037 = vcvt.s32.f32 %v2525
    %v3038 = vcvt.s32.f32 %v2526
    %v3039 = vcvt.s32.f32 %v2527
    %v3040 = vcvt.s32.f32 %v2528
    %v3041 = vcvt.s32.f32 %v2529
    %v3042 = vcvt.s32.f32 %v2530
    %v3043 = vcvt.s32.f32 %v2531
    %v3044 = vcvt.s32.f32 %v2532
    %v3045 = vcvt.s32.f32 %v2533
    %v3046 = vcvt.s32.f32 %v2534
    %v3047 = vcvt.s32.f32 %v2535
    %v3048 = vcvt.s32.f32 %v2536
    %v3049 = vcvt.s32.f32 %v2537
    %v3050 = vcvt.s32.f32 %v2538
    %v3051 = vcvt.s32.f32 %v2539
    %v3052 = vcvt.s32.f32 %v2540
    %v3053 = vcvt.s32.f32 %v2541
    %v3054 = vcvt.s32.f32 %v2542
    %v3055 = vcvt.s32.f32 %v2543
    %v3056 = vcvt.s32.f32 %v2544
    %v3057 = vcvt.s32.f32 %v2545
    %v3058 = vcvt.s32.f32 %v2546
    %v3059 = vcvt.s32.f32 %v2547
    %v3060 = vcvt.s32.f32 %v2548
    %v3061 = vcvt.s32.f32 %v2549
    %v3062 = vcvt.s32.f32 %v2550
    %v3063 = vcvt.s32.f32 %v2551
    %v3064 = vcvt.s32.f32 %v2552
    %v3065 = vcvt.s32.f32 %v2553
    %v3066 = vcvt.s32.f32 %v2554
    %v3067 = vcvt.s32.f32 %v2555
    %v3068 = vcvt.s32.f32 %v2556
    %v3069 = vcvt.s32.f32 %v2557
    %v3070 = vcvt.s32.f32 %v2558
    %v3071 = vcvt.s32.f32 %v2559
    %v3072 = vcvt.s32.f32 %v2560
    %v3073 = vcvt.s32.f32 %v2561
    %v3074 = vcvt.s32.f32 %v2562
    %v3075 = vcvt.s32.f32 %v2563
    %v3076 = vcvt.s32.f32 %v2564
    %v3077 = vcvt.s32.f32 %v2565
    %v3078 = vcvt.s32.f32 %v2566
    %v3079 = vcvt.s32.f32 %v2567
    %v3080 = vcvt.s32.f32 %v2568
    %v3081 = vcvt.s32.f32 %v2569
    %v3082 = vcvt.s32.f32 %v2570
    %v3083 = vcvt.s32.f32 %v2571
    %v3084 = vcvt.s32.f32 %v2572
    %v3085 = vcvt.s32.f32 %v2573
    %v3086 = vcvt.s32.f32 %v2574
    %v3087 = vcvt.s32.f32 %v2575
    %v3088 = vcvt.s32.f32 %v2576
    %v3089 = vcvt.s32.f32 %v2577
    %v3090 = vcvt.s32.f32 %v2578
    %v3091 = vcvt.s32.f32 %v2579
    %v3092 = vcvt.s32.f32 %v2580
    %v3093 = vcvt.s32.f32 %v2581
    %v3094 = vcvt.s32.f32 %v2582
    %v3095 = vcvt.s32.f32 %v2583
    %v3096 = vcvt.s32.f32 %v2584
    %v3097 = vcvt.s32.f32 %v2585
    %v3098 = vcvt.s32.f32 %v2586
    %v3099 = vcvt.s32.f32 %v2587
    %v3100 = vcvt.s32.f32 %v2588
    %v3101 = vcvt.s32.f32 %v2589
    %v3102 = vcvt.s32.f32 %v2590
    %v3103 = vcvt.s32.f32 %v2591
    %v3104 = vcvt.s32.f32 %v2592
    %v3105 = vcvt.s32.f32 %v2593
    %v3106 = vcvt.s32.f32 %v2594
    %v3107 = vcvt.s32.f32 %v2595
    %v3108 = vcvt.s32.f32 %v2596
    %v3109 = vcvt.s32.f32 %v2597
    %v3110 = vcvt.s32.f32 %v2598
    %v3111 = vcvt.s32.f32 %v2599
    %v3112 = vcvt.s32.f32 %v2600
    %v3113 = vcvt.s32.f32 %v2601
    %v3114 = vcvt.s32.f32 %v2602
    %v3115 = vcvt.s32.f32 %v2603
    %v3116 = vcvt.s32.f32 %v2604
    %v3117 = vcvt.s32.f32 %v2605
    %v3118 = vcvt.s32.f32 %v2606
    %v3119 = vcvt.s32.f32 %v2607
    %v3120 = vcvt.s32.f32 %v2608
    %v3121 = vcvt.s32.f32 %v2609
    %v3122 = vcvt.s32.f32 %v2610
    %v3123 = vcvt.s32.f32 %v2611
    %v3124 = vcvt.s32.f32 %v2612
    %v3125 = vcvt.s32.f32 %v2613
    %v3126 = vcvt.s32.f32 %v2614
    %v3127 = vcvt.s32.f32 %v2615
    %v3128 = vcvt.s32.f32 %v2616
    %v3129 = vcvt.s32.f32 %v2617
    %v3130 = vcvt.s32.f32 %v2618
    %v3131 = vcvt.s32.f32 %v2619
    %v3132 = vcvt.s32.f32 %v2620
    %v3133 = vcvt.s32.f32 %v2621
    %v3134 = vcvt.s32.f32 %v2622
    %v3135 = vcvt.s32.f32 %v2623
    %v3136 = vcvt.s32.f32 %v2624
    %v3137 = vcvt.s32.f32 %v2625
    %v3138 = vcvt.s32.f32 %v2626
    %v3139 = vcvt.s32.f32 %v2627
    %v3140 = vcvt.s32.f32 %v2628
    %v3141 = vcvt.s32.f32 %v2629
    %v3142 = vcvt.s32.f32 %v2630
    %v3143 = vcvt.s32.f32 %v2631
    %v3144 = vcvt.s32.f32 %v2632
    %v3145 = vcvt.s32.f32 %v2633
    %v3146 = vcvt.s32.f32 %v2634
    %v3147 = vcvt.s32.f32 %v2635
    %v3148 = vcvt.s32.f32 %v2636
    %v3149 = vcvt.s32.f32 %v2637
    %v3150 = vcvt.s32.f32 %v2638
    %v3151 = vcvt.s32.f32 %v2639
    %v3152 = vcvt.s32.f32 %v2640
    %v3153 = vcvt.s32.f32 %v2641
    %v3154 = vcvt.s32.f32 %v2642
    %v3155 = vcvt.s32.f32 %v2643
    %v3156 = vcvt.s32.f32 %v2644
    %v3157 = vcvt.s32.f32 %v2645
    %v3158 = vcvt.s32.f32 %v2646
    %v3159 = vcvt.s32.f32 %v2647
    %v3160 = vcvt.s32.f32 %v2648
    %v3161 = vcvt.s32.f32 %v2649
    %v3162 = vcvt.s32.f32 %v2650
    %v3163 = vcvt.s32.f32 %v2651
    %v3164 = vcvt.s32.f32 %v2652
    %v3165 = vcvt.s32.f32 %v2653
    %v3166 = vcvt.s32.f32 %v2654
    %v3167 = vcvt.s32.f32 %v2655
    %v3168 = vcvt.s32.f32 %v2656
    %v3169 = vcvt.s32.f32 %v2657
    %v3170 = vcvt.s32.f32 %v2658
    %v3171 = vcvt.s32.f32 %v2659
    %v3172 = vcvt.s32.f32 %v2660
    %v3173 = vcvt.s32.f32 %v2661
    %v3174 = vcvt.s32.f32 %v2662
    %v3175 = vcvt.s32.f32 %v2663
    %v3176 = vcvt.s32.f32 %v2664
    %v3177 = vcvt.s32.f32 %v2665
    %v3178 = vcvt.s32.f32 %v2666
    %v3179 = vcvt.s32.f32 %v2667
    %v3180 = vcvt.s32.f32 %v2668
    %v3181 = vcvt.s32.f32 %v2669
    %v3182 = vcvt.s32.f32 %v2670
    %v3183 = vcvt.s32.f32 %v2671
    %v3184 = vcvt.s32.f32 %v2672
    %v3185 = vcvt.s32.f32 %v2673
    %v3186 = vcvt.s32.f32 %v2674
    %v3187 = vcvt.s32.f32 %v2675
    %v3188 = vcvt.s32.f32 %v2676
    %v3189 = vcvt.s32.f32 %v2677
    %v3190 = vcvt.s32.f32 %v2678
    %v3191 = vcvt.s32.f32 %v2679
    %v3192 = vcvt.s32.f32 %v2680
    %v3193 = vcvt.s32.f32 %v2681
    %v3194 = vcvt.s32.f32 %v2682
    %v3195 = vcvt.s32.f32 %v2683
    %v3196 = vcvt.s32.f32 %v2684
    %v3197 = vcvt.s32.f32 %v2685
    %v3198 = vcvt.s32.f32 %v2686
    %v3199 = vcvt.s32.f32 %v2687
    %v3200 = vcvt.s32.f32 %v2688
    %v3201 = vcvt.s32.f32 %v2689
    %v3202 = vcvt.s32.f32 %v2690
    %v3203 = vcvt.s32.f32 %v2691
    %v3204 = vcvt.s32.f32 %v2692
    %v3205 = vcvt.s32.f32 %v2693
    %v3206 = vcvt.s32.f32 %v2694
    %v3207 = vcvt.s32.f32 %v2695
    %v3208 = vcvt.s32.f32 %v2696
    %v3209 = vcvt.s32.f32 %v2697
    %v3210 = vcvt.s32.f32 %v2698
    %v3211 = vcvt.s32.f32 %v2699
    %v3212 = vcvt.s32.f32 %v2700
    %v3213 = vcvt.s32.f32 %v2701
    %v3214 = vcvt.s32.f32 %v2702
    %v3215 = vcvt.s32.f32 %v2703
    %v3216 = vcvt.s32.f32 %v2704
    %v3217 = vcvt.s32.f32 %v2705
    %v3218 = vcvt.s32.f32 %v2706
    %v3219 = vcvt.s32.f32 %v2707
    %v3220 = vcvt.s32.f32 %v2708
    %v3221 = vcvt.s32.f32 %v2709
    %v3222 = vcvt.s32.f32 %v2710
    %v3223 = vcvt.s32.f32 %v2711
    %v3224 = vcvt.s32.f32 %v2712
    %v3225 = vcvt.s32.f32 %v2713
    %v3226 = vcvt.s32.f32 %v2714
    %v3227 = vcvt.s32.f32 %v2715
    %v3228 = vcvt.s32.f32 %v2716
    %v3229 = vcvt.s32.f32 %v2717
    %v3230 = vcvt.s32.f32 %v2718
    %v3231 = vcvt.s32.f32 %v2719
    %v3232 = vcvt.s32.f32 %v2720
    %v3233 = vcvt.s32.f32 %v2721
    %v3234 = vcvt.s32.f32 %v2722
    %v3235 = vcvt.s32.f32 %v2723
    %v3236 = vcvt.s32.f32 %v2724
    %v3237 = vcvt.s32.f32 %v2725
    %v3238 = vcvt.s32.f32 %v2726
    %v3239 = vcvt.s32.f32 %v2727
    %v3240 = vcvt.s32.f32 %v2728
    %v3241 = vcvt.s32.f32 %v2729
    %v3242 = vcvt.s32.f32 %v2730
    %v3243 = vcvt.s32.f32 %v2731
    %v3244 = vcvt.s32.f32 %v2732
    %v3245 = vcvt.s32.f32 %v2733
    %v3246 = vcvt.s32.f32 %v2734
    %v3247 = vcvt.s32.f32 %v2735
    %v3248 = vcvt.s32.f32 %v2736
    %v3249 = vcvt.s32.f32 %v2737
    %v3250 = vcvt.s32.f32 %v2738
    %v3251 = vcvt.s32.f32 %v2739
    %v3252 = vcvt.s32.f32 %v2740
    %v3253 = vcvt.s32.f32 %v2741
    %v3254 = vcvt.s32.f32 %v2742
    %v3255 = vcvt.s32.f32 %v2743
    %v3256 = vcvt.s32.f32 %v2744
    %v3257 = vcvt.s32.f32 %v2745
    %v3258 = vcvt.s32.f32 %v2746
    %v3259 = vcvt.s32.f32 %v2747
    %v3260 = vcvt.s32.f32 %v2748
    %v3261 = vcvt.s32.f32 %v2749
    %v3262 = vcvt.s32.f32 %v2750
    %v3263 = vcvt.s32.f32 %v2751
    %v3264 = vcvt.s32.f32 %v2752
    %v3265 = vcvt.s32.f32 %v2753
    %v3266 = vcvt.s32.f32 %v2754
    %v3267 = vcvt.s32.f32 %v2755
    %v3268 = vcvt.s32.f32 %v2756
    %v3269 = vcvt.s32.f32 %v2757
    %v3270 = vcvt.s32.f32 %v2758
    %v3271 = vcvt.s32.f32 %v2759
    %v3272 = vcvt.s32.f32 %v2760
    %v3273 = vcvt.s32.f32 %v2761
    %v3274 = vcvt.s32.f32 %v2762
    %v3275 = vcvt.s32.f32 %v2763
    %v3276 = vcvt.s32.f32 %v2764
    %v3277 = vcvt.s32.f32 %v2765
    %v3278 = vcvt.s32.f32 %v2766
    %v3279 = vcvt.s32.f32 %v2767
    %v3280 = vcvt.s32.f32 %v2768
    %v3281 = vcvt.s32.f32 %v2769
    %v3282 = vcvt.s32.f32 %v2770
    %v3283 = vcvt.s32.f32 %v2771
    %v3284 = vcvt.s32.f32 %v2772
    %v3285 = vcvt.s32.f32 %v2773
    %v3286 = vcvt.s32.f32 %v2774
    %v3287 = vcvt.s32.f32 %v2775
    %v3288 = vcvt.s32.f32 %v2776
    %v3289 = vcvt.s32.f32 %v2777
    %v3290 = vcvt.s32.f32 %v2778
    %v3291 = vcvt.s32.f32 %v2779
    %v3292 = vcvt.s32.f32 %v2780
    %v3293 = vcvt.s32.f32 %v2781
    %v3294 = vcvt.s32.f32 %v2782
    %v3295 = vcvt.s32.f32 %v2783
    %v3296 = vcvt.s32.f32 %v2784
    %v3297 = vcvt.s32.f32 %v2785
    %v3298 = vcvt.s32.f32 %v2786
    %v3299 = vcvt.s32.f32 %v2787
    %v3300 = vcvt.s32.f32 %v2788
    %v3301 = vcvt.s32.f32 %v2789
    %v3302 = vcvt.s32.f32 %v2790
    %v3303 = vcvt.s32.f32 %v2791
    %v3304 = vcvt.s32.f32 %v2792
    %v3305 = vcvt.s32.f32 %v2793
    %v3306 = vcvt.s32.f32 %v2794
    %v3307 = vcvt.s32.f32 %v2795
    %v3308 = vcvt.s32.f32 %v2796
    %v3309 = vcvt.s32.f32 %v2797
    %v3310 = vcvt.s32.f32 %v2798
    %v3311 = vcvt.s32.f32 %v2799
    %v3312 = vcvt.s32.f32 %v2800
    %v3313 = vcvt.s32.f32 %v2801
    %v3314 = vcvt.s32.f32 %v2802
    %v3315 = vcvt.s32.f32 %v2803
    %v3316 = vcvt.s32.f32 %v2804
    %v3317 = vcvt.s32.f32 %v2805
    %v3318 = vcvt.s32.f32 %v2806
    %v3319 = vcvt.s32.f32 %v2807
    %v3320 = vcvt.s32.f32 %v2808
    %v3321 = vcvt.s32.f32 %v2809
    %v3322 = vcvt.s32.f32 %v2810
    %v3323 = vcvt.s32.f32 %v2811
    %v3324 = vcvt.s32.f32 %v2812
    %v3325 = vcvt.s32.f32 %v2813
    %v3326 = vcvt.s32.f32 %v2814
    %v3327 = vcvt.s32.f32 %v2815
    %v3328 = vcvt.s32.f32 %v2816
    %v3329 = vcvt.s32.f32 %v2817
    %v3330 = vcvt.s32.f32 %v2818
    %v3331 = vcvt.s32.f32 %v2819
    %v3332 = vcvt.s32.f32 %v2820
    %v3333 = vcvt.s32.f32 %v2821
    %v3334 = vcvt.s32.f32 %v2822
    %v3335 = vcvt.s32.f32 %v2823
    %v3336 = vcvt.s32.f32 %v2824
    %v3337 = vcvt.s32.f32 %v2825
    %v3338 = vcvt.s32.f32 %v2826
    %v3339 = vcvt.s32.f32 %v2827
    %v3340 = vcvt.s32.f32 %v2828
    %v3341 = vcvt.s32.f32 %v2829
    %v3342 = vcvt.s32.f32 %v2830
    %v3343 = vcvt.s32.f32 %v2831
    %v3344 = vcvt.s32.f32 %v2832
    %v3345 = vcvt.s32.f32 %v2833
    %v3346 = vcvt.s32.f32 %v2834
    %v3347 = vcvt.s32.f32 %v2835
    %v3348 = vcvt.s32.f32 %v2836
    %v3349 = vcvt.s32.f32 %v2837
    %v3350 = vcvt.s32.f32 %v2838
    %v3351 = vcvt.s32.f32 %v2839
    %v3352 = vcvt.s32.f32 %v2840
    %v3353 = vcvt.s32.f32 %v2841
    %v3354 = vcvt.s32.f32 %v2842
    %v3355 = vcvt.s32.f32 %v2843
    %v3356 = vcvt.s32.f32 %v2844
    %v3357 = vcvt.s32.f32 %v2845
    %v3358 = vcvt.s32.f32 %v2846
    %v3359 = vcvt.s32.f32 %v2847
    %v3360 = vcvt.s32.f32 %v2848
    %v3361 = vcvt.s32.f32 %v2849
    %v3362 = vcvt.s32.f32 %v2850
    %v3363 = vcvt.s32.f32 %v2851
    %v3364 = vcvt.s32.f32 %v2852
    %v3365 = vcvt.s32.f32 %v2853
    %v3366 = vcvt.s32.f32 %v2854
    %v3367 = vcvt.s32.f32 %v2855
    %v3368 = vcvt.s32.f32 %v2856
    %v3369 = vcvt.s32.f32 %v2857
    %v3370 = vcvt.s32.f32 %v2858
    %v3371 = vcvt.s32.f32 %v2859
    %v3372 = vcvt.s32.f32 %v2860
    %v3373 = vcvt.s32.f32 %v2861
    %v3374 = vcvt.s32.f32 %v2862
    %v3375 = vcvt.s32.f32 %v2863
    %v3376 = vcvt.s32.f32 %v2864
    %v3377 = vcvt.s32.f32 %v2865
    %v3378 = vcvt.s32.f32 %v2866
    %v3379 = vcvt.s32.f32 %v2867
    %v3380 = vcvt.s32.f32 %v2868
    %v3381 = vcvt.s32.f32 %v2869
    %v3382 = vcvt.s32.f32 %v2870
    %v3383 = vcvt.s32.f32 %v2871
    %v3384 = vcvt.s32.f32 %v2872
    %v3385 = vcvt.s32.f32 %v2873
    %v3386 = vcvt.s32.f32 %v2874
    %v3387 = vcvt.s32.f32 %v2875
    %v3388 = vcvt.s32.f32 %v2876
    %v3389 = vcvt.s32.f32 %v2877
    %v3390 = vcvt.s32.f32 %v2878
    %v3391 = vcvt.s32.f32 %v2879
    %v3392 = vcvt.s32.f32 %v2880
    %v3393 = vcvt.s32.f32 %v2881
    %v3394 = vcvt.s32.f32 %v2882
    %v3395 = vcvt.s32.f32 %v2883
    %v3396 = vcvt.s32.f32 %v2884
    %v3397 = vcvt.s32.f32 %v2885
    %v3398 = vcvt.s32.f32 %v2886
    %v3399 = vcvt.s32.f32 %v2887
    %v3400 = vcvt.s32.f32 %v2888
    %v3401 = vcvt.s32.f32 %v2889
    %v3402 = vcvt.s32.f32 %v2890
    %v3403 = vcvt.s32.f32 %v2891
    %v3404 = vcvt.s32.f32 %v2892
    %v3405 = vcvt.s32.f32 %v2893
    %v3406 = vcvt.s32.f32 %v2894
    %v3407 = vcvt.s32.f32 %v2895
    %v3408 = vcvt.s32.f32 %v2896
    %v3409 = vcvt.s32.f32 %v2897
    %v3410 = vcvt.s32.f32 %v2898
    %v3411 = vcvt.s32.f32 %v2899
    %v3412 = vcvt.s32.f32 %v2900
    %v3413 = vcvt.s32.f32 %v2901
    %v3414 = vcvt.s32.f32 %v2902
    %v3415 = vcvt.s32.f32 %v2903
    %v3416 = vcvt.s32.f32 %v2904
    %v3417 = vcvt.s32.f32 %v2905
    %v3418 = vcvt.s32.f32 %v2906
    %v3419 = vcvt.s32.f32 %v2907
    %v3420 = vcvt.s32.f32 %v2908
    %v3421 = vcvt.s32.f32 %v2909
    %v3422 = vcvt.s32.f32 %v2910
    %v3423 = vcvt.s32.f32 %v2911
    %v3424 = vcvt.s32.f32 %v2912
    %v3425 = vcvt.s32.f32 %v2913
    %v3426 = vcvt.s32.f32 %v2914
    %v3427 = vcvt.s32.f32 %v2915
    %v3428 = vcvt.s32.f32 %v2916
    %v3429 = vcvt.s32.f32 %v2917
    %v3430 = vcvt.s32.f32 %v2918
    %v3431 = vcvt.s32.f32 %v2919
    %v3432 = vcvt.s32.f32 %v2920
    %v3433 = vcvt.s32.f32 %v2921
    %v3434 = vcvt.s32.f32 %v2922
    %v3435 = vcvt.s32.f32 %v2923
    %v3436 = vcvt.s32.f32 %v2924
    %v3437 = vcvt.s32.f32 %v2925
    %v3438 = vcvt.s32.f32 %v2926
    %v3439 = vcvt.s32.f32 %v2927
    %v3440 = vcvt.s32.f32 %v2928
    %v3441 = vcvt.s32.f32 %v2929
    %v3442 = vcvt.s32.f32 %v2930
    %v3443 = vcvt.s32.f32 %v2931
    %v3444 = vcvt.s32.f32 %v2932
    %v3445 = vcvt.s32.f32 %v2933
    %v3446 = vcvt.s32.f32 %v2934
    %v3447 = vcvt.s32.f32 %v2935
    %v3448 = vcvt.s32.f32 %v2936
    %v3449 = vcvt.s32.f32 %v2937
    %v3450 = vcvt.s32.f32 %v2938
    %v3451 = vcvt.s32.f32 %v2939
    %v3452 = vcvt.s32.f32 %v2940
    %v3453 = vcvt.s32.f32 %v2941
    %v3454 = vcvt.s32.f32 %v2942
    %v3455 = vcvt.s32.f32 %v2943
    %v3456 = vcvt.s32.f32 %v2944
    %v3457 = vcvt.s32.f32 %v2945
    %v3458 = vcvt.s32.f32 %v2946
    %v3459 = vcvt.s32.f32 %v2947
    %v3460 = vcvt.s32.f32 %v2948
    %v3461 = vcvt.s32.f32 %v2949
    %v3462 = vcvt.s32.f32 %v2950
    %v3463 = vcvt.s32.f32 %v2951
    %v3464 = vcvt.s32.f32 %v2952
    %v3465 = vcvt.s32.f32 %v2953
    %v3466 = vcvt.s32.f32 %v2954
    %v3467 = vcvt.s32.f32 %v2955
    %v3468 = vcvt.s32.f32 %v2956
    %v3469 = vcvt.s32.f32 %v2957
    %v3470 = vcvt.s32.f32 %v2958
    %v3471 = vcvt.s32.f32 %v2959
    %v3472 = vpack.c.bf16 %v2964, %v2960
    %v3473 = vpack.c.bf16 %v2965, %v2961
    %v3474 = vpack.c.bf16 %v2966, %v2962
    %v3475 = vpack.c.bf16 %v2967, %v2963
    %v3476 = vpack.c.bf16 %v2972, %v2968
    %v3477 = vpack.c.bf16 %v2973, %v2969
    %v3478 = vpack.c.bf16 %v2974, %v2970
    %v3479 = vpack.c.bf16 %v2975, %v2971
    %v3480 = vpack.c.bf16 %v2980, %v2976
    %v3481 = vpack.c.bf16 %v2981, %v2977
    %v3482 = vpack.c.bf16 %v2982, %v2978
    %v3483 = vpack.c.bf16 %v2983, %v2979
    %v3484 = vpack.c.bf16 %v2988, %v2984
    %v3485 = vpack.c.bf16 %v2989, %v2985
    %v3486 = vpack.c.bf16 %v2990, %v2986
    %v3487 = vpack.c.bf16 %v2991, %v2987
    %v3488 = vpack.c.bf16 %v2996, %v2992
    %v3489 = vpack.c.bf16 %v2997, %v2993
    %v3490 = vpack.c.bf16 %v2998, %v2994
    %v3491 = vpack.c.bf16 %v2999, %v2995
    %v3492 = vpack.c.bf16 %v3004, %v3000
    %v3493 = vpack.c.bf16 %v3005, %v3001
    %v3494 = vpack.c.bf16 %v3006, %v3002
    %v3495 = vpack.c.bf16 %v3007, %v3003
    %v3496 = vpack.c.bf16 %v3012, %v3008
    %v3497 = vpack.c.bf16 %v3013, %v3009
    %v3498 = vpack.c.bf16 %v3014, %v3010
    %v3499 = vpack.c.bf16 %v3015, %v3011
    %v3500 = vpack.c.bf16 %v3020, %v3016
    %v3501 = vpack.c.bf16 %v3021, %v3017
    %v3502 = vpack.c.bf16 %v3022, %v3018
    %v3503 = vpack.c.bf16 %v3023, %v3019
    %v3504 = vpack.c.bf16 %v3028, %v3024
    %v3505 = vpack.c.bf16 %v3029, %v3025
    %v3506 = vpack.c.bf16 %v3030, %v3026
    %v3507 = vpack.c.bf16 %v3031, %v3027
    %v3508 = vpack.c.bf16 %v3036, %v3032
    %v3509 = vpack.c.bf16 %v3037, %v3033
    %v3510 = vpack.c.bf16 %v3038, %v3034
    %v3511 = vpack.c.bf16 %v3039, %v3035
    %v3512 = vpack.c.bf16 %v3044, %v3040
    %v3513 = vpack.c.bf16 %v3045, %v3041
    %v3514 = vpack.c.bf16 %v3046, %v3042
    %v3515 = vpack.c.bf16 %v3047, %v3043
    %v3516 = vpack.c.bf16 %v3052, %v3048
    %v3517 = vpack.c.bf16 %v3053, %v3049
    %v3518 = vpack.c.bf16 %v3054, %v3050
    %v3519 = vpack.c.bf16 %v3055, %v3051
    %v3520 = vpack.c.bf16 %v3060, %v3056
    %v3521 = vpack.c.bf16 %v3061, %v3057
    %v3522 = vpack.c.bf16 %v3062, %v3058
    %v3523 = vpack.c.bf16 %v3063, %v3059
    %v3524 = vpack.c.bf16 %v3068, %v3064
    %v3525 = vpack.c.bf16 %v3069, %v3065
    %v3526 = vpack.c.bf16 %v3070, %v3066
    %v3527 = vpack.c.bf16 %v3071, %v3067
    %v3528 = vpack.c.bf16 %v3076, %v3072
    %v3529 = vpack.c.bf16 %v3077, %v3073
    %v3530 = vpack.c.bf16 %v3078, %v3074
    %v3531 = vpack.c.bf16 %v3079, %v3075
    %v3532 = vpack.c.bf16 %v3084, %v3080
    %v3533 = vpack.c.bf16 %v3085, %v3081
    %v3534 = vpack.c.bf16 %v3086, %v3082
    %v3535 = vpack.c.bf16 %v3087, %v3083
    %v3536 = vpack.c.bf16 %v3092, %v3088
    %v3537 = vpack.c.bf16 %v3093, %v3089
    %v3538 = vpack.c.bf16 %v3094, %v3090
    %v3539 = vpack.c.bf16 %v3095, %v3091
    %v3540 = vpack.c.bf16 %v3100, %v3096
    %v3541 = vpack.c.bf16 %v3101, %v3097
    %v3542 = vpack.c.bf16 %v3102, %v3098
    %v3543 = vpack.c.bf16 %v3103, %v3099
    %v3544 = vpack.c.bf16 %v3108, %v3104
    %v3545 = vpack.c.bf16 %v3109, %v3105
    %v3546 = vpack.c.bf16 %v3110, %v3106
    %v3547 = vpack.c.bf16 %v3111, %v3107
    %v3548 = vpack.c.bf16 %v3116, %v3112
    %v3549 = vpack.c.bf16 %v3117, %v3113
    %v3550 = vpack.c.bf16 %v3118, %v3114
    %v3551 = vpack.c.bf16 %v3119, %v3115
    %v3552 = vpack.c.bf16 %v3124, %v3120
    %v3553 = vpack.c.bf16 %v3125, %v3121
    %v3554 = vpack.c.bf16 %v3126, %v3122
    %v3555 = vpack.c.bf16 %v3127, %v3123
    %v3556 = vpack.c.bf16 %v3132, %v3128
    %v3557 = vpack.c.bf16 %v3133, %v3129
    %v3558 = vpack.c.bf16 %v3134, %v3130
    %v3559 = vpack.c.bf16 %v3135, %v3131
    %v3560 = vpack.c.bf16 %v3140, %v3136
    %v3561 = vpack.c.bf16 %v3141, %v3137
    %v3562 = vpack.c.bf16 %v3142, %v3138
    %v3563 = vpack.c.bf16 %v3143, %v3139
    %v3564 = vpack.c.bf16 %v3148, %v3144
    %v3565 = vpack.c.bf16 %v3149, %v3145
    %v3566 = vpack.c.bf16 %v3150, %v3146
    %v3567 = vpack.c.bf16 %v3151, %v3147
    %v3568 = vpack.c.bf16 %v3156, %v3152
    %v3569 = vpack.c.bf16 %v3157, %v3153
    %v3570 = vpack.c.bf16 %v3158, %v3154
    %v3571 = vpack.c.bf16 %v3159, %v3155
    %v3572 = vpack.c.bf16 %v3164, %v3160
    %v3573 = vpack.c.bf16 %v3165, %v3161
    %v3574 = vpack.c.bf16 %v3166, %v3162
    %v3575 = vpack.c.bf16 %v3167, %v3163
    %v3576 = vpack.c.bf16 %v3172, %v3168
    %v3577 = vpack.c.bf16 %v3173, %v3169
    %v3578 = vpack.c.bf16 %v3174, %v3170
    %v3579 = vpack.c.bf16 %v3175, %v3171
    %v3580 = vpack.c.bf16 %v3180, %v3176
    %v3581 = vpack.c.bf16 %v3181, %v3177
    %v3582 = vpack.c.bf16 %v3182, %v3178
    %v3583 = vpack.c.bf16 %v3183, %v3179
    %v3584 = vpack.c.bf16 %v3188, %v3184
    %v3585 = vpack.c.bf16 %v3189, %v3185
    %v3586 = vpack.c.bf16 %v3190, %v3186
    %v3587 = vpack.c.bf16 %v3191, %v3187
    %v3588 = vpack.c.bf16 %v3196, %v3192
    %v3589 = vpack.c.bf16 %v3197, %v3193
    %v3590 = vpack.c.bf16 %v3198, %v3194
    %v3591 = vpack.c.bf16 %v3199, %v3195
    %v3592 = vpack.c.bf16 %v3204, %v3200
    %v3593 = vpack.c.bf16 %v3205, %v3201
    %v3594 = vpack.c.bf16 %v3206, %v3202
    %v3595 = vpack.c.bf16 %v3207, %v3203
    %v3596 = vpack.c.bf16 %v3212, %v3208
    %v3597 = vpack.c.bf16 %v3213, %v3209
    %v3598 = vpack.c.bf16 %v3214, %v3210
    %v3599 = vpack.c.bf16 %v3215, %v3211
    %v3600 = vpack.c.bf16 %v3220, %v3216
    %v3601 = vpack.c.bf16 %v3221, %v3217
    %v3602 = vpack.c.bf16 %v3222, %v3218
    %v3603 = vpack.c.bf16 %v3223, %v3219
    %v3604 = vpack.c.bf16 %v3228, %v3224
    %v3605 = vpack.c.bf16 %v3229, %v3225
    %v3606 = vpack.c.bf16 %v3230, %v3226
    %v3607 = vpack.c.bf16 %v3231, %v3227
    %v3608 = vpack.c.bf16 %v3236, %v3232
    %v3609 = vpack.c.bf16 %v3237, %v3233
    %v3610 = vpack.c.bf16 %v3238, %v3234
    %v3611 = vpack.c.bf16 %v3239, %v3235
    %v3612 = vpack.c.bf16 %v3244, %v3240
    %v3613 = vpack.c.bf16 %v3245, %v3241
    %v3614 = vpack.c.bf16 %v3246, %v3242
    %v3615 = vpack.c.bf16 %v3247, %v3243
    %v3616 = vpack.c.bf16 %v3252, %v3248
    %v3617 = vpack.c.bf16 %v3253, %v3249
    %v3618 = vpack.c.bf16 %v3254, %v3250
    %v3619 = vpack.c.bf16 %v3255, %v3251
    %v3620 = vpack.c.bf16 %v3260, %v3256
    %v3621 = vpack.c.bf16 %v3261, %v3257
    %v3622 = vpack.c.bf16 %v3262, %v3258
    %v3623 = vpack.c.bf16 %v3263, %v3259
    %v3624 = vpack.c.bf16 %v3268, %v3264
    %v3625 = vpack.c.bf16 %v3269, %v3265
    %v3626 = vpack.c.bf16 %v3270, %v3266
    %v3627 = vpack.c.bf16 %v3271, %v3267
    %v3628 = vpack.c.bf16 %v3276, %v3272
    %v3629 = vpack.c.bf16 %v3277, %v3273
    %v3630 = vpack.c.bf16 %v3278, %v3274
    %v3631 = vpack.c.bf16 %v3279, %v3275
    %v3632 = vpack.c.bf16 %v3284, %v3280
    %v3633 = vpack.c.bf16 %v3285, %v3281
    %v3634 = vpack.c.bf16 %v3286, %v3282
    %v3635 = vpack.c.bf16 %v3287, %v3283
    %v3636 = vpack.c.bf16 %v3292, %v3288
    %v3637 = vpack.c.bf16 %v3293, %v3289
    %v3638 = vpack.c.bf16 %v3294, %v3290
    %v3639 = vpack.c.bf16 %v3295, %v3291
    %v3640 = vpack.c.bf16 %v3300, %v3296
    %v3641 = vpack.c.bf16 %v3301, %v3297
    %v3642 = vpack.c.bf16 %v3302, %v3298
    %v3643 = vpack.c.bf16 %v3303, %v3299
    %v3644 = vpack.c.bf16 %v3308, %v3304
    %v3645 = vpack.c.bf16 %v3309, %v3305
    %v3646 = vpack.c.bf16 %v3310, %v3306
    %v3647 = vpack.c.bf16 %v3311, %v3307
    %v3648 = vpack.c.bf16 %v3316, %v3312
    %v3649 = vpack.c.bf16 %v3317, %v3313
    %v3650 = vpack.c.bf16 %v3318, %v3314
    %v3651 = vpack.c.bf16 %v3319, %v3315
    %v3652 = vpack.c.bf16 %v3324, %v3320
    %v3653 = vpack.c.bf16 %v3325, %v3321
    %v3654 = vpack.c.bf16 %v3326, %v3322
    %v3655 = vpack.c.bf16 %v3327, %v3323
    %v3656 = vpack.c.bf16 %v3332, %v3328
    %v3657 = vpack.c.bf16 %v3333, %v3329
    %v3658 = vpack.c.bf16 %v3334, %v3330
    %v3659 = vpack.c.bf16 %v3335, %v3331
    %v3660 = vpack.c.bf16 %v3340, %v3336
    %v3661 = vpack.c.bf16 %v3341, %v3337
    %v3662 = vpack.c.bf16 %v3342, %v3338
    %v3663 = vpack.c.bf16 %v3343, %v3339
    %v3664 = vpack.c.bf16 %v3348, %v3344
    %v3665 = vpack.c.bf16 %v3349, %v3345
    %v3666 = vpack.c.bf16 %v3350, %v3346
    %v3667 = vpack.c.bf16 %v3351, %v3347
    %v3668 = vpack.c.bf16 %v3356, %v3352
    %v3669 = vpack.c.bf16 %v3357, %v3353
    %v3670 = vpack.c.bf16 %v3358, %v3354
    %v3671 = vpack.c.bf16 %v3359, %v3355
    %v3672 = vpack.c.bf16 %v3364, %v3360
    %v3673 = vpack.c.bf16 %v3365, %v3361
    %v3674 = vpack.c.bf16 %v3366, %v3362
    %v3675 = vpack.c.bf16 %v3367, %v3363
    %v3676 = vpack.c.bf16 %v3372, %v3368
    %v3677 = vpack.c.bf16 %v3373, %v3369
    %v3678 = vpack.c.bf16 %v3374, %v3370
    %v3679 = vpack.c.bf16 %v3375, %v3371
    %v3680 = vpack.c.bf16 %v3380, %v3376
    %v3681 = vpack.c.bf16 %v3381, %v3377
    %v3682 = vpack.c.bf16 %v3382, %v3378
    %v3683 = vpack.c.bf16 %v3383, %v3379
    %v3684 = vpack.c.bf16 %v3388, %v3384
    %v3685 = vpack.c.bf16 %v3389, %v3385
    %v3686 = vpack.c.bf16 %v3390, %v3386
    %v3687 = vpack.c.bf16 %v3391, %v3387
    %v3688 = vpack.c.bf16 %v3396, %v3392
    %v3689 = vpack.c.bf16 %v3397, %v3393
    %v3690 = vpack.c.bf16 %v3398, %v3394
    %v3691 = vpack.c.bf16 %v3399, %v3395
    %v3692 = vpack.c.bf16 %v3404, %v3400
    %v3693 = vpack.c.bf16 %v3405, %v3401
    %v3694 = vpack.c.bf16 %v3406, %v3402
    %v3695 = vpack.c.bf16 %v3407, %v3403
    %v3696 = vpack.c.bf16 %v3412, %v3408
    %v3697 = vpack.c.bf16 %v3413, %v3409
    %v3698 = vpack.c.bf16 %v3414, %v3410
    %v3699 = vpack.c.bf16 %v3415, %v3411
    %v3700 = vpack.c.bf16 %v3420, %v3416
    %v3701 = vpack.c.bf16 %v3421, %v3417
    %v3702 = vpack.c.bf16 %v3422, %v3418
    %v3703 = vpack.c.bf16 %v3423, %v3419
    %v3704 = vpack.c.bf16 %v3428, %v3424
    %v3705 = vpack.c.bf16 %v3429, %v3425
    %v3706 = vpack.c.bf16 %v3430, %v3426
    %v3707 = vpack.c.bf16 %v3431, %v3427
    %v3708 = vpack.c.bf16 %v3436, %v3432
    %v3709 = vpack.c.bf16 %v3437, %v3433
    %v3710 = vpack.c.bf16 %v3438, %v3434
    %v3711 = vpack.c.bf16 %v3439, %v3435
    %v3712 = vpack.c.bf16 %v3444, %v3440
    %v3713 = vpack.c.bf16 %v3445, %v3441
    %v3714 = vpack.c.bf16 %v3446, %v3442
    %v3715 = vpack.c.bf16 %v3447, %v3443
    %v3716 = vpack.c.bf16 %v3452, %v3448
    %v3717 = vpack.c.bf16 %v3453, %v3449
    %v3718 = vpack.c.bf16 %v3454, %v3450
    %v3719 = vpack.c.bf16 %v3455, %v3451
    %v3720 = vpack.c.bf16 %v3460, %v3456
    %v3721 = vpack.c.bf16 %v3461, %v3457
    %v3722 = vpack.c.bf16 %v3462, %v3458
    %v3723 = vpack.c.bf16 %v3463, %v3459
    %v3724 = vpack.c.bf16 %v3468, %v3464
    %v3725 = vpack.c.bf16 %v3469, %v3465
    %v3726 = vpack.c.bf16 %v3470, %v3466
    %v3727 = vpack.c.bf16 %v3471, %v3467
    %v3728 = vpack.c.bf16 %v2312, %v2312
    %v3729 = vpack.c.bf16 %v2313, %v2313
    %v3730 = vpack.c.bf16 %v2314, %v2314
    %v3731 = vpack.c.bf16 %v2315, %v2315
    %v3732 = vpack.c.bf16 %v2316, %v2316
    %v3733 = vpack.c.bf16 %v2317, %v2317
    %v3734 = vpack.c.bf16 %v2318, %v2318
    %v3735 = vpack.c.bf16 %v2319, %v2319
    %3736 = vmatpush.bf16.msra.mxu0 %v3500
    %3737 = vmatpush.bf16.msra.mxu0 %v3496
    %3738 = vmatpush.bf16.msra.mxu0 %v3492
    %3739 = vmatpush.bf16.msra.mxu0 %v3488
    %3740 = vmatpush.bf16.msra.mxu0 %v3484
    %3741 = vmatpush.bf16.msra.mxu0 %v3480
    %3742 = vmatpush.bf16.msra.mxu0 %v3476
    %3743 = vmatpush.bf16.msra.mxu0 %v3472
    %3744 = vmatmul.bf16.gmra.mxu0 %v3728
    %v3745 = vpop.f32.mrf.mxu0
    %v3746 = vadd.f32 0.0, %v3745
    %v3747 = vpop.f32.mrf.mxu0
    %3748 = vdwg.mxu0
    %3749 = vmatpush.bf16.msra.mxu0 %v3532
    %3750 = vmatpush.bf16.msra.mxu0 %v3528
    %3751 = vmatpush.bf16.msra.mxu0 %v3524
    %3752 = vmatpush.bf16.msra.mxu0 %v3520
    %3753 = vmatpush.bf16.msra.mxu0 %v3516
    %3754 = vmatpush.bf16.msra.mxu0 %v3512
    %3755 = vmatpush.bf16.msra.mxu0 %v3508
    %3756 = vmatpush.bf16.msra.mxu0 %v3504
    %3757 = vmatmul.bf16.gmra.mxu0 %v3729
    %v3758 = vpop.f32.mrf.mxu0
    %v3759 = vadd.f32 %v3746, %v3758
    %v3760 = vpop.f32.mrf.mxu0
    %3761 = vdwg.mxu0
    %3762 = vmatpush.bf16.msra.mxu0 %v3564
    %3763 = vmatpush.bf16.msra.mxu0 %v3560
    %3764 = vmatpush.bf16.msra.mxu0 %v3556
    %3765 = vmatpush.bf16.msra.mxu0 %v3552
    %3766 = vmatpush.bf16.msra.mxu0 %v3548
    %3767 = vmatpush.bf16.msra.mxu0 %v3544
    %3768 = vmatpush.bf16.msra.mxu0 %v3540
    %3769 = vmatpush.bf16.msra.mxu0 %v3536
    %3770 = vmatmul.bf16.gmra.mxu0 %v3730
    %v3771 = vpop.f32.mrf.mxu0
    %v3772 = vadd.f32 %v3759, %v3771
    %v3773 = vpop.f32.mrf.mxu0
    %3774 = vdwg.mxu0
    %3775 = vmatpush.bf16.msra.mxu0 %v3596
    %3776 = vmatpush.bf16.msra.mxu0 %v3592
    %3777 = vmatpush.bf16.msra.mxu0 %v3588
    %3778 = vmatpush.bf16.msra.mxu0 %v3584
    %3779 = vmatpush.bf16.msra.mxu0 %v3580
    %3780 = vmatpush.bf16.msra.mxu0 %v3576
    %3781 = vmatpush.bf16.msra.mxu0 %v3572
    %3782 = vmatpush.bf16.msra.mxu0 %v3568
    %3783 = vmatmul.bf16.gmra.mxu0 %v3731
    %v3784 = vpop.f32.mrf.mxu0
    %v3785 = vadd.f32 %v3772, %v3784
    %v3786 = vpop.f32.mrf.mxu0
    %3787 = vdwg.mxu0
    %3788 = vmatpush.bf16.msra.mxu0 %v3628
    %3789 = vmatpush.bf16.msra.mxu0 %v3624
    %3790 = vmatpush.bf16.msra.mxu0 %v3620
    %3791 = vmatpush.bf16.msra.mxu0 %v3616
    %3792 = vmatpush.bf16.msra.mxu0 %v3612
    %3793 = vmatpush.bf16.msra.mxu0 %v3608
    %3794 = vmatpush.bf16.msra.mxu0 %v3604
    %3795 = vmatpush.bf16.msra.mxu0 %v3600
    %3796 = vmatmul.bf16.gmra.mxu0 %v3732
    %v3797 = vpop.f32.mrf.mxu0
    %v3798 = vadd.f32 %v3785, %v3797
    %v3799 = vpop.f32.mrf.mxu0
    %3800 = vdwg.mxu0
    %3801 = vmatpush.bf16.msra.mxu0 %v3660
    %3802 = vmatpush.bf16.msra.mxu0 %v3656
    %3803 = vmatpush.bf16.msra.mxu0 %v3652
    %3804 = vmatpush.bf16.msra.mxu0 %v3648
    %3805 = vmatpush.bf16.msra.mxu0 %v3644
    %3806 = vmatpush.bf16.msra.mxu0 %v3640
    %3807 = vmatpush.bf16.msra.mxu0 %v3636
    %3808 = vmatpush.bf16.msra.mxu0 %v3632
    %3809 = vmatmul.bf16.gmra.mxu0 %v3733
    %v3810 = vpop.f32.mrf.mxu0
    %v3811 = vadd.f32 %v3798, %v3810
    %v3812 = vpop.f32.mrf.mxu0
    %3813 = vdwg.mxu0
    %3814 = vmatpush.bf16.msra.mxu0 %v3692
    %3815 = vmatpush.bf16.msra.mxu0 %v3688
    %3816 = vmatpush.bf16.msra.mxu0 %v3684
    %3817 = vmatpush.bf16.msra.mxu0 %v3680
    %3818 = vmatpush.bf16.msra.mxu0 %v3676
    %3819 = vmatpush.bf16.msra.mxu0 %v3672
    %3820 = vmatpush.bf16.msra.mxu0 %v3668
    %3821 = vmatpush.bf16.msra.mxu0 %v3664
    %3822 = vmatmul.bf16.gmra.mxu0 %v3734
    %v3823 = vpop.f32.mrf.mxu0
    %v3824 = vadd.f32 %v3811, %v3823
    %v3825 = vpop.f32.mrf.mxu0
    %3826 = vdwg.mxu0
    %3827 = vmatpush.bf16.msra.mxu0 %v3724
    %3828 = vmatpush.bf16.msra.mxu0 %v3720
    %3829 = vmatpush.bf16.msra.mxu0 %v3716
    %3830 = vmatpush.bf16.msra.mxu0 %v3712
    %3831 = vmatpush.bf16.msra.mxu0 %v3708
    %3832 = vmatpush.bf16.msra.mxu0 %v3704
    %3833 = vmatpush.bf16.msra.mxu0 %v3700
    %3834 = vmatpush.bf16.msra.mxu0 %v3696
    %3835 = vmatmul.bf16.gmra.mxu0 %v3735
    %v3836 = vpop.f32.mrf.mxu0
    %v3837 = vadd.f32 %v3824, %v3836
    %v3838 = vpop.f32.mrf.mxu0
    %3839 = vdwg.mxu0
    %3840 = vmatpush.bf16.msra.mxu0 %v3501
    %3841 = vmatpush.bf16.msra.mxu0 %v3497
    %3842 = vmatpush.bf16.msra.mxu0 %v3493
    %3843 = vmatpush.bf16.msra.mxu0 %v3489
    %3844 = vmatpush.bf16.msra.mxu0 %v3485
    %3845 = vmatpush.bf16.msra.mxu0 %v3481
    %3846 = vmatpush.bf16.msra.mxu0 %v3477
    %3847 = vmatpush.bf16.msra.mxu0 %v3473
    %3848 = vmatmul.bf16.gmra.mxu0 %v3728
    %v3849 = vpop.f32.mrf.mxu0
    %v3850 = vadd.f32 0.0, %v3849
    %v3851 = vpop.f32.mrf.mxu0
    %3852 = vdwg.mxu0
    %3853 = vmatpush.bf16.msra.mxu0 %v3533
    %3854 = vmatpush.bf16.msra.mxu0 %v3529
    %3855 = vmatpush.bf16.msra.mxu0 %v3525
    %3856 = vmatpush.bf16.msra.mxu0 %v3521
    %3857 = vmatpush.bf16.msra.mxu0 %v3517
    %3858 = vmatpush.bf16.msra.mxu0 %v3513
    %3859 = vmatpush.bf16.msra.mxu0 %v3509
    %3860 = vmatpush.bf16.msra.mxu0 %v3505
    %3861 = vmatmul.bf16.gmra.mxu0 %v3729
    %v3862 = vpop.f32.mrf.mxu0
    %v3863 = vadd.f32 %v3850, %v3862
    %v3864 = vpop.f32.mrf.mxu0
    %3865 = vdwg.mxu0
    %3866 = vmatpush.bf16.msra.mxu0 %v3565
    %3867 = vmatpush.bf16.msra.mxu0 %v3561
    %3868 = vmatpush.bf16.msra.mxu0 %v3557
    %3869 = vmatpush.bf16.msra.mxu0 %v3553
    %3870 = vmatpush.bf16.msra.mxu0 %v3549
    %3871 = vmatpush.bf16.msra.mxu0 %v3545
    %3872 = vmatpush.bf16.msra.mxu0 %v3541
    %3873 = vmatpush.bf16.msra.mxu0 %v3537
    %3874 = vmatmul.bf16.gmra.mxu0 %v3730
    %v3875 = vpop.f32.mrf.mxu0
    %v3876 = vadd.f32 %v3863, %v3875
    %v3877 = vpop.f32.mrf.mxu0
    %3878 = vdwg.mxu0
    %3879 = vmatpush.bf16.msra.mxu0 %v3597
    %3880 = vmatpush.bf16.msra.mxu0 %v3593
    %3881 = vmatpush.bf16.msra.mxu0 %v3589
    %3882 = vmatpush.bf16.msra.mxu0 %v3585
    %3883 = vmatpush.bf16.msra.mxu0 %v3581
    %3884 = vmatpush.bf16.msra.mxu0 %v3577
    %3885 = vmatpush.bf16.msra.mxu0 %v3573
    %3886 = vmatpush.bf16.msra.mxu0 %v3569
    %3887 = vmatmul.bf16.gmra.mxu0 %v3731
    %v3888 = vpop.f32.mrf.mxu0
    %v3889 = vadd.f32 %v3876, %v3888
    %v3890 = vpop.f32.mrf.mxu0
    %3891 = vdwg.mxu0
    %3892 = vmatpush.bf16.msra.mxu0 %v3629
    %3893 = vmatpush.bf16.msra.mxu0 %v3625
    %3894 = vmatpush.bf16.msra.mxu0 %v3621
    %3895 = vmatpush.bf16.msra.mxu0 %v3617
    %3896 = vmatpush.bf16.msra.mxu0 %v3613
    %3897 = vmatpush.bf16.msra.mxu0 %v3609
    %3898 = vmatpush.bf16.msra.mxu0 %v3605
    %3899 = vmatpush.bf16.msra.mxu0 %v3601
    %3900 = vmatmul.bf16.gmra.mxu0 %v3732
    %v3901 = vpop.f32.mrf.mxu0
    %v3902 = vadd.f32 %v3889, %v3901
    %v3903 = vpop.f32.mrf.mxu0
    %3904 = vdwg.mxu0
    %3905 = vmatpush.bf16.msra.mxu0 %v3661
    %3906 = vmatpush.bf16.msra.mxu0 %v3657
    %3907 = vmatpush.bf16.msra.mxu0 %v3653
    %3908 = vmatpush.bf16.msra.mxu0 %v3649
    %3909 = vmatpush.bf16.msra.mxu0 %v3645
    %3910 = vmatpush.bf16.msra.mxu0 %v3641
    %3911 = vmatpush.bf16.msra.mxu0 %v3637
    %3912 = vmatpush.bf16.msra.mxu0 %v3633
    %3913 = vmatmul.bf16.gmra.mxu0 %v3733
    %v3914 = vpop.f32.mrf.mxu0
    %v3915 = vadd.f32 %v3902, %v3914
    %v3916 = vpop.f32.mrf.mxu0
    %3917 = vdwg.mxu0
    %3918 = vmatpush.bf16.msra.mxu0 %v3693
    %3919 = vmatpush.bf16.msra.mxu0 %v3689
    %3920 = vmatpush.bf16.msra.mxu0 %v3685
    %3921 = vmatpush.bf16.msra.mxu0 %v3681
    %3922 = vmatpush.bf16.msra.mxu0 %v3677
    %3923 = vmatpush.bf16.msra.mxu0 %v3673
    %3924 = vmatpush.bf16.msra.mxu0 %v3669
    %3925 = vmatpush.bf16.msra.mxu0 %v3665
    %3926 = vmatmul.bf16.gmra.mxu0 %v3734
    %v3927 = vpop.f32.mrf.mxu0
    %v3928 = vadd.f32 %v3915, %v3927
    %v3929 = vpop.f32.mrf.mxu0
    %3930 = vdwg.mxu0
    %3931 = vmatpush.bf16.msra.mxu0 %v3725
    %3932 = vmatpush.bf16.msra.mxu0 %v3721
    %3933 = vmatpush.bf16.msra.mxu0 %v3717
    %3934 = vmatpush.bf16.msra.mxu0 %v3713
    %3935 = vmatpush.bf16.msra.mxu0 %v3709
    %3936 = vmatpush.bf16.msra.mxu0 %v3705
    %3937 = vmatpush.bf16.msra.mxu0 %v3701
    %3938 = vmatpush.bf16.msra.mxu0 %v3697
    %3939 = vmatmul.bf16.gmra.mxu0 %v3735
    %v3940 = vpop.f32.mrf.mxu0
    %v3941 = vadd.f32 %v3928, %v3940
    %v3942 = vpop.f32.mrf.mxu0
    %3943 = vdwg.mxu0
    %3944 = vmatpush.bf16.msra.mxu0 %v3502
    %3945 = vmatpush.bf16.msra.mxu0 %v3498
    %3946 = vmatpush.bf16.msra.mxu0 %v3494
    %3947 = vmatpush.bf16.msra.mxu0 %v3490
    %3948 = vmatpush.bf16.msra.mxu0 %v3486
    %3949 = vmatpush.bf16.msra.mxu0 %v3482
    %3950 = vmatpush.bf16.msra.mxu0 %v3478
    %3951 = vmatpush.bf16.msra.mxu0 %v3474
    %3952 = vmatmul.bf16.gmra.mxu0 %v3728
    %v3953 = vpop.f32.mrf.mxu0
    %v3954 = vadd.f32 0.0, %v3953
    %v3955 = vpop.f32.mrf.mxu0
    %3956 = vdwg.mxu0
    %3957 = vmatpush.bf16.msra.mxu0 %v3534
    %3958 = vmatpush.bf16.msra.mxu0 %v3530
    %3959 = vmatpush.bf16.msra.mxu0 %v3526
    %3960 = vmatpush.bf16.msra.mxu0 %v3522
    %3961 = vmatpush.bf16.msra.mxu0 %v3518
    %3962 = vmatpush.bf16.msra.mxu0 %v3514
    %3963 = vmatpush.bf16.msra.mxu0 %v3510
    %3964 = vmatpush.bf16.msra.mxu0 %v3506
    %3965 = vmatmul.bf16.gmra.mxu0 %v3729
    %v3966 = vpop.f32.mrf.mxu0
    %v3967 = vadd.f32 %v3954, %v3966
    %v3968 = vpop.f32.mrf.mxu0
    %3969 = vdwg.mxu0
    %3970 = vmatpush.bf16.msra.mxu0 %v3566
    %3971 = vmatpush.bf16.msra.mxu0 %v3562
    %3972 = vmatpush.bf16.msra.mxu0 %v3558
    %3973 = vmatpush.bf16.msra.mxu0 %v3554
    %3974 = vmatpush.bf16.msra.mxu0 %v3550
    %3975 = vmatpush.bf16.msra.mxu0 %v3546
    %3976 = vmatpush.bf16.msra.mxu0 %v3542
    %3977 = vmatpush.bf16.msra.mxu0 %v3538
    %3978 = vmatmul.bf16.gmra.mxu0 %v3730
    %v3979 = vpop.f32.mrf.mxu0
    %v3980 = vadd.f32 %v3967, %v3979
    %v3981 = vpop.f32.mrf.mxu0
    %3982 = vdwg.mxu0
    %3983 = vmatpush.bf16.msra.mxu0 %v3598
    %3984 = vmatpush.bf16.msra.mxu0 %v3594
    %3985 = vmatpush.bf16.msra.mxu0 %v3590
    %3986 = vmatpush.bf16.msra.mxu0 %v3586
    %3987 = vmatpush.bf16.msra.mxu0 %v3582
    %3988 = vmatpush.bf16.msra.mxu0 %v3578
    %3989 = vmatpush.bf16.msra.mxu0 %v3574
    %3990 = vmatpush.bf16.msra.mxu0 %v3570
    %3991 = vmatmul.bf16.gmra.mxu0 %v3731
    %v3992 = vpop.f32.mrf.mxu0
    %v3993 = vadd.f32 %v3980, %v3992
    %v3994 = vpop.f32.mrf.mxu0
    %3995 = vdwg.mxu0
    %3996 = vmatpush.bf16.msra.mxu0 %v3630
    %3997 = vmatpush.bf16.msra.mxu0 %v3626
    %3998 = vmatpush.bf16.msra.mxu0 %v3622
    %3999 = vmatpush.bf16.msra.mxu0 %v3618
    %4000 = vmatpush.bf16.msra.mxu0 %v3614
    %4001 = vmatpush.bf16.msra.mxu0 %v3610
    %4002 = vmatpush.bf16.msra.mxu0 %v3606
    %4003 = vmatpush.bf16.msra.mxu0 %v3602
    %4004 = vmatmul.bf16.gmra.mxu0 %v3732
    %v4005 = vpop.f32.mrf.mxu0
    %v4006 = vadd.f32 %v3993, %v4005
    %v4007 = vpop.f32.mrf.mxu0
    %4008 = vdwg.mxu0
    %4009 = vmatpush.bf16.msra.mxu0 %v3662
    %4010 = vmatpush.bf16.msra.mxu0 %v3658
    %4011 = vmatpush.bf16.msra.mxu0 %v3654
    %4012 = vmatpush.bf16.msra.mxu0 %v3650
    %4013 = vmatpush.bf16.msra.mxu0 %v3646
    %4014 = vmatpush.bf16.msra.mxu0 %v3642
    %4015 = vmatpush.bf16.msra.mxu0 %v3638
    %4016 = vmatpush.bf16.msra.mxu0 %v3634
    %4017 = vmatmul.bf16.gmra.mxu0 %v3733
    %v4018 = vpop.f32.mrf.mxu0
    %v4019 = vadd.f32 %v4006, %v4018
    %v4020 = vpop.f32.mrf.mxu0
    %4021 = vdwg.mxu0
    %4022 = vmatpush.bf16.msra.mxu0 %v3694
    %4023 = vmatpush.bf16.msra.mxu0 %v3690
    %4024 = vmatpush.bf16.msra.mxu0 %v3686
    %4025 = vmatpush.bf16.msra.mxu0 %v3682
    %4026 = vmatpush.bf16.msra.mxu0 %v3678
    %4027 = vmatpush.bf16.msra.mxu0 %v3674
    %4028 = vmatpush.bf16.msra.mxu0 %v3670
    %4029 = vmatpush.bf16.msra.mxu0 %v3666
    %4030 = vmatmul.bf16.gmra.mxu0 %v3734
    %v4031 = vpop.f32.mrf.mxu0
    %v4032 = vadd.f32 %v4019, %v4031
    %v4033 = vpop.f32.mrf.mxu0
    %4034 = vdwg.mxu0
    %4035 = vmatpush.bf16.msra.mxu0 %v3726
    %4036 = vmatpush.bf16.msra.mxu0 %v3722
    %4037 = vmatpush.bf16.msra.mxu0 %v3718
    %4038 = vmatpush.bf16.msra.mxu0 %v3714
    %4039 = vmatpush.bf16.msra.mxu0 %v3710
    %4040 = vmatpush.bf16.msra.mxu0 %v3706
    %4041 = vmatpush.bf16.msra.mxu0 %v3702
    %4042 = vmatpush.bf16.msra.mxu0 %v3698
    %4043 = vmatmul.bf16.gmra.mxu0 %v3735
    %v4044 = vpop.f32.mrf.mxu0
    %v4045 = vadd.f32 %v4032, %v4044
    %v4046 = vpop.f32.mrf.mxu0
    %4047 = vdwg.mxu0
    %4048 = vmatpush.bf16.msra.mxu0 %v3503
    %4049 = vmatpush.bf16.msra.mxu0 %v3499
    %4050 = vmatpush.bf16.msra.mxu0 %v3495
    %4051 = vmatpush.bf16.msra.mxu0 %v3491
    %4052 = vmatpush.bf16.msra.mxu0 %v3487
    %4053 = vmatpush.bf16.msra.mxu0 %v3483
    %4054 = vmatpush.bf16.msra.mxu0 %v3479
    %4055 = vmatpush.bf16.msra.mxu0 %v3475
    %4056 = vmatmul.bf16.gmra.mxu0 %v3728
    %v4057 = vpop.f32.mrf.mxu0
    %v4058 = vadd.f32 0.0, %v4057
    %v4059 = vpop.f32.mrf.mxu0
    %4060 = vdwg.mxu0
    %4061 = vmatpush.bf16.msra.mxu0 %v3535
    %4062 = vmatpush.bf16.msra.mxu0 %v3531
    %4063 = vmatpush.bf16.msra.mxu0 %v3527
    %4064 = vmatpush.bf16.msra.mxu0 %v3523
    %4065 = vmatpush.bf16.msra.mxu0 %v3519
    %4066 = vmatpush.bf16.msra.mxu0 %v3515
    %4067 = vmatpush.bf16.msra.mxu0 %v3511
    %4068 = vmatpush.bf16.msra.mxu0 %v3507
    %4069 = vmatmul.bf16.gmra.mxu0 %v3729
    %v4070 = vpop.f32.mrf.mxu0
    %v4071 = vadd.f32 %v4058, %v4070
    %v4072 = vpop.f32.mrf.mxu0
    %4073 = vdwg.mxu0
    %4074 = vmatpush.bf16.msra.mxu0 %v3567
    %4075 = vmatpush.bf16.msra.mxu0 %v3563
    %4076 = vmatpush.bf16.msra.mxu0 %v3559
    %4077 = vmatpush.bf16.msra.mxu0 %v3555
    %4078 = vmatpush.bf16.msra.mxu0 %v3551
    %4079 = vmatpush.bf16.msra.mxu0 %v3547
    %4080 = vmatpush.bf16.msra.mxu0 %v3543
    %4081 = vmatpush.bf16.msra.mxu0 %v3539
    %4082 = vmatmul.bf16.gmra.mxu0 %v3730
    %v4083 = vpop.f32.mrf.mxu0
    %v4084 = vadd.f32 %v4071, %v4083
    %v4085 = vpop.f32.mrf.mxu0
    %4086 = vdwg.mxu0
    %4087 = vmatpush.bf16.msra.mxu0 %v3599
    %4088 = vmatpush.bf16.msra.mxu0 %v3595
    %4089 = vmatpush.bf16.msra.mxu0 %v3591
    %4090 = vmatpush.bf16.msra.mxu0 %v3587
    %4091 = vmatpush.bf16.msra.mxu0 %v3583
    %4092 = vmatpush.bf16.msra.mxu0 %v3579
    %4093 = vmatpush.bf16.msra.mxu0 %v3575
    %4094 = vmatpush.bf16.msra.mxu0 %v3571
    %4095 = vmatmul.bf16.gmra.mxu0 %v3731
    %v4096 = vpop.f32.mrf.mxu0
    %v4097 = vadd.f32 %v4084, %v4096
    %v4098 = vpop.f32.mrf.mxu0
    %4099 = vdwg.mxu0
    %4100 = vmatpush.bf16.msra.mxu0 %v3631
    %4101 = vmatpush.bf16.msra.mxu0 %v3627
    %4102 = vmatpush.bf16.msra.mxu0 %v3623
    %4103 = vmatpush.bf16.msra.mxu0 %v3619
    %4104 = vmatpush.bf16.msra.mxu0 %v3615
    %4105 = vmatpush.bf16.msra.mxu0 %v3611
    %4106 = vmatpush.bf16.msra.mxu0 %v3607
    %4107 = vmatpush.bf16.msra.mxu0 %v3603
    %4108 = vmatmul.bf16.gmra.mxu0 %v3732
    %v4109 = vpop.f32.mrf.mxu0
    %v4110 = vadd.f32 %v4097, %v4109
    %v4111 = vpop.f32.mrf.mxu0
    %4112 = vdwg.mxu0
    %4113 = vmatpush.bf16.msra.mxu0 %v3663
    %4114 = vmatpush.bf16.msra.mxu0 %v3659
    %4115 = vmatpush.bf16.msra.mxu0 %v3655
    %4116 = vmatpush.bf16.msra.mxu0 %v3651
    %4117 = vmatpush.bf16.msra.mxu0 %v3647
    %4118 = vmatpush.bf16.msra.mxu0 %v3643
    %4119 = vmatpush.bf16.msra.mxu0 %v3639
    %4120 = vmatpush.bf16.msra.mxu0 %v3635
    %4121 = vmatmul.bf16.gmra.mxu0 %v3733
    %v4122 = vpop.f32.mrf.mxu0
    %v4123 = vadd.f32 %v4110, %v4122
    %v4124 = vpop.f32.mrf.mxu0
    %4125 = vdwg.mxu0
    %4126 = vmatpush.bf16.msra.mxu0 %v3695
    %4127 = vmatpush.bf16.msra.mxu0 %v3691
    %4128 = vmatpush.bf16.msra.mxu0 %v3687
    %4129 = vmatpush.bf16.msra.mxu0 %v3683
    %4130 = vmatpush.bf16.msra.mxu0 %v3679
    %4131 = vmatpush.bf16.msra.mxu0 %v3675
    %4132 = vmatpush.bf16.msra.mxu0 %v3671
    %4133 = vmatpush.bf16.msra.mxu0 %v3667
    %4134 = vmatmul.bf16.gmra.mxu0 %v3734
    %v4135 = vpop.f32.mrf.mxu0
    %v4136 = vadd.f32 %v4123, %v4135
    %v4137 = vpop.f32.mrf.mxu0
    %4138 = vdwg.mxu0
    %4139 = vmatpush.bf16.msra.mxu0 %v3727
    %4140 = vmatpush.bf16.msra.mxu0 %v3723
    %4141 = vmatpush.bf16.msra.mxu0 %v3719
    %4142 = vmatpush.bf16.msra.mxu0 %v3715
    %4143 = vmatpush.bf16.msra.mxu0 %v3711
    %4144 = vmatpush.bf16.msra.mxu0 %v3707
    %4145 = vmatpush.bf16.msra.mxu0 %v3703
    %4146 = vmatpush.bf16.msra.mxu0 %v3699
    %4147 = vmatmul.bf16.gmra.mxu0 %v3735
    %v4148 = vpop.f32.mrf.mxu0
    %v4149 = vadd.f32 %v4136, %v4148
    %v4150 = vpop.f32.mrf.mxu0
    %4151 = vdwg.mxu0
    %s4152 = scalar_lea.vmem [#allocation7], 67
    %v4153 = vld [vmem:[%s4152] ss:$8 sm:$0xf]
    %v4155 = vperm.slane %v4153, 0
    %v4156 = vperm.slane %v4153, 1
    %v4157 = vperm.slane %v4153, 2
    %v4158 = vperm.slane %v4153, 3
    %v4163 = vmul.f32 %v3837, %v4155
    %v4164 = vmul.f32 %v3941, %v4156
    %v4165 = vmul.f32 %v4045, %v4157
    %v4166 = vmul.f32 %v4149, %v4158
    %s4167 = scalar_lea.vmem [#allocation7], 64
    %v4168 = vld [vmem:[%s4167] ss:$8 sm:$0xf]
    %v4170 = vperm.slane %v4168, 0
    %v4171 = vperm.slane %v4168, 1
    %v4172 = vperm.slane %v4168, 2
    %v4173 = vperm.slane %v4168, 3
    %v4178 = vadd.f32 %v4163, %v4170
    %v4179 = vadd.f32 %v4164, %v4171
    %v4180 = vadd.f32 %v4165, %v4172
    %v4181 = vadd.f32 %v4166, %v4173
    %v4182 = vadd.f32 %v4178, %v4179
    %v4183 = vadd.f32 %v4182, %v4180
    %v4184 = vadd.f32 %v4183, %v4181
    %4185 = vadd.xlane.f32.xlu0 %v4184
    %v4186 = vpop.xlane.xlu0 %4185
    %v4187 = vmul.f32 %v4186, %v235
    %v4188 = vmul.f32 %v4178, %v4178
    %v4189 = vmul.f32 %v4179, %v4179
    %v4190 = vmul.f32 %v4180, %v4180
    %v4191 = vmul.f32 %v4181, %v4181
    %v4192 = vadd.f32 %v4188, %v4189
    %v4193 = vadd.f32 %v4192, %v4190
    %v4194 = vadd.f32 %v4193, %v4191
    %4195 = vadd.xlane.f32.xlu0 %v4194
    %v4196 = vpop.xlane.xlu0 %4195
    %v4197 = vmul.f32 %v4196, %v235
    %v4198 = vmul.f32 %v4187, %v4187
    %v4199 = vsub.f32 %v4197, %v4198
    %v4200 = vmax.f32 %v4199, 0.0
    %v4201 = vsub.f32 %v4178, %v4187
    %v4202 = vsub.f32 %v4179, %v4187
    %v4203 = vsub.f32 %v4180, %v4187
    %v4204 = vsub.f32 %v4181, %v4187
    %v4205 = vadd.f32 %v4200, 1e-05
    %v4206 = vrsqrt.pop %v4205
    %v4207 = vmul.f32 %v4206, %v4205
    %v4208 = vmul.f32 %v4207, %v4206
    %v4209 = vmul.f32 0.5, %v4208
    %v4210 = vsub.f32 1.5, %v4209
    %v4211 = vmul.f32 %v4206, %v4210
    %vm4212 = vweird.f32 %v4205
    %vm4213 = vweird.f32 %v4206
    %vm4214 = vmor %vm4212, %vm4213
    %v4215 = vsel %vm4214, %v4206, %v4211
    %v4216 = vmul.f32 %v4201, %v4215
    %v4217 = vmul.f32 %v4202, %v4215
    %v4218 = vmul.f32 %v4203, %v4215
    %v4219 = vmul.f32 %v4204, %v4215
    %s4220 = scalar_lea.vmem [#allocation7], 65
    %v4221 = vld [vmem:[%s4220] ss:$8 sm:$0xf]
    %v4223 = vperm.slane %v4221, 0
    %v4224 = vperm.slane %v4221, 1
    %v4225 = vperm.slane %v4221, 2
    %v4226 = vperm.slane %v4221, 3
    %v4231 = vmul.f32 %v4216, %v4223
    %v4232 = vmul.f32 %v4217, %v4224
    %v4233 = vmul.f32 %v4218, %v4225
    %v4234 = vmul.f32 %v4219, %v4226
    %s4235 = scalar_lea.vmem [#allocation7], 66
    %v4236 = vld [vmem:[%s4235] ss:$8 sm:$0xf]
    %v4238 = vperm.slane %v4236, 0
    %v4239 = vperm.slane %v4236, 1
    %v4240 = vperm.slane %v4236, 2
    %v4241 = vperm.slane %v4236, 3
    %v4246 = vadd.f32 %v4231, %v4238
    %v4247 = vadd.f32 %v4232, %v4239
    %v4248 = vadd.f32 %v4233, %v4240
    %v4249 = vadd.f32 %v4234, %v4241
    %v4250 = vmax.f32 %v4246, 0.0
    %v4251 = vmax.f32 %v4247, 0.0
    %v4252 = vmax.f32 %v4248, 0.0
    %v4253 = vmax.f32 %v4249, 0.0
    %v4254 = vld [vmem:[#allocation6] sm:$0xff]
    %v4255 = vld [vmem:[#allocation6 + $0x8] sm:$0xff]
    %v4256 = vld [vmem:[#allocation6 + $0x10] sm:$0xff]
    %v4257 = vld [vmem:[#allocation6 + $0x18] sm:$0xff]
    %v4258 = vld [vmem:[#allocation6 + $0x20] sm:$0xff]
    %v4259 = vld [vmem:[#allocation6 + $0x28] sm:$0xff]
    %v4260 = vld [vmem:[#allocation6 + $0x30] sm:$0xff]
    %v4261 = vld [vmem:[#allocation6 + $0x38] sm:$0xff]
    %v4262 = vld [vmem:[#allocation6 + $0x40] sm:$0xff]
    %v4263 = vld [vmem:[#allocation6 + $0x48] sm:$0xff]
    %v4264 = vld [vmem:[#allocation6 + $0x50] sm:$0xff]
    %v4265 = vld [vmem:[#allocation6 + $0x58] sm:$0xff]
    %v4266 = vld [vmem:[#allocation6 + $0x60] sm:$0xff]
    %v4267 = vld [vmem:[#allocation6 + $0x68] sm:$0xff]
    %v4268 = vld [vmem:[#allocation6 + $0x70] sm:$0xff]
    %v4269 = vld [vmem:[#allocation6 + $0x78] sm:$0xff]
    %v4270 = vld [vmem:[#allocation6 + $0x80] sm:$0xff]
    %v4271 = vld [vmem:[#allocation6 + $0x88] sm:$0xff]
    %v4272 = vld [vmem:[#allocation6 + $0x90] sm:$0xff]
    %v4273 = vld [vmem:[#allocation6 + $0x98] sm:$0xff]
    %v4274 = vld [vmem:[#allocation6 + $0xa0] sm:$0xff]
    %v4275 = vld [vmem:[#allocation6 + $0xa8] sm:$0xff]
    %v4276 = vld [vmem:[#allocation6 + $0xb0] sm:$0xff]
    %v4277 = vld [vmem:[#allocation6 + $0xb8] sm:$0xff]
    %v4278 = vld [vmem:[#allocation6 + $0xc0] sm:$0xff]
    %v4279 = vld [vmem:[#allocation6 + $0xc8] sm:$0xff]
    %v4280 = vld [vmem:[#allocation6 + $0xd0] sm:$0xff]
    %v4281 = vld [vmem:[#allocation6 + $0xd8] sm:$0xff]
    %v4282 = vld [vmem:[#allocation6 + $0xe0] sm:$0xff]
    %v4283 = vld [vmem:[#allocation6 + $0xe8] sm:$0xff]
    %v4284 = vld [vmem:[#allocation6 + $0xf0] sm:$0xff]
    %v4285 = vld [vmem:[#allocation6 + $0xf8] sm:$0xff]
    %v4286 = vunpack.c.0.s8 %v4254
    %v4287 = vunpack.c.0.s8 %v4255
    %v4288 = vunpack.c.1.s8 %v4254
    %v4289 = vunpack.c.1.s8 %v4255
    %v4290 = vunpack.c.2.s8 %v4254
    %v4291 = vunpack.c.2.s8 %v4255
    %v4292 = vunpack.c.3.s8 %v4254
    %v4293 = vunpack.c.3.s8 %v4255
    %v4294 = vunpack.c.0.s8 %v4256
    %v4295 = vunpack.c.0.s8 %v4257
    %v4296 = vunpack.c.1.s8 %v4256
    %v4297 = vunpack.c.1.s8 %v4257
    %v4298 = vunpack.c.2.s8 %v4256
    %v4299 = vunpack.c.2.s8 %v4257
    %v4300 = vunpack.c.3.s8 %v4256
    %v4301 = vunpack.c.3.s8 %v4257
    %v4302 = vunpack.c.0.s8 %v4258
    %v4303 = vunpack.c.0.s8 %v4259
    %v4304 = vunpack.c.1.s8 %v4258
    %v4305 = vunpack.c.1.s8 %v4259
    %v4306 = vunpack.c.2.s8 %v4258
    %v4307 = vunpack.c.2.s8 %v4259
    %v4308 = vunpack.c.3.s8 %v4258
    %v4309 = vunpack.c.3.s8 %v4259
    %v4310 = vunpack.c.0.s8 %v4260
    %v4311 = vunpack.c.0.s8 %v4261
    %v4312 = vunpack.c.1.s8 %v4260
    %v4313 = vunpack.c.1.s8 %v4261
    %v4314 = vunpack.c.2.s8 %v4260
    %v4315 = vunpack.c.2.s8 %v4261
    %v4316 = vunpack.c.3.s8 %v4260
    %v4317 = vunpack.c.3.s8 %v4261
    %v4318 = vunpack.c.0.s8 %v4262
    %v4319 = vunpack.c.0.s8 %v4263
    %v4320 = vunpack.c.1.s8 %v4262
    %v4321 = vunpack.c.1.s8 %v4263
    %v4322 = vunpack.c.2.s8 %v4262
    %v4323 = vunpack.c.2.s8 %v4263
    %v4324 = vunpack.c.3.s8 %v4262
    %v4325 = vunpack.c.3.s8 %v4263
    %v4326 = vunpack.c.0.s8 %v4264
    %v4327 = vunpack.c.0.s8 %v4265
    %v4328 = vunpack.c.1.s8 %v4264
    %v4329 = vunpack.c.1.s8 %v4265
    %v4330 = vunpack.c.2.s8 %v4264
    %v4331 = vunpack.c.2.s8 %v4265
    %v4332 = vunpack.c.3.s8 %v4264
    %v4333 = vunpack.c.3.s8 %v4265
    %v4334 = vunpack.c.0.s8 %v4266
    %v4335 = vunpack.c.0.s8 %v4267
    %v4336 = vunpack.c.1.s8 %v4266
    %v4337 = vunpack.c.1.s8 %v4267
    %v4338 = vunpack.c.2.s8 %v4266
    %v4339 = vunpack.c.2.s8 %v4267
    %v4340 = vunpack.c.3.s8 %v4266
    %v4341 = vunpack.c.3.s8 %v4267
    %v4342 = vunpack.c.0.s8 %v4268
    %v4343 = vunpack.c.0.s8 %v4269
    %v4344 = vunpack.c.1.s8 %v4268
    %v4345 = vunpack.c.1.s8 %v4269
    %v4346 = vunpack.c.2.s8 %v4268
    %v4347 = vunpack.c.2.s8 %v4269
    %v4348 = vunpack.c.3.s8 %v4268
    %v4349 = vunpack.c.3.s8 %v4269
    %v4350 = vunpack.c.0.s8 %v4270
    %v4351 = vunpack.c.0.s8 %v4271
    %v4352 = vunpack.c.1.s8 %v4270
    %v4353 = vunpack.c.1.s8 %v4271
    %v4354 = vunpack.c.2.s8 %v4270
    %v4355 = vunpack.c.2.s8 %v4271
    %v4356 = vunpack.c.3.s8 %v4270
    %v4357 = vunpack.c.3.s8 %v4271
    %v4358 = vunpack.c.0.s8 %v4272
    %v4359 = vunpack.c.0.s8 %v4273
    %v4360 = vunpack.c.1.s8 %v4272
    %v4361 = vunpack.c.1.s8 %v4273
    %v4362 = vunpack.c.2.s8 %v4272
    %v4363 = vunpack.c.2.s8 %v4273
    %v4364 = vunpack.c.3.s8 %v4272
    %v4365 = vunpack.c.3.s8 %v4273
    %v4366 = vunpack.c.0.s8 %v4274
    %v4367 = vunpack.c.0.s8 %v4275
    %v4368 = vunpack.c.1.s8 %v4274
    %v4369 = vunpack.c.1.s8 %v4275
    %v4370 = vunpack.c.2.s8 %v4274
    %v4371 = vunpack.c.2.s8 %v4275
    %v4372 = vunpack.c.3.s8 %v4274
    %v4373 = vunpack.c.3.s8 %v4275
    %v4374 = vunpack.c.0.s8 %v4276
    %v4375 = vunpack.c.0.s8 %v4277
    %v4376 = vunpack.c.1.s8 %v4276
    %v4377 = vunpack.c.1.s8 %v4277
    %v4378 = vunpack.c.2.s8 %v4276
    %v4379 = vunpack.c.2.s8 %v4277
    %v4380 = vunpack.c.3.s8 %v4276
    %v4381 = vunpack.c.3.s8 %v4277
    %v4382 = vunpack.c.0.s8 %v4278
    %v4383 = vunpack.c.0.s8 %v4279
    %v4384 = vunpack.c.1.s8 %v4278
    %v4385 = vunpack.c.1.s8 %v4279
    %v4386 = vunpack.c.2.s8 %v4278
    %v4387 = vunpack.c.2.s8 %v4279
    %v4388 = vunpack.c.3.s8 %v4278
    %v4389 = vunpack.c.3.s8 %v4279
    %v4390 = vunpack.c.0.s8 %v4280
    %v4391 = vunpack.c.0.s8 %v4281
    %v4392 = vunpack.c.1.s8 %v4280
    %v4393 = vunpack.c.1.s8 %v4281
    %v4394 = vunpack.c.2.s8 %v4280
    %v4395 = vunpack.c.2.s8 %v4281
    %v4396 = vunpack.c.3.s8 %v4280
    %v4397 = vunpack.c.3.s8 %v4281
    %v4398 = vunpack.c.0.s8 %v4282
    %v4399 = vunpack.c.0.s8 %v4283
    %v4400 = vunpack.c.1.s8 %v4282
    %v4401 = vunpack.c.1.s8 %v4283
    %v4402 = vunpack.c.2.s8 %v4282
    %v4403 = vunpack.c.2.s8 %v4283
    %v4404 = vunpack.c.3.s8 %v4282
    %v4405 = vunpack.c.3.s8 %v4283
    %v4406 = vunpack.c.0.s8 %v4284
    %v4407 = vunpack.c.0.s8 %v4285
    %v4408 = vunpack.c.1.s8 %v4284
    %v4409 = vunpack.c.1.s8 %v4285
    %v4410 = vunpack.c.2.s8 %v4284
    %v4411 = vunpack.c.2.s8 %v4285
    %v4412 = vunpack.c.3.s8 %v4284
    %v4413 = vunpack.c.3.s8 %v4285
    %v4414 = vcvt.s32.f32 %v4286
    %v4415 = vcvt.s32.f32 %v4287
    %v4416 = vcvt.s32.f32 %v4288
    %v4417 = vcvt.s32.f32 %v4289
    %v4418 = vcvt.s32.f32 %v4290
    %v4419 = vcvt.s32.f32 %v4291
    %v4420 = vcvt.s32.f32 %v4292
    %v4421 = vcvt.s32.f32 %v4293
    %v4422 = vcvt.s32.f32 %v4294
    %v4423 = vcvt.s32.f32 %v4295
    %v4424 = vcvt.s32.f32 %v4296
    %v4425 = vcvt.s32.f32 %v4297
    %v4426 = vcvt.s32.f32 %v4298
    %v4427 = vcvt.s32.f32 %v4299
    %v4428 = vcvt.s32.f32 %v4300
    %v4429 = vcvt.s32.f32 %v4301
    %v4430 = vcvt.s32.f32 %v4302
    %v4431 = vcvt.s32.f32 %v4303
    %v4432 = vcvt.s32.f32 %v4304
    %v4433 = vcvt.s32.f32 %v4305
    %v4434 = vcvt.s32.f32 %v4306
    %v4435 = vcvt.s32.f32 %v4307
    %v4436 = vcvt.s32.f32 %v4308
    %v4437 = vcvt.s32.f32 %v4309
    %v4438 = vcvt.s32.f32 %v4310
    %v4439 = vcvt.s32.f32 %v4311
    %v4440 = vcvt.s32.f32 %v4312
    %v4441 = vcvt.s32.f32 %v4313
    %v4442 = vcvt.s32.f32 %v4314
    %v4443 = vcvt.s32.f32 %v4315
    %v4444 = vcvt.s32.f32 %v4316
    %v4445 = vcvt.s32.f32 %v4317
    %v4446 = vcvt.s32.f32 %v4318
    %v4447 = vcvt.s32.f32 %v4319
    %v4448 = vcvt.s32.f32 %v4320
    %v4449 = vcvt.s32.f32 %v4321
    %v4450 = vcvt.s32.f32 %v4322
    %v4451 = vcvt.s32.f32 %v4323
    %v4452 = vcvt.s32.f32 %v4324
    %v4453 = vcvt.s32.f32 %v4325
    %v4454 = vcvt.s32.f32 %v4326
    %v4455 = vcvt.s32.f32 %v4327
    %v4456 = vcvt.s32.f32 %v4328
    %v4457 = vcvt.s32.f32 %v4329
    %v4458 = vcvt.s32.f32 %v4330
    %v4459 = vcvt.s32.f32 %v4331
    %v4460 = vcvt.s32.f32 %v4332
    %v4461 = vcvt.s32.f32 %v4333
    %v4462 = vcvt.s32.f32 %v4334
    %v4463 = vcvt.s32.f32 %v4335
    %v4464 = vcvt.s32.f32 %v4336
    %v4465 = vcvt.s32.f32 %v4337
    %v4466 = vcvt.s32.f32 %v4338
    %v4467 = vcvt.s32.f32 %v4339
    %v4468 = vcvt.s32.f32 %v4340
    %v4469 = vcvt.s32.f32 %v4341
    %v4470 = vcvt.s32.f32 %v4342
    %v4471 = vcvt.s32.f32 %v4343
    %v4472 = vcvt.s32.f32 %v4344
    %v4473 = vcvt.s32.f32 %v4345
    %v4474 = vcvt.s32.f32 %v4346
    %v4475 = vcvt.s32.f32 %v4347
    %v4476 = vcvt.s32.f32 %v4348
    %v4477 = vcvt.s32.f32 %v4349
    %v4478 = vcvt.s32.f32 %v4350
    %v4479 = vcvt.s32.f32 %v4351
    %v4480 = vcvt.s32.f32 %v4352
    %v4481 = vcvt.s32.f32 %v4353
    %v4482 = vcvt.s32.f32 %v4354
    %v4483 = vcvt.s32.f32 %v4355
    %v4484 = vcvt.s32.f32 %v4356
    %v4485 = vcvt.s32.f32 %v4357
    %v4486 = vcvt.s32.f32 %v4358
    %v4487 = vcvt.s32.f32 %v4359
    %v4488 = vcvt.s32.f32 %v4360
    %v4489 = vcvt.s32.f32 %v4361
    %v4490 = vcvt.s32.f32 %v4362
    %v4491 = vcvt.s32.f32 %v4363
    %v4492 = vcvt.s32.f32 %v4364
    %v4493 = vcvt.s32.f32 %v4365
    %v4494 = vcvt.s32.f32 %v4366
    %v4495 = vcvt.s32.f32 %v4367
    %v4496 = vcvt.s32.f32 %v4368
    %v4497 = vcvt.s32.f32 %v4369
    %v4498 = vcvt.s32.f32 %v4370
    %v4499 = vcvt.s32.f32 %v4371
    %v4500 = vcvt.s32.f32 %v4372
    %v4501 = vcvt.s32.f32 %v4373
    %v4502 = vcvt.s32.f32 %v4374
    %v4503 = vcvt.s32.f32 %v4375
    %v4504 = vcvt.s32.f32 %v4376
    %v4505 = vcvt.s32.f32 %v4377
    %v4506 = vcvt.s32.f32 %v4378
    %v4507 = vcvt.s32.f32 %v4379
    %v4508 = vcvt.s32.f32 %v4380
    %v4509 = vcvt.s32.f32 %v4381
    %v4510 = vcvt.s32.f32 %v4382
    %v4511 = vcvt.s32.f32 %v4383
    %v4512 = vcvt.s32.f32 %v4384
    %v4513 = vcvt.s32.f32 %v4385
    %v4514 = vcvt.s32.f32 %v4386
    %v4515 = vcvt.s32.f32 %v4387
    %v4516 = vcvt.s32.f32 %v4388
    %v4517 = vcvt.s32.f32 %v4389
    %v4518 = vcvt.s32.f32 %v4390
    %v4519 = vcvt.s32.f32 %v4391
    %v4520 = vcvt.s32.f32 %v4392
    %v4521 = vcvt.s32.f32 %v4393
    %v4522 = vcvt.s32.f32 %v4394
    %v4523 = vcvt.s32.f32 %v4395
    %v4524 = vcvt.s32.f32 %v4396
    %v4525 = vcvt.s32.f32 %v4397
    %v4526 = vcvt.s32.f32 %v4398
    %v4527 = vcvt.s32.f32 %v4399
    %v4528 = vcvt.s32.f32 %v4400
    %v4529 = vcvt.s32.f32 %v4401
    %v4530 = vcvt.s32.f32 %v4402
    %v4531 = vcvt.s32.f32 %v4403
    %v4532 = vcvt.s32.f32 %v4404
    %v4533 = vcvt.s32.f32 %v4405
    %v4534 = vcvt.s32.f32 %v4406
    %v4535 = vcvt.s32.f32 %v4407
    %v4536 = vcvt.s32.f32 %v4408
    %v4537 = vcvt.s32.f32 %v4409
    %v4538 = vcvt.s32.f32 %v4410
    %v4539 = vcvt.s32.f32 %v4411
    %v4540 = vcvt.s32.f32 %v4412
    %v4541 = vcvt.s32.f32 %v4413
    %v4542 = vpack.c.bf16 %v4416, %v4414
    %v4543 = vpack.c.bf16 %v4417, %v4415
    %v4544 = vpack.c.bf16 %v4420, %v4418
    %v4545 = vpack.c.bf16 %v4421, %v4419
    %v4546 = vpack.c.bf16 %v4424, %v4422
    %v4547 = vpack.c.bf16 %v4425, %v4423
    %v4548 = vpack.c.bf16 %v4428, %v4426
    %v4549 = vpack.c.bf16 %v4429, %v4427
    %v4550 = vpack.c.bf16 %v4432, %v4430
    %v4551 = vpack.c.bf16 %v4433, %v4431
    %v4552 = vpack.c.bf16 %v4436, %v4434
    %v4553 = vpack.c.bf16 %v4437, %v4435
    %v4554 = vpack.c.bf16 %v4440, %v4438
    %v4555 = vpack.c.bf16 %v4441, %v4439
    %v4556 = vpack.c.bf16 %v4444, %v4442
    %v4557 = vpack.c.bf16 %v4445, %v4443
    %v4558 = vpack.c.bf16 %v4448, %v4446
    %v4559 = vpack.c.bf16 %v4449, %v4447
    %v4560 = vpack.c.bf16 %v4452, %v4450
    %v4561 = vpack.c.bf16 %v4453, %v4451
    %v4562 = vpack.c.bf16 %v4456, %v4454
    %v4563 = vpack.c.bf16 %v4457, %v4455
    %v4564 = vpack.c.bf16 %v4460, %v4458
    %v4565 = vpack.c.bf16 %v4461, %v4459
    %v4566 = vpack.c.bf16 %v4464, %v4462
    %v4567 = vpack.c.bf16 %v4465, %v4463
    %v4568 = vpack.c.bf16 %v4468, %v4466
    %v4569 = vpack.c.bf16 %v4469, %v4467
    %v4570 = vpack.c.bf16 %v4472, %v4470
    %v4571 = vpack.c.bf16 %v4473, %v4471
    %v4572 = vpack.c.bf16 %v4476, %v4474
    %v4573 = vpack.c.bf16 %v4477, %v4475
    %v4574 = vpack.c.bf16 %v4480, %v4478
    %v4575 = vpack.c.bf16 %v4481, %v4479
    %v4576 = vpack.c.bf16 %v4484, %v4482
    %v4577 = vpack.c.bf16 %v4485, %v4483
    %v4578 = vpack.c.bf16 %v4488, %v4486
    %v4579 = vpack.c.bf16 %v4489, %v4487
    %v4580 = vpack.c.bf16 %v4492, %v4490
    %v4581 = vpack.c.bf16 %v4493, %v4491
    %v4582 = vpack.c.bf16 %v4496, %v4494
    %v4583 = vpack.c.bf16 %v4497, %v4495
    %v4584 = vpack.c.bf16 %v4500, %v4498
    %v4585 = vpack.c.bf16 %v4501, %v4499
    %v4586 = vpack.c.bf16 %v4504, %v4502
    %v4587 = vpack.c.bf16 %v4505, %v4503
    %v4588 = vpack.c.bf16 %v4508, %v4506
    %v4589 = vpack.c.bf16 %v4509, %v4507
    %v4590 = vpack.c.bf16 %v4512, %v4510
    %v4591 = vpack.c.bf16 %v4513, %v4511
    %v4592 = vpack.c.bf16 %v4516, %v4514
    %v4593 = vpack.c.bf16 %v4517, %v4515
    %v4594 = vpack.c.bf16 %v4520, %v4518
    %v4595 = vpack.c.bf16 %v4521, %v4519
    %v4596 = vpack.c.bf16 %v4524, %v4522
    %v4597 = vpack.c.bf16 %v4525, %v4523
    %v4598 = vpack.c.bf16 %v4528, %v4526
    %v4599 = vpack.c.bf16 %v4529, %v4527
    %v4600 = vpack.c.bf16 %v4532, %v4530
    %v4601 = vpack.c.bf16 %v4533, %v4531
    %v4602 = vpack.c.bf16 %v4536, %v4534
    %v4603 = vpack.c.bf16 %v4537, %v4535
    %v4604 = vpack.c.bf16 %v4540, %v4538
    %v4605 = vpack.c.bf16 %v4541, %v4539
    %v4606 = vpack.c.bf16 %v4250, %v4250
    %v4607 = vpack.c.bf16 %v4251, %v4251
    %v4608 = vpack.c.bf16 %v4252, %v4252
    %v4609 = vpack.c.bf16 %v4253, %v4253
    %4610 = vmatpush.bf16.msra.mxu0 %v4556
    %4611 = vmatpush.bf16.msra.mxu0 %v4554
    %4612 = vmatpush.bf16.msra.mxu0 %v4552
    %4613 = vmatpush.bf16.msra.mxu0 %v4550
    %4614 = vmatpush.bf16.msra.mxu0 %v4548
    %4615 = vmatpush.bf16.msra.mxu0 %v4546
    %4616 = vmatpush.bf16.msra.mxu0 %v4544
    %4617 = vmatpush.bf16.msra.mxu0 %v4542
    %4618 = vmatmul.bf16.gmra.mxu0 %v4606
    %v4619 = vpop.f32.mrf.mxu0
    %v4620 = vadd.f32 0.0, %v4619
    %v4621 = vpop.f32.mrf.mxu0
    %4622 = vdwg.mxu0
    %4623 = vmatpush.bf16.msra.mxu0 %v4572
    %4624 = vmatpush.bf16.msra.mxu0 %v4570
    %4625 = vmatpush.bf16.msra.mxu0 %v4568
    %4626 = vmatpush.bf16.msra.mxu0 %v4566
    %4627 = vmatpush.bf16.msra.mxu0 %v4564
    %4628 = vmatpush.bf16.msra.mxu0 %v4562
    %4629 = vmatpush.bf16.msra.mxu0 %v4560
    %4630 = vmatpush.bf16.msra.mxu0 %v4558
    %4631 = vmatmul.bf16.gmra.mxu0 %v4607
    %v4632 = vpop.f32.mrf.mxu0
    %v4633 = vadd.f32 %v4620, %v4632
    %v4634 = vpop.f32.mrf.mxu0
    %4635 = vdwg.mxu0
    %4636 = vmatpush.bf16.msra.mxu0 %v4588
    %4637 = vmatpush.bf16.msra.mxu0 %v4586
    %4638 = vmatpush.bf16.msra.mxu0 %v4584
    %4639 = vmatpush.bf16.msra.mxu0 %v4582
    %4640 = vmatpush.bf16.msra.mxu0 %v4580
    %4641 = vmatpush.bf16.msra.mxu0 %v4578
    %4642 = vmatpush.bf16.msra.mxu0 %v4576
    %4643 = vmatpush.bf16.msra.mxu0 %v4574
    %4644 = vmatmul.bf16.gmra.mxu0 %v4608
    %v4645 = vpop.f32.mrf.mxu0
    %v4646 = vadd.f32 %v4633, %v4645
    %v4647 = vpop.f32.mrf.mxu0
    %4648 = vdwg.mxu0
    %4649 = vmatpush.bf16.msra.mxu0 %v4604
    %4650 = vmatpush.bf16.msra.mxu0 %v4602
    %4651 = vmatpush.bf16.msra.mxu0 %v4600
    %4652 = vmatpush.bf16.msra.mxu0 %v4598
    %4653 = vmatpush.bf16.msra.mxu0 %v4596
    %4654 = vmatpush.bf16.msra.mxu0 %v4594
    %4655 = vmatpush.bf16.msra.mxu0 %v4592
    %4656 = vmatpush.bf16.msra.mxu0 %v4590
    %4657 = vmatmul.bf16.gmra.mxu0 %v4609
    %v4658 = vpop.f32.mrf.mxu0
    %v4659 = vadd.f32 %v4646, %v4658
    %v4660 = vpop.f32.mrf.mxu0
    %4661 = vdwg.mxu0
    %4662 = vmatpush.bf16.msra.mxu0 %v4557
    %4663 = vmatpush.bf16.msra.mxu0 %v4555
    %4664 = vmatpush.bf16.msra.mxu0 %v4553
    %4665 = vmatpush.bf16.msra.mxu0 %v4551
    %4666 = vmatpush.bf16.msra.mxu0 %v4549
    %4667 = vmatpush.bf16.msra.mxu0 %v4547
    %4668 = vmatpush.bf16.msra.mxu0 %v4545
    %4669 = vmatpush.bf16.msra.mxu0 %v4543
    %4670 = vmatmul.bf16.gmra.mxu0 %v4606
    %v4671 = vpop.f32.mrf.mxu0
    %v4672 = vadd.f32 0.0, %v4671
    %v4673 = vpop.f32.mrf.mxu0
    %4674 = vdwg.mxu0
    %4675 = vmatpush.bf16.msra.mxu0 %v4573
    %4676 = vmatpush.bf16.msra.mxu0 %v4571
    %4677 = vmatpush.bf16.msra.mxu0 %v4569
    %4678 = vmatpush.bf16.msra.mxu0 %v4567
    %4679 = vmatpush.bf16.msra.mxu0 %v4565
    %4680 = vmatpush.bf16.msra.mxu0 %v4563
    %4681 = vmatpush.bf16.msra.mxu0 %v4561
    %4682 = vmatpush.bf16.msra.mxu0 %v4559
    %4683 = vmatmul.bf16.gmra.mxu0 %v4607
    %v4684 = vpop.f32.mrf.mxu0
    %v4685 = vadd.f32 %v4672, %v4684
    %v4686 = vpop.f32.mrf.mxu0
    %4687 = vdwg.mxu0
    %4688 = vmatpush.bf16.msra.mxu0 %v4589
    %4689 = vmatpush.bf16.msra.mxu0 %v4587
    %4690 = vmatpush.bf16.msra.mxu0 %v4585
    %4691 = vmatpush.bf16.msra.mxu0 %v4583
    %4692 = vmatpush.bf16.msra.mxu0 %v4581
    %4693 = vmatpush.bf16.msra.mxu0 %v4579
    %4694 = vmatpush.bf16.msra.mxu0 %v4577
    %4695 = vmatpush.bf16.msra.mxu0 %v4575
    %4696 = vmatmul.bf16.gmra.mxu0 %v4608
    %v4697 = vpop.f32.mrf.mxu0
    %v4698 = vadd.f32 %v4685, %v4697
    %v4699 = vpop.f32.mrf.mxu0
    %4700 = vdwg.mxu0
    %4701 = vmatpush.bf16.msra.mxu0 %v4605
    %4702 = vmatpush.bf16.msra.mxu0 %v4603
    %4703 = vmatpush.bf16.msra.mxu0 %v4601
    %4704 = vmatpush.bf16.msra.mxu0 %v4599
    %4705 = vmatpush.bf16.msra.mxu0 %v4597
    %4706 = vmatpush.bf16.msra.mxu0 %v4595
    %4707 = vmatpush.bf16.msra.mxu0 %v4593
    %4708 = vmatpush.bf16.msra.mxu0 %v4591
    %4709 = vmatmul.bf16.gmra.mxu0 %v4609
    %v4710 = vpop.f32.mrf.mxu0
    %v4711 = vadd.f32 %v4698, %v4710
    %v4712 = vpop.f32.mrf.mxu0
    %4713 = vdwg.mxu0
    %s4714 = scalar_lea.vmem [#allocation7], 71
    %v4715 = vld [vmem:[%s4714] ss:$8 sm:$0x3]
    %v4717 = vperm.slane %v4715, 0
    %v4718 = vperm.slane %v4715, 1
    %v4721 = vmul.f32 %v4659, %v4717
    %v4722 = vmul.f32 %v4711, %v4718
    %s4723 = scalar_lea.vmem [#allocation7], 68
    %v4724 = vld [vmem:[%s4723] ss:$8 sm:$0x3]
    %v4726 = vperm.slane %v4724, 0
    %v4727 = vperm.slane %v4724, 1
    %v4730 = vadd.f32 %v4721, %v4726
    %v4731 = vadd.f32 %v4722, %v4727
    %v4732 = vadd.f32 %v4730, %v4731
    %4733 = vadd.xlane.f32.xlu0 %v4732
    %v4734 = vpop.xlane.xlu0 %4733
    %v4735 = vrcp.pop 256.0
    %v4736 = vmul.f32 256.0, %v4735
    %v4737 = vsub.f32 1.0, %v4736
    %v4738 = vmul.f32 %v4735, %v4737
    %v4739 = vadd.f32 %v4735, %v4738
    %vm4740 = vweird.f32 %v4735
    %v4741 = vsel %vm4740, %v4735, %v4739
    %v4742 = vmul.f32 %v4734, %v4741
    %v4743 = vmul.f32 %v4730, %v4730
    %v4744 = vmul.f32 %v4731, %v4731
    %v4745 = vadd.f32 %v4743, %v4744
    %4746 = vadd.xlane.f32.xlu0 %v4745
    %v4747 = vpop.xlane.xlu0 %4746
    %v4748 = vmul.f32 %v4747, %v4741
    %v4749 = vmul.f32 %v4742, %v4742
    %v4750 = vsub.f32 %v4748, %v4749
    %v4751 = vmax.f32 %v4750, 0.0
    %v4752 = vsub.f32 %v4730, %v4742
    %v4753 = vsub.f32 %v4731, %v4742
    %v4754 = vadd.f32 %v4751, 1e-05
    %v4755 = vrsqrt.pop %v4754
    %v4756 = vmul.f32 %v4755, %v4754
    %v4757 = vmul.f32 %v4756, %v4755
    %v4758 = vmul.f32 0.5, %v4757
    %v4759 = vsub.f32 1.5, %v4758
    %v4760 = vmul.f32 %v4755, %v4759
    %vm4761 = vweird.f32 %v4754
    %vm4762 = vweird.f32 %v4755
    %vm4763 = vmor %vm4761, %vm4762
    %v4764 = vsel %vm4763, %v4755, %v4760
    %v4765 = vmul.f32 %v4752, %v4764
    %v4766 = vmul.f32 %v4753, %v4764
    %s4767 = scalar_lea.vmem [#allocation7], 69
    %v4768 = vld [vmem:[%s4767] ss:$8 sm:$0x3]
    %v4770 = vperm.slane %v4768, 0
    %v4771 = vperm.slane %v4768, 1
    %v4774 = vmul.f32 %v4765, %v4770
    %v4775 = vmul.f32 %v4766, %v4771
    %s4776 = scalar_lea.vmem [#allocation7], 70
    %v4777 = vld [vmem:[%s4776] ss:$8 sm:$0x3]
    %v4779 = vperm.slane %v4777, 0
    %v4780 = vperm.slane %v4777, 1
    %v4783 = vadd.f32 %v4774, %v4779
    %v4784 = vadd.f32 %v4775, %v4780
    %v4785 = vmax.f32 %v4783, 0.0
    %v4786 = vmax.f32 %v4784, 0.0
    %v4787 = vld [vmem:[%s5] sm:$0xff]
    %v4788 = vld [vmem:[%s5 + $0x8] sm:$0xff]
    %v4789 = vld [vmem:[%s5 + $0x10] sm:$0xff]
    %v4790 = vld [vmem:[%s5 + $0x18] sm:$0xff]
    %v4791 = vld [vmem:[%s5 + $0x20] sm:$0xff]
    %v4792 = vld [vmem:[%s5 + $0x28] sm:$0xff]
    %v4793 = vld [vmem:[%s5 + $0x30] sm:$0xff]
    %v4794 = vld [vmem:[%s5 + $0x38] sm:$0xff]
    %v4795 = vunpack.c.0.s8 %v4787
    %v4796 = vunpack.c.1.s8 %v4787
    %v4797 = vunpack.c.2.s8 %v4787
    %v4798 = vunpack.c.3.s8 %v4787
    %v4799 = vunpack.c.0.s8 %v4788
    %v4800 = vunpack.c.1.s8 %v4788
    %v4801 = vunpack.c.2.s8 %v4788
    %v4802 = vunpack.c.3.s8 %v4788
    %v4803 = vunpack.c.0.s8 %v4789
    %v4804 = vunpack.c.1.s8 %v4789
    %v4805 = vunpack.c.2.s8 %v4789
    %v4806 = vunpack.c.3.s8 %v4789
    %v4807 = vunpack.c.0.s8 %v4790
    %v4808 = vunpack.c.1.s8 %v4790
    %v4809 = vunpack.c.2.s8 %v4790
    %v4810 = vunpack.c.3.s8 %v4790
    %v4811 = vunpack.c.0.s8 %v4791
    %v4812 = vunpack.c.1.s8 %v4791
    %v4813 = vunpack.c.2.s8 %v4791
    %v4814 = vunpack.c.3.s8 %v4791
    %v4815 = vunpack.c.0.s8 %v4792
    %v4816 = vunpack.c.1.s8 %v4792
    %v4817 = vunpack.c.2.s8 %v4792
    %v4818 = vunpack.c.3.s8 %v4792
    %v4819 = vunpack.c.0.s8 %v4793
    %v4820 = vunpack.c.1.s8 %v4793
    %v4821 = vunpack.c.2.s8 %v4793
    %v4822 = vunpack.c.3.s8 %v4793
    %v4823 = vunpack.c.0.s8 %v4794
    %v4824 = vunpack.c.1.s8 %v4794
    %v4825 = vunpack.c.2.s8 %v4794
    %v4826 = vunpack.c.3.s8 %v4794
    %v4827 = vcvt.s32.f32 %v4795
    %v4828 = vcvt.s32.f32 %v4796
    %v4829 = vcvt.s32.f32 %v4797
    %v4830 = vcvt.s32.f32 %v4798
    %v4831 = vcvt.s32.f32 %v4799
    %v4832 = vcvt.s32.f32 %v4800
    %v4833 = vcvt.s32.f32 %v4801
    %v4834 = vcvt.s32.f32 %v4802
    %v4835 = vcvt.s32.f32 %v4803
    %v4836 = vcvt.s32.f32 %v4804
    %v4837 = vcvt.s32.f32 %v4805
    %v4838 = vcvt.s32.f32 %v4806
    %v4839 = vcvt.s32.f32 %v4807
    %v4840 = vcvt.s32.f32 %v4808
    %v4841 = vcvt.s32.f32 %v4809
    %v4842 = vcvt.s32.f32 %v4810
    %v4843 = vcvt.s32.f32 %v4811
    %v4844 = vcvt.s32.f32 %v4812
    %v4845 = vcvt.s32.f32 %v4813
    %v4846 = vcvt.s32.f32 %v4814
    %v4847 = vcvt.s32.f32 %v4815
    %v4848 = vcvt.s32.f32 %v4816
    %v4849 = vcvt.s32.f32 %v4817
    %v4850 = vcvt.s32.f32 %v4818
    %v4851 = vcvt.s32.f32 %v4819
    %v4852 = vcvt.s32.f32 %v4820
    %v4853 = vcvt.s32.f32 %v4821
    %v4854 = vcvt.s32.f32 %v4822
    %v4855 = vcvt.s32.f32 %v4823
    %v4856 = vcvt.s32.f32 %v4824
    %v4857 = vcvt.s32.f32 %v4825
    %v4858 = vcvt.s32.f32 %v4826
    %v4859 = vpack.c.bf16 %v4828, %v4827
    %v4860 = vpack.c.bf16 %v4830, %v4829
    %v4861 = vpack.c.bf16 %v4832, %v4831
    %v4862 = vpack.c.bf16 %v4834, %v4833
    %v4863 = vpack.c.bf16 %v4836, %v4835
    %v4864 = vpack.c.bf16 %v4838, %v4837
    %v4865 = vpack.c.bf16 %v4840, %v4839
    %v4866 = vpack.c.bf16 %v4842, %v4841
    %v4867 = vpack.c.bf16 %v4844, %v4843
    %v4868 = vpack.c.bf16 %v4846, %v4845
    %v4869 = vpack.c.bf16 %v4848, %v4847
    %v4870 = vpack.c.bf16 %v4850, %v4849
    %v4871 = vpack.c.bf16 %v4852, %v4851
    %v4872 = vpack.c.bf16 %v4854, %v4853
    %v4873 = vpack.c.bf16 %v4856, %v4855
    %v4874 = vpack.c.bf16 %v4858, %v4857
    %v4875 = vpack.c.bf16 %v4785, %v4785
    %v4876 = vpack.c.bf16 %v4786, %v4786
    %4877 = vmatpush.bf16.msra.mxu0 %v4866
    %4878 = vmatpush.bf16.msra.mxu0 %v4865
    %4879 = vmatpush.bf16.msra.mxu0 %v4864
    %4880 = vmatpush.bf16.msra.mxu0 %v4863
    %4881 = vmatpush.bf16.msra.mxu0 %v4862
    %4882 = vmatpush.bf16.msra.mxu0 %v4861
    %4883 = vmatpush.bf16.msra.mxu0 %v4860
    %4884 = vmatpush.bf16.msra.mxu0 %v4859
    %4885 = vmatmul.bf16.gmra.mxu0 %v4875
    %v4886 = vpop.f32.mrf.mxu0
    %v4887 = vadd.f32 0.0, %v4886
    %v4888 = vpop.f32.mrf.mxu0
    %4889 = vdwg.mxu0
    %4890 = vmatpush.bf16.msra.mxu0 %v4874
    %4891 = vmatpush.bf16.msra.mxu0 %v4873
    %4892 = vmatpush.bf16.msra.mxu0 %v4872
    %4893 = vmatpush.bf16.msra.mxu0 %v4871
    %4894 = vmatpush.bf16.msra.mxu0 %v4870
    %4895 = vmatpush.bf16.msra.mxu0 %v4869
    %4896 = vmatpush.bf16.msra.mxu0 %v4868
    %4897 = vmatpush.bf16.msra.mxu0 %v4867
    %4898 = vmatmul.bf16.gmra.mxu0 %v4876
    %v4899 = vpop.f32.mrf.mxu0
    %v4900 = vadd.f32 %v4887, %v4899
    %v4901 = vpop.f32.mrf.mxu0
    %4902 = vdwg.mxu0
    %v4903 = vld [vmem:[#allocation7 + $0x83] ss:$0 sm:$0xff]
    %v4904 = vmul.f32 %v4900, %v4903
    %v4905 = vld [vmem:[#allocation7 + $0x80] ss:$0 sm:$0xff]
    %v4906 = vadd.f32 %v4904, %v4905
    %vm4907 = vcmask 523264
    %v4908 = vsel %vm4907, %v4906, 0.0
    %4909 = vadd.xlane.f32.xlu0 %v4908
    %v4910 = vpop.xlane.xlu0 %4909
    %v4911 = vrcp.pop 64.0
    %v4912 = vmul.f32 64.0, %v4911
    %v4913 = vsub.f32 1.0, %v4912
    %v4914 = vmul.f32 %v4911, %v4913
    %v4915 = vadd.f32 %v4911, %v4914
    %vm4916 = vweird.f32 %v4911
    %v4917 = vsel %vm4916, %v4911, %v4915
    %v4918 = vmul.f32 %v4910, %v4917
    %v4919 = vmul.f32 %v4906, %v4906
    %v4920 = vsel %vm4907, %v4919, 0.0
    %4921 = vadd.xlane.f32.xlu0 %v4920
    %v4922 = vpop.xlane.xlu0 %4921
    %v4923 = vmul.f32 %v4922, %v4917
    %v4924 = vmul.f32 %v4918, %v4918
    %v4925 = vsub.f32 %v4923, %v4924
    %v4926 = vmax.f32 %v4925, 0.0
    %v4927 = vsub.f32 %v4906, %v4918
    %v4928 = vadd.f32 %v4926, 1e-05
    %v4929 = vrsqrt.pop %v4928
    %v4930 = vmul.f32 %v4929, %v4928
    %v4931 = vmul.f32 %v4930, %v4929
    %v4932 = vmul.f32 0.5, %v4931
    %v4933 = vsub.f32 1.5, %v4932
    %v4934 = vmul.f32 %v4929, %v4933
    %vm4935 = vweird.f32 %v4928
    %vm4936 = vweird.f32 %v4929
    %vm4937 = vmor %vm4935, %vm4936
    %v4938 = vsel %vm4937, %v4929, %v4934
    %v4939 = vmul.f32 %v4927, %v4938
    %v4940 = vld [vmem:[#allocation7 + $0x81] ss:$0 sm:$0xff]
    %v4941 = vmul.f32 %v4939, %v4940
    %v4942 = vld [vmem:[#allocation7 + $0x82] ss:$0 sm:$0xff]
    %v4943 = vadd.f32 %v4941, %v4942
    %v4944 = vmax.f32 %v4943, 0.0
    %v4945 = vpack.c.bf16 %v4944, %v4944
    %v4946 = vld [vmem:[%s6] sm:$0xf]
    %v4947 = vld [vmem:[%s6 + $0x4] sm:$0xf]
    %v4948 = vld [vmem:[%s6 + $0x8] sm:$0xf]
    %v4949 = vld [vmem:[%s6 + $0xc] sm:$0xf]
    %v4950 = vld [vmem:[%s6 + $0x10] sm:$0xf]
    %v4951 = vld [vmem:[%s6 + $0x14] sm:$0xf]
    %v4952 = vld [vmem:[%s6 + $0x18] sm:$0xf]
    %v4953 = vld [vmem:[%s6 + $0x1c] sm:$0xf]
    %v4954 = vld [vmem:[#allocation7 + $0x84] ss:$0 sm:$0xff]
    %v4963 = vunpack.c.l.b16 %v4946
    %v4964 = vunpack.c.l.b16 %v4947
    %v4965 = vunpack.c.l.b16 %v4948
    %v4966 = vunpack.c.l.b16 %v4949
    %v4967 = vunpack.c.l.b16 %v4950
    %v4968 = vunpack.c.l.b16 %v4951
    %v4969 = vunpack.c.l.b16 %v4952
    %v4970 = vunpack.c.l.b16 %v4953
    %v4971 = vpack.c.b16 %v4964, %v4963
    %v4972 = vpack.c.b16 %v4966, %v4965
    %v4973 = vpack.c.b16 %v4968, %v4967
    %v4974 = vpack.c.b16 %v4970, %v4969
    %v4980 = vsel %vm4907, %v4945, 0
    %4982 = vmatpush.bf16.msra.mxu0 0
    %4983 = vmatpush.bf16.msra.mxu0 0
    %4984 = vmatpush.bf16.msra.mxu0 0
    %4985 = vmatpush.bf16.msra.mxu0 0
    %4986 = vmatpush.bf16.msra.mxu0 %v4974
    %4987 = vmatpush.bf16.msra.mxu0 %v4973
    %4988 = vmatpush.bf16.msra.mxu0 %v4972
    %4989 = vmatpush.bf16.msra.mxu0 %v4971
    %4990 = vmatmul.bf16.gmra.mxu0 %v4980
    %v4991 = vpop.f32.mrf.mxu0
    %v4992 = vadd.f32 %v4954, %v4991
    %v4993 = vpop.f32.mrf.mxu0
    %4994 = vdwg.mxu0
    %4995 = vst [vmem:[%s8] sm:$0xff] %v4992
    // Predicated region
    $region50: #{rot_red_global_forward.1} parent=1 // pred_check
      _
    $region51: #{rot_red_global_forward.1} parent=1 // pred_check_branch
      %4997 = sbr.rel (0) target = $region53
    $region52: #{rot_red_global_forward.1} parent=1 // pred_region
      _
    $region53: #{rot_red_global_forward.1} parent=1 // pred_fallthru
      _
    // Predicated region
    $region54: #{rot_red_global_forward.1} parent=1 // pred_check
      _
    $region55: #{rot_red_global_forward.1} parent=1 // pred_check_branch
      %4999 = sbr.rel (0) target = $region57
    $region56: #{rot_red_global_forward.1} parent=1 // pred_region
      _
    $region57: #{rot_red_global_forward.1} parent=1 // pred_fallthru
      _
    %5000 = vsyncpa [#allocation3], 1
    %5001 = vsyncpa [#allocation5], 1
    %5002 = vsyncpa [#allocation8], 1

</llo_original>
